<compile_context>
chip_gen: v7x
topology: tpu7x:2x2x1
jax: 0.10.0
libtpu: 0.0.40
codegen_flags: <defaults>
</compile_context>

<pallas_src>
import functools

import jax
import jax.numpy as jnp
from jax.experimental import pallas as pl
from jax.experimental.pallas import tpu as pltpu


def _resblock_kernel(x_ref,
                     wx_ref,   # [wa | w1] packed x-side weights (BN folded)
                     ba_ref,   # conv_a bias (BN folded), (1, C_inner) f32
                     wb_ref,   # conv_b weights (BN folded)
                     bc_ref,   # combined bias b1 + bb, (1, C_out) f32
                     o_ref,
                     *, c_inner):
    x = x_ref[...]                                              # (tm, C_in) bf16

    # One MXU pass for both x-side matmuls: [conv_a | shortcut].
    xw = jnp.dot(x, wx_ref[...], preferred_element_type=jnp.float32)

    # branch2 conv_a (+folded BN) + ReLU; back to bf16 so conv_b feeds the
    # MXU natively and the live f32 footprint stays small.
    h = jnp.maximum(xw[:, :c_inner] + ba_ref[...], 0.0).astype(x_ref.dtype)

    # branch2 conv_b (+folded BN) into a single f32 accumulator, then add the
    # shortcut projection and the combined bias, fuse, activate, narrow store.
    acc = jnp.dot(h, wb_ref[...], preferred_element_type=jnp.float32)
    acc = acc + xw[:, c_inner:] + bc_ref[...]
    o_ref[...] = jnp.maximum(acc, 0.0).astype(o_ref.dtype)


def _fold_bn(gamma, beta, mean, var, eps=1e-5):
    """Eval-mode BatchNorm -> per-channel (scale, bias)."""
    scale = gamma / jnp.sqrt(var + eps)
    bias = beta - mean * scale
    return scale, bias


def _choose_tile(M, tm):
    """Row tile: multiple of 8, <= M, and keep >= 2 grid steps when possible
    so v7x can shard the parallel axis across its 2 TensorCores."""
    tm = max(8, min(int(tm), M))
    if tm < M:
        tm = (tm // 8) * 8
    n_tiles = pl.cdiv(M, tm)
    if n_tiles == 1 and M >= 16:
        tm = ((pl.cdiv(M, 2) + 7) // 8) * 8
        n_tiles = pl.cdiv(M, tm)
    return tm, n_tiles


@functools.partial(jax.jit, static_argnames=("tm",))
def res_block_pallas(x_ncthw, params, tm=2048):
    N, C_in, T, H, W = x_ncthw.shape
    C_out = params["w1"].shape[1]
    C_inner = params["wa"].shape[1]
    compute_dtype = jnp.bfloat16

    # NCTHW -> channels-last, flatten batch/temporal/spatial axes to rows.
    x2d = jnp.transpose(x_ncthw, (0, 2, 3, 4, 1)).reshape(-1, C_in)
    x2d = x2d.astype(compute_dtype)
    M = x2d.shape[0]

    tm, n_tiles = _choose_tile(M, tm)

    # Fold eval-mode BN into the conv weights: (x @ W) * s + b == x @ (W*s) + b.
    s1, b1 = _fold_bn(params["bn1_g"], params["bn1_b"],
                      params["bn1_m"], params["bn1_v"])
    sa, ba = _fold_bn(params["bna_g"], params["bna_b"],
                      params["bna_m"], params["bna_v"])
    sb, bb = _fold_bn(params["bnb_g"], params["bnb_b"],
                      params["bnb_m"], params["bnb_v"])

    w1 = (params["w1"].astype(jnp.float32) * s1[None, :]).astype(compute_dtype)
    wa = (params["wa"].astype(jnp.float32) * sa[None, :]).astype(compute_dtype)
    wb = (params["wb"].astype(jnp.float32) * sb[None, :]).astype(compute_dtype)

    # Pack the two x-side weight matrices along the output-channel axis so the
    # kernel does a single N = C_inner + C_out matmul against x.
    wx = jnp.concatenate([wa, w1], axis=1)                 # (C_in, C_inner+C_out)
    bar = ba.reshape(1, -1).astype(jnp.float32)            # conv_a bias
    bcr = (b1 + bb).reshape(1, -1).astype(jnp.float32)     # combined final bias

    Nx = C_inner + C_out
    full = lambda shape: pl.BlockSpec(shape, lambda i: (0, 0))

    # VMEM budget: double-buffered x/out tiles, (default-)double-buffered
    # grid-invariant weights/biases, plus f32 temporaries, with headroom.
    x_tile_b = tm * C_in * 2
    o_tile_b = tm * C_out * 2
    w_b = (C_in * Nx + C_inner * C_out) * 2 + (Nx + C_out) * 4
    f32_tmp_b = tm * (Nx + C_out) * 4
    vmem_needed = 2 * (x_tile_b + o_tile_b) + 2 * w_b + f32_tmp_b
    vmem_limit = int(min(max(int(vmem_needed * 1.5), 16 << 20), 60 << 20))

    # Advisory cost hint for XLA scheduling around the custom call.
    flops = 2 * M * (C_in * Nx + C_inner * C_out)
    bytes_accessed = ((M * C_in + M * C_out
                       + C_in * Nx + C_inner * C_out) * 2   # bf16
                      + (Nx + C_out) * 4)                   # f32 biases

    out2d = pl.pallas_call(
        functools.partial(_resblock_kernel, c_inner=C_inner),
        out_shape=jax.ShapeDtypeStruct((M, C_out), compute_dtype),
        grid_spec=pltpu.PrefetchScalarGridSpec(
            num_scalar_prefetch=0,
            grid=(n_tiles,),
            in_specs=[
                pl.BlockSpec((tm, C_in), lambda i: (i, 0)),   # x tile
                full((C_in, Nx)),                             # [wa | w1]
                full((1, C_inner)),                           # conv_a bias
                full((C_inner, C_out)),                       # conv_b weights
                full((1, C_out)),                             # b1 + bb
            ],
            out_specs=pl.BlockSpec((tm, C_out), lambda i: (i, 0)),
        ),
        compiler_params=pltpu.CompilerParams(
            dimension_semantics=("parallel",),
            vmem_limit_bytes=vmem_limit),
        cost_estimate=pl.CostEstimate(
            flops=flops, transcendentals=0, bytes_accessed=bytes_accessed),
    )(x2d, wx, bar, wb, bcr)

    # rows -> (N, T, H, W, C_out) -> NCTHW
    return jnp.transpose(out2d.reshape(N, T, H, W, C_out), (0, 4, 1, 2, 3))


def res_block_reference(x_ncthw, params):
    """Pure-JAX reference mirroring the PyTorch ResBlock eval forward,
    using the same bf16 operands / f32 accumulation as the kernel."""
    N, C_in, T, H, W = x_ncthw.shape
    C_out = params["w1"].shape[1]
    compute_dtype = jnp.bfloat16

    x2d = jnp.transpose(x_ncthw, (0, 2, 3, 4, 1)).reshape(-1, C_in)
    x2d = x2d.astype(compute_dtype)

    s1, b1 = _fold_bn(params["bn1_g"], params["bn1_b"],
                      params["bn1_m"], params["bn1_v"])
    sa, ba = _fold_bn(params["bna_g"], params["bna_b"],
                      params["bna_m"], params["bna_v"])
    sb, bb = _fold_bn(params["bnb_g"], params["bnb_b"],
                      params["bnb_m"], params["bnb_v"])

    w1 = (params["w1"].astype(jnp.float32) * s1[None, :]).astype(compute_dtype)
    wa = (params["wa"].astype(jnp.float32) * sa[None, :]).astype(compute_dtype)
    wb = (params["wb"].astype(jnp.float32) * sb[None, :]).astype(compute_dtype)

    shortcut = jnp.dot(x2d, w1, preferred_element_type=jnp.float32) + b1
    h = jnp.maximum(
        jnp.dot(x2d, wa, preferred_element_type=jnp.float32) + ba, 0.0
    ).astype(compute_dtype)
    b2 = jnp.dot(h, wb, preferred_element_type=jnp.float32) + bb
    out2d = jnp.maximum(shortcut + b2, 0.0).astype(compute_dtype)

    return jnp.transpose(out2d.reshape(N, T, H, W, C_out), (0, 4, 1, 2, 3))


def init_params(key, c_in, c_inner, c_out):
    ks = jax.random.split(key, 9)
    return {
        # conv weights stored as (C_in, C_out) == PyTorch Conv3d weight
        # (C_out, C_in, 1, 1, 1) transposed + squeezed.
        "w1": jax.random.normal(ks[0], (c_in, c_out), jnp.float32) * 0.1,
        "wa": jax.random.normal(ks[1], (c_in, c_inner), jnp.float32) * 0.1,
        "wb": jax.random.normal(ks[2], (c_inner, c_out), jnp.float32) * 0.1,
        # BatchNorm params (eval mode running stats)
        "bn1_g": 1.0 + 0.1 * jax.random.normal(ks[3], (c_out,), jnp.float32),
        "bn1_b": 0.1 * jax.random.normal(ks[4], (c_out,), jnp.float32),
        "bn1_m": 0.05 * jax.random.normal(ks[5], (c_out,), jnp.float32),
        "bn1_v": jnp.abs(1.0 + 0.1 * jax.random.normal(ks[6], (c_out,), jnp.float32)),
        "bna_g": jnp.ones((c_inner,), jnp.float32),
        "bna_b": jnp.zeros((c_inner,), jnp.float32),
        "bna_m": 0.05 * jax.random.normal(ks[7], (c_inner,), jnp.float32),
        "bna_v": jnp.abs(1.0 + 0.1 * jax.random.normal(ks[8], (c_inner,), jnp.float32)),
        "bnb_g": jnp.full((c_out,), 0.9, jnp.float32),
        "bnb_b": jnp.full((c_out,), 0.05, jnp.float32),
        "bnb_m": jnp.zeros((c_out,), jnp.float32),
        "bnb_v": jnp.ones((c_out,), jnp.float32),
    }


if __name__ == "__main__":
    key = jax.random.PRNGKey(0)
    k_x, k_p = jax.random.split(key)

    # Lane-dense demo shapes: M = N*T*H*W = 4096 rows, channels multiples of
    # 128 so all tiles are lane-dense. tm=2048 -> 2 grid steps (v7x-friendly).
    N, C_in, T, H, W = 2, 128, 8, 16, 16
    C_inner, C_out = 128, 128

    x = jax.random.normal(k_x, (N, C_in, T, H, W), jnp.float32).astype(jnp.bfloat16)
    params = init_params(k_p, C_in, C_inner, C_out)

    out = res_block_pallas(x, params, tm=2048)
    out = jax.block_until_ready(out)

    ref = res_block_reference(x, params)
    assert out.shape == (N, C_out, T, H, W)
    assert jnp.allclose(out.astype(jnp.float32), ref.astype(jnp.float32),
                        atol=2e-2, rtol=2e-2), "mismatch vs reference"

    print("KERNEL_OK")
</pallas_src>

<mosaic_0001>
module attributes {stable_mosaic.version = 11 : i64} {
  func.func @_resblock_kernel(%arg0: i32, %arg1: memref<2048x128xbf16, #tpu.memory_space<vmem>>, %arg2: memref<128x256xbf16, #tpu.memory_space<vmem>>, %arg3: memref<1x128xf32, #tpu.memory_space<vmem>>, %arg4: memref<128x128xbf16, #tpu.memory_space<vmem>>, %arg5: memref<1x128xf32, #tpu.memory_space<vmem>>, %arg6: memref<2048x128xbf16, #tpu.memory_space<vmem>>) attributes {dimension_semantics = [#tpu.dimension_semantics<parallel>], iteration_bounds = array<i64: 2>, scalar_prefetch = 0 : i64, scratch_operands = 0 : i64, tpu.core_type = #tpu.core_type<tc>, window_params = [{transform_indices = @transform_0, window_bounds = array<i64: 2048, 128>}, {pipeline_mode = #tpu.pipeline_mode<synchronous>, transform_indices = @transform_1, window_bounds = array<i64: 128, 256>}, {pipeline_mode = #tpu.pipeline_mode<synchronous>, transform_indices = @transform_2, window_bounds = array<i64: 1, 128>}, {pipeline_mode = #tpu.pipeline_mode<synchronous>, transform_indices = @transform_3, window_bounds = array<i64: 128, 128>}, {pipeline_mode = #tpu.pipeline_mode<synchronous>, transform_indices = @transform_4, window_bounds = array<i64: 1, 128>}, {transform_indices = @transform_5, window_bounds = array<i64: 2048, 128>}]} {
    %c0 = arith.constant 0 : index
    %c0_0 = arith.constant 0 : index
    %0 = vector.load %arg1[%c0, %c0_0] : memref<2048x128xbf16, #tpu.memory_space<vmem>>, vector<2048x128xbf16>
    %c0_1 = arith.constant 0 : index
    %c0_2 = arith.constant 0 : index
    %1 = vector.load %arg2[%c0_1, %c0_2] : memref<128x256xbf16, #tpu.memory_space<vmem>>, vector<128x256xbf16>
    %cst = arith.constant dense<0.000000e+00> : vector<2048x256xf32>
    %2 = tpu.matmul %0, %1, %cst {dimension_numbers = #tpu.dot_dimension_numbers<[1], [0], [0], [1], [0, 0, 1, 1], [], []>} : vector<2048x128xbf16>, vector<128x256xbf16>, vector<2048x256xf32> -> vector<2048x256xf32>
    %3 = vector.extract_strided_slice %2 {offsets = [0, 0], sizes = [2048, 128], strides = [1, 1]} : vector<2048x256xf32> to vector<2048x128xf32>
    %c0_3 = arith.constant 0 : index
    %c0_4 = arith.constant 0 : index
    %4 = vector.load %arg3[%c0_3, %c0_4] : memref<1x128xf32, #tpu.memory_space<vmem>>, vector<1x128xf32>
    %5 = vector.broadcast %4 : vector<1x128xf32> to vector<2048x128xf32>
    %6 = arith.addf %3, %5 : vector<2048x128xf32>
    %cst_5 = arith.constant 0.000000e+00 : f32
    %7 = vector.broadcast %cst_5 : f32 to vector<2048x128xf32>
    %8 = arith.maximumf %6, %7 : vector<2048x128xf32>
    %9 = arith.truncf %8 : vector<2048x128xf32> to vector<2048x128xbf16>
    %c0_6 = arith.constant 0 : index
    %c0_7 = arith.constant 0 : index
    %10 = vector.load %arg4[%c0_6, %c0_7] : memref<128x128xbf16, #tpu.memory_space<vmem>>, vector<128x128xbf16>
    %cst_8 = arith.constant dense<0.000000e+00> : vector<2048x128xf32>
    %11 = tpu.matmul %9, %10, %cst_8 {dimension_numbers = #tpu.dot_dimension_numbers<[1], [0], [0], [1], [0, 0, 1, 1], [], []>} : vector<2048x128xbf16>, vector<128x128xbf16>, vector<2048x128xf32> -> vector<2048x128xf32>
    %12 = vector.extract_strided_slice %2 {offsets = [0, 128], sizes = [2048, 128], strides = [1, 1]} : vector<2048x256xf32> to vector<2048x128xf32>
    %13 = arith.addf %11, %12 : vector<2048x128xf32>
    %c0_9 = arith.constant 0 : index
    %c0_10 = arith.constant 0 : index
    %14 = vector.load %arg5[%c0_9, %c0_10] : memref<1x128xf32, #tpu.memory_space<vmem>>, vector<1x128xf32>
    %15 = vector.broadcast %14 : vector<1x128xf32> to vector<2048x128xf32>
    %16 = arith.addf %13, %15 : vector<2048x128xf32>
    %cst_11 = arith.constant 0.000000e+00 : f32
    %17 = vector.broadcast %cst_11 : f32 to vector<2048x128xf32>
    %18 = arith.maximumf %16, %17 : vector<2048x128xf32>
    %19 = arith.truncf %18 : vector<2048x128xf32> to vector<2048x128xbf16>
    %c0_12 = arith.constant 0 : index
    %c0_13 = arith.constant 0 : index
    %20 = vector.load %arg6[%c0_12, %c0_13] : memref<2048x128xbf16, #tpu.memory_space<vmem>>, vector<2048x128xbf16>
    tpu.vector_store %arg6[%c0_12, %c0_13], %19 {strides = array<i32>} : memref<2048x128xbf16, #tpu.memory_space<vmem>>, vector<2048x128xbf16>,
    return
  }
  func.func @transform_0(%arg0: i32) -> (i32, i32) {
    %c0_i32 = arith.constant 0 : i32
    %c0_i32_0 = arith.constant 0 : i32
    return %arg0, %c0_i32 : i32, i32
  }
  func.func @transform_1(%arg0: i32) -> (i32, i32) {
    %c0_i32 = arith.constant 0 : i32
    %c0_i32_0 = arith.constant 0 : i32
    %c0_i32_1 = arith.constant 0 : i32
    return %c0_i32, %c0_i32_0 : i32, i32
  }
  func.func @transform_2(%arg0: i32) -> (i32, i32) {
    %c0_i32 = arith.constant 0 : i32
    %c0_i32_0 = arith.constant 0 : i32
    %c0_i32_1 = arith.constant 0 : i32
    return %c0_i32, %c0_i32_0 : i32, i32
  }
  func.func @transform_3(%arg0: i32) -> (i32, i32) {
    %c0_i32 = arith.constant 0 : i32
    %c0_i32_0 = arith.constant 0 : i32
    %c0_i32_1 = arith.constant 0 : i32
    return %c0_i32, %c0_i32_0 : i32, i32
  }
  func.func @transform_4(%arg0: i32) -> (i32, i32) {
    %c0_i32 = arith.constant 0 : i32
    %c0_i32_0 = arith.constant 0 : i32
    %c0_i32_1 = arith.constant 0 : i32
    return %c0_i32, %c0_i32_0 : i32, i32
  }
  func.func @transform_5(%arg0: i32) -> (i32, i32) {
    %c0_i32 = arith.constant 0 : i32
    %c0_i32_0 = arith.constant 0 : i32
    return %arg0, %c0_i32 : i32, i32
  }
}

</mosaic_0001>

<llo_original>
// kernel: res_block_pallas.1
$region0: #{res_block_pallas.1}
  #allocation0 [shape = 'u32[]', space=smem, size = 0x4, offset = 0x4, fixed_abs, tag = 'smem constant byte address 0x4 - core index']
  #allocation1 [shape = 'u32[144,128]{1,0:T(1,128)}', space=vmem, size = 0x12000, scoped, tag = 'internal scratch']
  %s0 = inlined_call_operand.hbm [shape: bf16[4096,128], index: 0, kind: input, shape index: {}]
  %s1 = inlined_call_operand.vmem [shape: bf16[128,256], index: 1, kind: input, shape index: {}]
  %s2 = inlined_call_operand.vmem [shape: f32[1,128], index: 2, kind: input, shape index: {}]
  %s3 = inlined_call_operand.vmem [shape: bf16[128,128], index: 3, kind: input, shape index: {}]
  %s4 = inlined_call_operand.vmem [shape: f32[1,128], index: 4, kind: input, shape index: {}]
  %s5 = inlined_call_operand.hbm [shape: bf16[4096,128], index: 5, kind: output, shape index: {}]
  %s6 = sld [smem:[#allocation0]]
  $region57: #{res_block_pallas.1} parent=0
    _
  %s8 = ssub.s32 1, %s6
  %s9 = scalar_select 0, %s8, %s6
  $region1: #{res_block_pallas.1} parent=0
    #allocation2 [shape = 'u8[1048576]{0}', space=vmem, size = 0x100000, scoped, tag = 'input window, operand 0']
    #allocation3 [shape = 's32[2]{0}', space=sflag, size = 0x8, scoped, tag = 'scoped memory for res_block_pallas.1']
    #allocation4 [shape = 's32[2]{0}', space=sflag, size = 0x8, scoped, tag = 'scoped memory for res_block_pallas.1']
    #allocation5 [shape = 'u8[1048576]{0}', space=vmem, size = 0x100000, scoped, tag = 'output window, operand 0']
    %10 = vsyncpa [#allocation3], 0
    %s11 = scalar_lea.sflag [#allocation3], 1
    %12 = vsyncpa %s11, 0
    %13 = vsyncpa [#allocation4], 0
    %s14 = scalar_lea.sflag [#allocation4], 1
    %15 = vsyncpa %s14, 0
    loop: start=0, step=1, limit=4
    $region2: #{res_block_pallas.1} parent=1 // loop_pre_header
      _
    $region3: #{res_block_pallas.1} parent=1 // loop_header
      %s17 = sphi 0, %s21
      %p18 = scmp.ge.s32.totalorder %s17, 4
      %s27 = sphi 0, %s29
      %s30 = sphi 0, %s27
      %s31 = sphi 0, %s30
      %s47 = sphi 0, %s31
      %s51 = sphi 0, %s51
      %s53 = sphi 0, %s51
      %s54 = sphi 0, %s53
      %s68 = sphi 0, %s54
      %s72 = sphi 0, %s72
      %s74 = sphi 0, %s72
      %s75 = sphi 0, %s74
      %s89 = sphi 0, %s75
      %s93 = sphi 0, %s93
      %s95 = sphi 0, %s93
      %s96 = sphi 0, %s95
      %s110 = sphi 0, %s96
      %s114 = sphi 0, %s114
      %s116 = sphi 0, %s114
      %s117 = sphi 0, %s116
      %s131 = sphi 0, %s117
      %s137 = sphi 0, %s139
      %s140 = sphi 0, %s137
      %s141 = sphi 0, %s140
      %s157 = sphi 0, %s141
    $region4: #{res_block_pallas.1} parent=1 // loop_header_branch
      %20 = sbr.rel (%p18) target = $region8
    $region5: #{res_block_pallas.1} parent=1 // loop_body
      %s22 = ssub.s32 %s17, 1
      %s23 = ssub.s32 %s17, 2
      %s24 = sadd.s32 %s17, 1
      %s25 = ssub.s32 %s17, %s24
      %p26 = scmp.eq.s32.totalorder %s25, 0
      %s28 = sadd.s32 %s27, 1
      %s29 = scalar_select %p26, %s27, %s28
      %p32 = pneg %p26
      %p33 = scmp.eq.s32.totalorder %s17, 1
      %p34 = por %p32, %p33
      %p35 = scmp.ne.s32.totalorder %s27, %s30
      %p36 = scmp.eq.s32.totalorder %s17, 0
      %p37 = por %p35, %p36
      %p38 = scmp.ne.s32.totalorder %s27, %s30
      %p39 = scmp.eq.s32.totalorder %s22, 1
      %p40 = por %p38, %p39
      %p41 = scmp.ne.s32.totalorder %s30, %s31
      %p42 = scmp.eq.s32.totalorder %s22, 0
      %p43 = por %p41, %p42
      %p44 = scmp.ne.s32.totalorder %s30, %s31
      %p45 = scmp.eq.s32.totalorder %s23, 1
      %p46 = por %p44, %p45
      %p48 = scmp.ne.s32.totalorder %s31, %s47
      %p49 = scmp.eq.s32.totalorder %s23, 0
      %p50 = por %p48, %p49
      %s52 = sadd.s32 %s51, 1
      %p55 = scmp.eq.s32.totalorder %s17, 1
      %p56 = scmp.ne.s32.totalorder %s51, %s53
      %p57 = scmp.eq.s32.totalorder %s17, 0
      %p58 = por %p56, %p57
      %p59 = scmp.ne.s32.totalorder %s51, %s53
      %p60 = scmp.eq.s32.totalorder %s22, 1
      %p61 = por %p59, %p60
      %p62 = scmp.ne.s32.totalorder %s53, %s54
      %p63 = scmp.eq.s32.totalorder %s22, 0
      %p64 = por %p62, %p63
      %p65 = scmp.ne.s32.totalorder %s53, %s54
      %p66 = scmp.eq.s32.totalorder %s23, 1
      %p67 = por %p65, %p66
      %p69 = scmp.ne.s32.totalorder %s54, %s68
      %p70 = scmp.eq.s32.totalorder %s23, 0
      %p71 = por %p69, %p70
      %s73 = sadd.s32 %s72, 1
      %p76 = scmp.eq.s32.totalorder %s17, 1
      %p77 = scmp.ne.s32.totalorder %s72, %s74
      %p78 = scmp.eq.s32.totalorder %s17, 0
      %p79 = por %p77, %p78
      %p80 = scmp.ne.s32.totalorder %s72, %s74
      %p81 = scmp.eq.s32.totalorder %s22, 1
      %p82 = por %p80, %p81
      %p83 = scmp.ne.s32.totalorder %s74, %s75
      %p84 = scmp.eq.s32.totalorder %s22, 0
      %p85 = por %p83, %p84
      %p86 = scmp.ne.s32.totalorder %s74, %s75
      %p87 = scmp.eq.s32.totalorder %s23, 1
      %p88 = por %p86, %p87
      %p90 = scmp.ne.s32.totalorder %s75, %s89
      %p91 = scmp.eq.s32.totalorder %s23, 0
      %p92 = por %p90, %p91
      %s94 = sadd.s32 %s93, 1
      %p97 = scmp.eq.s32.totalorder %s17, 1
      %p98 = scmp.ne.s32.totalorder %s93, %s95
      %p99 = scmp.eq.s32.totalorder %s17, 0
      %p100 = por %p98, %p99
      %p101 = scmp.ne.s32.totalorder %s93, %s95
      %p102 = scmp.eq.s32.totalorder %s22, 1
      %p103 = por %p101, %p102
      %p104 = scmp.ne.s32.totalorder %s95, %s96
      %p105 = scmp.eq.s32.totalorder %s22, 0
      %p106 = por %p104, %p105
      %p107 = scmp.ne.s32.totalorder %s95, %s96
      %p108 = scmp.eq.s32.totalorder %s23, 1
      %p109 = por %p107, %p108
      %p111 = scmp.ne.s32.totalorder %s96, %s110
      %p112 = scmp.eq.s32.totalorder %s23, 0
      %p113 = por %p111, %p112
      %s115 = sadd.s32 %s114, 1
      %p118 = scmp.eq.s32.totalorder %s17, 1
      %p119 = scmp.ne.s32.totalorder %s114, %s116
      %p120 = scmp.eq.s32.totalorder %s17, 0
      %p121 = por %p119, %p120
      %p122 = scmp.ne.s32.totalorder %s114, %s116
      %p123 = scmp.eq.s32.totalorder %s22, 1
      %p124 = por %p122, %p123
      %p125 = scmp.ne.s32.totalorder %s116, %s117
      %p126 = scmp.eq.s32.totalorder %s22, 0
      %p127 = por %p125, %p126
      %p128 = scmp.ne.s32.totalorder %s116, %s117
      %p129 = scmp.eq.s32.totalorder %s23, 1
      %p130 = por %p128, %p129
      %p132 = scmp.ne.s32.totalorder %s117, %s131
      %p133 = scmp.eq.s32.totalorder %s23, 0
      %p134 = por %p132, %p133
      %s135 = ssub.s32 %s17, %s24
      %p136 = scmp.eq.s32.totalorder %s135, 0
      %s138 = sadd.s32 %s137, 1
      %s139 = scalar_select %p136, %s137, %s138
      %p142 = pneg %p136
      %p143 = scmp.eq.s32.totalorder %s17, 1
      %p144 = por %p142, %p143
      %p145 = scmp.ne.s32.totalorder %s137, %s140
      %p146 = scmp.eq.s32.totalorder %s17, 0
      %p147 = por %p145, %p146
      %p148 = scmp.ne.s32.totalorder %s137, %s140
      %p149 = scmp.eq.s32.totalorder %s22, 1
      %p150 = por %p148, %p149
      %p151 = scmp.ne.s32.totalorder %s140, %s141
      %p152 = scmp.eq.s32.totalorder %s22, 0
      %p153 = por %p151, %p152
      %p154 = scmp.ne.s32.totalorder %s140, %s141
      %p155 = scmp.eq.s32.totalorder %s23, 1
      %p156 = por %p154, %p155
      %p158 = scmp.ne.s32.totalorder %s141, %s157
      %p159 = scmp.eq.s32.totalorder %s23, 0
      %p160 = por %p158, %p159
      %p161 = scmp.le.s32.totalorder 1, %s17
      %p162 = scmp.lt.s32.totalorder %s17, 3
      %p163 = pnand %p161, %p162
      %p164 = pneg %p163
      // Predicated region
      $region9: #{res_block_pallas.1} parent=5 // pred_check
        _
      $region10: #{res_block_pallas.1} parent=5 // pred_check_branch
        %166 = sbr.rel (%p163) target = $region12
      $region11: #{res_block_pallas.1} parent=5 // pred_region
        %s167 = ssub.s32 %s17, 1
        // Predicated region
        $region13: #{res_block_pallas.1} parent=11 // pred_check
          %p168 = pneg %p64
        $region14: #{res_block_pallas.1} parent=11 // pred_check_branch
          %170 = sbr.rel (%p168) target = $region16
        $region15: #{res_block_pallas.1} parent=11 // pred_region
          _
        $region16: #{res_block_pallas.1} parent=11 // pred_fallthru
          _
        // Predicated region
        $region17: #{res_block_pallas.1} parent=11 // pred_check
          %p171 = pneg %p85
        $region18: #{res_block_pallas.1} parent=11 // pred_check_branch
          %173 = sbr.rel (%p171) target = $region20
        $region19: #{res_block_pallas.1} parent=11 // pred_region
          _
        $region20: #{res_block_pallas.1} parent=11 // pred_fallthru
          _
        // Predicated region
        $region21: #{res_block_pallas.1} parent=11 // pred_check
          %p174 = pneg %p106
        $region22: #{res_block_pallas.1} parent=11 // pred_check_branch
          %176 = sbr.rel (%p174) target = $region24
        $region23: #{res_block_pallas.1} parent=11 // pred_region
          _
        $region24: #{res_block_pallas.1} parent=11 // pred_fallthru
          _
        // Predicated region
        $region25: #{res_block_pallas.1} parent=11 // pred_check
          %p177 = pneg %p127
        $region26: #{res_block_pallas.1} parent=11 // pred_check_branch
          %179 = sbr.rel (%p177) target = $region28
        $region27: #{res_block_pallas.1} parent=11 // pred_region
          _
        $region28: #{res_block_pallas.1} parent=11 // pred_fallthru
          _
      $region12: #{res_block_pallas.1} parent=5 // pred_fallthru
        _
      %p180 = scmp.lt.s32.totalorder %s17, 2
      // Predicated region
      $region29: #{res_block_pallas.1} parent=5 // pred_check
        %p181 = pneg %p180
      $region30: #{res_block_pallas.1} parent=5 // pred_check_branch
        %183 = sbr.rel (%p181) target = $region32
      $region31: #{res_block_pallas.1} parent=5 // pred_region
        // Predicated region
        $region33: #{res_block_pallas.1} parent=31 // pred_check
          %p184 = pneg %p37
        $region34: #{res_block_pallas.1} parent=31 // pred_check_branch
          %186 = sbr.rel (%p184) target = $region36
        $region35: #{res_block_pallas.1} parent=31 // pred_region
          %s187 = sand.u32 %s27, 1
          %s188 = scalar_lea.sflag [#allocation3], %s187
          %s189 = sand.u32 %s27, 1
          %s190 = smul.addr %s189, 1024
          %s191 = scalar_lea.vmem [#allocation2], %s190
          %s192 = smul.u32 256, %s17
          %s194 = ssub.s32 16384, 16384
          %195 = vsyncadd %s188, %s194
          %s196 = smul.addr %s192, 64
          %s197 = scalar_lea.hbm %s0, %s196
          %s198 = sshll.u32 %s191, 4
          %s199 = int_to_ptr.vmem [resolvable:$true] %s198
          %204 = dma.hbm_to_vmem [thread:$0]  %s197, 16384, %s199, %s188, 64, 64, 4
        $region36: #{res_block_pallas.1} parent=31 // pred_fallthru
          _
      $region32: #{res_block_pallas.1} parent=5 // pred_fallthru
        _
      %p205 = scmp.le.s32.totalorder 1, %s17
      %p206 = scmp.lt.s32.totalorder %s17, 3
      %p207 = pnand %p205, %p206
      %p208 = pneg %p207
      // Predicated region
      $region37: #{res_block_pallas.1} parent=5 // pred_check
        _
      $region38: #{res_block_pallas.1} parent=5 // pred_check_branch
        %210 = sbr.rel (%p207) target = $region40
      $region39: #{res_block_pallas.1} parent=5 // pred_region
        %s211 = ssub.s32 %s17, 1
        %s212 = sand.u32 %s30, 1
        %s213 = scalar_lea.sflag [#allocation3], %s212
        %s214 = sand.u32 %s30, 1
        %s215 = smul.addr %s214, 1024
        %s216 = scalar_lea.vmem [#allocation2], %s215
        // Predicated region
        $region41: #{res_block_pallas.1} parent=39 // pred_check
          %p217 = pneg %p43
        $region42: #{res_block_pallas.1} parent=39 // pred_check_branch
          %219 = sbr.rel (%p217) target = $region44
        $region43: #{res_block_pallas.1} parent=39 // pred_region
          %220 = dma.done %s213, 16384
        $region44: #{res_block_pallas.1} parent=39 // pred_fallthru
          _
        %s221 = sand.u32 %s30, 1
        %s222 = scalar_lea.sflag [#allocation3], %s221
        %s223 = sand.u32 %s30, 1
        %s224 = smul.addr %s223, 1024
        %s225 = scalar_lea.vmem [#allocation2], %s224
        %p226 = pneg %p43
        %p227 = pneg %p40
        %p228 = pneg %p64
        %p229 = pneg %p61
        %p230 = pneg %p85
        %p231 = pneg %p82
        %p232 = pneg %p106
        %p233 = pneg %p103
        %p234 = pneg %p127
        %p235 = pneg %p124
        %p236 = pneg %p153
        %p237 = pneg %p150
        %s238 = sand.u32 %s140, 1
        %s239 = scalar_lea.sflag [#allocation4], %s238
        %s240 = sand.u32 %s140, 1
        %s241 = smul.addr %s240, 1024
        %s242 = scalar_lea.vmem [#allocation5], %s241
        %s243 = smul.u32 256, %s22
        %s244 = smul.u32 256, %s22
        %v246 = vld [vmem:[%s216] sm:$0xf]
        %v247 = vld [vmem:[%s216 + $0x4] sm:$0xf]
        %v248 = vld [vmem:[%s216 + $0x8] sm:$0xf]
        %v249 = vld [vmem:[%s216 + $0xc] sm:$0xf]
        %v250 = vld [vmem:[%s216 + $0x10] sm:$0xf]
        %v251 = vld [vmem:[%s216 + $0x14] sm:$0xf]
        %v252 = vld [vmem:[%s216 + $0x18] sm:$0xf]
        %v253 = vld [vmem:[%s216 + $0x1c] sm:$0xf]
        %v254 = vld [vmem:[%s216 + $0x20] sm:$0xf]
        %v255 = vld [vmem:[%s216 + $0x24] sm:$0xf]
        %v256 = vld [vmem:[%s216 + $0x28] sm:$0xf]
        %v257 = vld [vmem:[%s216 + $0x2c] sm:$0xf]
        %v258 = vld [vmem:[%s216 + $0x30] sm:$0xf]
        %v259 = vld [vmem:[%s216 + $0x34] sm:$0xf]
        %v260 = vld [vmem:[%s216 + $0x38] sm:$0xf]
        %v261 = vld [vmem:[%s216 + $0x3c] sm:$0xf]
        %v262 = vld [vmem:[%s216 + $0x40] sm:$0xf]
        %v263 = vld [vmem:[%s216 + $0x44] sm:$0xf]
        %v264 = vld [vmem:[%s216 + $0x48] sm:$0xf]
        %v265 = vld [vmem:[%s216 + $0x4c] sm:$0xf]
        %v266 = vld [vmem:[%s216 + $0x50] sm:$0xf]
        %v267 = vld [vmem:[%s216 + $0x54] sm:$0xf]
        %v268 = vld [vmem:[%s216 + $0x58] sm:$0xf]
        %v269 = vld [vmem:[%s216 + $0x5c] sm:$0xf]
        %v270 = vld [vmem:[%s216 + $0x60] sm:$0xf]
        %v271 = vld [vmem:[%s216 + $0x64] sm:$0xf]
        %v272 = vld [vmem:[%s216 + $0x68] sm:$0xf]
        %v273 = vld [vmem:[%s216 + $0x6c] sm:$0xf]
        %v274 = vld [vmem:[%s216 + $0x70] sm:$0xf]
        %v275 = vld [vmem:[%s216 + $0x74] sm:$0xf]
        %v276 = vld [vmem:[%s216 + $0x78] sm:$0xf]
        %v277 = vld [vmem:[%s216 + $0x7c] sm:$0xf]
        %v278 = vld [vmem:[%s216 + $0x80] sm:$0xf]
        %v279 = vld [vmem:[%s216 + $0x84] sm:$0xf]
        %v280 = vld [vmem:[%s216 + $0x88] sm:$0xf]
        %v281 = vld [vmem:[%s216 + $0x8c] sm:$0xf]
        %v282 = vld [vmem:[%s216 + $0x90] sm:$0xf]
        %v283 = vld [vmem:[%s216 + $0x94] sm:$0xf]
        %v284 = vld [vmem:[%s216 + $0x98] sm:$0xf]
        %v285 = vld [vmem:[%s216 + $0x9c] sm:$0xf]
        %v286 = vld [vmem:[%s216 + $0xa0] sm:$0xf]
        %v287 = vld [vmem:[%s216 + $0xa4] sm:$0xf]
        %v288 = vld [vmem:[%s216 + $0xa8] sm:$0xf]
        %v289 = vld [vmem:[%s216 + $0xac] sm:$0xf]
        %v290 = vld [vmem:[%s216 + $0xb0] sm:$0xf]
        %v291 = vld [vmem:[%s216 + $0xb4] sm:$0xf]
        %v292 = vld [vmem:[%s216 + $0xb8] sm:$0xf]
        %v293 = vld [vmem:[%s216 + $0xbc] sm:$0xf]
        %v294 = vld [vmem:[%s216 + $0xc0] sm:$0xf]
        %v295 = vld [vmem:[%s216 + $0xc4] sm:$0xf]
        %v296 = vld [vmem:[%s216 + $0xc8] sm:$0xf]
        %v297 = vld [vmem:[%s216 + $0xcc] sm:$0xf]
        %v298 = vld [vmem:[%s216 + $0xd0] sm:$0xf]
        %v299 = vld [vmem:[%s216 + $0xd4] sm:$0xf]
        %v300 = vld [vmem:[%s216 + $0xd8] sm:$0xf]
        %v301 = vld [vmem:[%s216 + $0xdc] sm:$0xf]
        %v302 = vld [vmem:[%s216 + $0xe0] sm:$0xf]
        %v303 = vld [vmem:[%s216 + $0xe4] sm:$0xf]
        %v304 = vld [vmem:[%s216 + $0xe8] sm:$0xf]
        %v305 = vld [vmem:[%s216 + $0xec] sm:$0xf]
        %v306 = vld [vmem:[%s216 + $0xf0] sm:$0xf]
        %v307 = vld [vmem:[%s216 + $0xf4] sm:$0xf]
        %v308 = vld [vmem:[%s216 + $0xf8] sm:$0xf]
        %v309 = vld [vmem:[%s216 + $0xfc] sm:$0xf]
        %v310 = vld [vmem:[%s216 + $0x100] sm:$0xf]
        %v311 = vld [vmem:[%s216 + $0x104] sm:$0xf]
        %v312 = vld [vmem:[%s216 + $0x108] sm:$0xf]
        %v313 = vld [vmem:[%s216 + $0x10c] sm:$0xf]
        %v314 = vld [vmem:[%s216 + $0x110] sm:$0xf]
        %v315 = vld [vmem:[%s216 + $0x114] sm:$0xf]
        %v316 = vld [vmem:[%s216 + $0x118] sm:$0xf]
        %v317 = vld [vmem:[%s216 + $0x11c] sm:$0xf]
        %v318 = vld [vmem:[%s216 + $0x120] sm:$0xf]
        %v319 = vld [vmem:[%s216 + $0x124] sm:$0xf]
        %v320 = vld [vmem:[%s216 + $0x128] sm:$0xf]
        %v321 = vld [vmem:[%s216 + $0x12c] sm:$0xf]
        %v322 = vld [vmem:[%s216 + $0x130] sm:$0xf]
        %v323 = vld [vmem:[%s216 + $0x134] sm:$0xf]
        %v324 = vld [vmem:[%s216 + $0x138] sm:$0xf]
        %v325 = vld [vmem:[%s216 + $0x13c] sm:$0xf]
        %v326 = vld [vmem:[%s216 + $0x140] sm:$0xf]
        %v327 = vld [vmem:[%s216 + $0x144] sm:$0xf]
        %v328 = vld [vmem:[%s216 + $0x148] sm:$0xf]
        %v329 = vld [vmem:[%s216 + $0x14c] sm:$0xf]
        %v330 = vld [vmem:[%s216 + $0x150] sm:$0xf]
        %v331 = vld [vmem:[%s216 + $0x154] sm:$0xf]
        %v332 = vld [vmem:[%s216 + $0x158] sm:$0xf]
        %v333 = vld [vmem:[%s216 + $0x15c] sm:$0xf]
        %v334 = vld [vmem:[%s216 + $0x160] sm:$0xf]
        %v335 = vld [vmem:[%s216 + $0x164] sm:$0xf]
        %v336 = vld [vmem:[%s216 + $0x168] sm:$0xf]
        %v337 = vld [vmem:[%s216 + $0x16c] sm:$0xf]
        %v338 = vld [vmem:[%s216 + $0x170] sm:$0xf]
        %v339 = vld [vmem:[%s216 + $0x174] sm:$0xf]
        %v340 = vld [vmem:[%s216 + $0x178] sm:$0xf]
        %v341 = vld [vmem:[%s216 + $0x17c] sm:$0xf]
        %v342 = vld [vmem:[%s216 + $0x180] sm:$0xf]
        %v343 = vld [vmem:[%s216 + $0x184] sm:$0xf]
        %v344 = vld [vmem:[%s216 + $0x188] sm:$0xf]
        %v345 = vld [vmem:[%s216 + $0x18c] sm:$0xf]
        %v346 = vld [vmem:[%s216 + $0x190] sm:$0xf]
        %v347 = vld [vmem:[%s216 + $0x194] sm:$0xf]
        %v348 = vld [vmem:[%s216 + $0x198] sm:$0xf]
        %v349 = vld [vmem:[%s216 + $0x19c] sm:$0xf]
        %v350 = vld [vmem:[%s216 + $0x1a0] sm:$0xf]
        %v351 = vld [vmem:[%s216 + $0x1a4] sm:$0xf]
        %v352 = vld [vmem:[%s216 + $0x1a8] sm:$0xf]
        %v353 = vld [vmem:[%s216 + $0x1ac] sm:$0xf]
        %v354 = vld [vmem:[%s216 + $0x1b0] sm:$0xf]
        %v355 = vld [vmem:[%s216 + $0x1b4] sm:$0xf]
        %v356 = vld [vmem:[%s216 + $0x1b8] sm:$0xf]
        %v357 = vld [vmem:[%s216 + $0x1bc] sm:$0xf]
        %v358 = vld [vmem:[%s216 + $0x1c0] sm:$0xf]
        %v359 = vld [vmem:[%s216 + $0x1c4] sm:$0xf]
        %v360 = vld [vmem:[%s216 + $0x1c8] sm:$0xf]
        %v361 = vld [vmem:[%s216 + $0x1cc] sm:$0xf]
        %v362 = vld [vmem:[%s216 + $0x1d0] sm:$0xf]
        %v363 = vld [vmem:[%s216 + $0x1d4] sm:$0xf]
        %v364 = vld [vmem:[%s216 + $0x1d8] sm:$0xf]
        %v365 = vld [vmem:[%s216 + $0x1dc] sm:$0xf]
        %v366 = vld [vmem:[%s216 + $0x1e0] sm:$0xf]
        %v367 = vld [vmem:[%s216 + $0x1e4] sm:$0xf]
        %v368 = vld [vmem:[%s216 + $0x1e8] sm:$0xf]
        %v369 = vld [vmem:[%s216 + $0x1ec] sm:$0xf]
        %v370 = vld [vmem:[%s216 + $0x1f0] sm:$0xf]
        %v371 = vld [vmem:[%s216 + $0x1f4] sm:$0xf]
        %v372 = vld [vmem:[%s216 + $0x1f8] sm:$0xf]
        %v373 = vld [vmem:[%s216 + $0x1fc] sm:$0xf]
        %v374 = vld [vmem:[%s216 + $0x200] sm:$0xf]
        %v375 = vld [vmem:[%s216 + $0x204] sm:$0xf]
        %v376 = vld [vmem:[%s216 + $0x208] sm:$0xf]
        %v377 = vld [vmem:[%s216 + $0x20c] sm:$0xf]
        %v378 = vld [vmem:[%s216 + $0x210] sm:$0xf]
        %v379 = vld [vmem:[%s216 + $0x214] sm:$0xf]
        %v380 = vld [vmem:[%s216 + $0x218] sm:$0xf]
        %v381 = vld [vmem:[%s216 + $0x21c] sm:$0xf]
        %v382 = vld [vmem:[%s216 + $0x220] sm:$0xf]
        %v383 = vld [vmem:[%s216 + $0x224] sm:$0xf]
        %v384 = vld [vmem:[%s216 + $0x228] sm:$0xf]
        %v385 = vld [vmem:[%s216 + $0x22c] sm:$0xf]
        %v386 = vld [vmem:[%s216 + $0x230] sm:$0xf]
        %v387 = vld [vmem:[%s216 + $0x234] sm:$0xf]
        %v388 = vld [vmem:[%s216 + $0x238] sm:$0xf]
        %v389 = vld [vmem:[%s216 + $0x23c] sm:$0xf]
        %v390 = vld [vmem:[%s216 + $0x240] sm:$0xf]
        %v391 = vld [vmem:[%s216 + $0x244] sm:$0xf]
        %v392 = vld [vmem:[%s216 + $0x248] sm:$0xf]
        %v393 = vld [vmem:[%s216 + $0x24c] sm:$0xf]
        %v394 = vld [vmem:[%s216 + $0x250] sm:$0xf]
        %v395 = vld [vmem:[%s216 + $0x254] sm:$0xf]
        %v396 = vld [vmem:[%s216 + $0x258] sm:$0xf]
        %v397 = vld [vmem:[%s216 + $0x25c] sm:$0xf]
        %v398 = vld [vmem:[%s216 + $0x260] sm:$0xf]
        %v399 = vld [vmem:[%s216 + $0x264] sm:$0xf]
        %v400 = vld [vmem:[%s216 + $0x268] sm:$0xf]
        %v401 = vld [vmem:[%s216 + $0x26c] sm:$0xf]
        %v402 = vld [vmem:[%s216 + $0x270] sm:$0xf]
        %v403 = vld [vmem:[%s216 + $0x274] sm:$0xf]
        %v404 = vld [vmem:[%s216 + $0x278] sm:$0xf]
        %v405 = vld [vmem:[%s216 + $0x27c] sm:$0xf]
        %v406 = vld [vmem:[%s216 + $0x280] sm:$0xf]
        %v407 = vld [vmem:[%s216 + $0x284] sm:$0xf]
        %v408 = vld [vmem:[%s216 + $0x288] sm:$0xf]
        %v409 = vld [vmem:[%s216 + $0x28c] sm:$0xf]
        %v410 = vld [vmem:[%s216 + $0x290] sm:$0xf]
        %v411 = vld [vmem:[%s216 + $0x294] sm:$0xf]
        %v412 = vld [vmem:[%s216 + $0x298] sm:$0xf]
        %v413 = vld [vmem:[%s216 + $0x29c] sm:$0xf]
        %v414 = vld [vmem:[%s216 + $0x2a0] sm:$0xf]
        %v415 = vld [vmem:[%s216 + $0x2a4] sm:$0xf]
        %v416 = vld [vmem:[%s216 + $0x2a8] sm:$0xf]
        %v417 = vld [vmem:[%s216 + $0x2ac] sm:$0xf]
        %v418 = vld [vmem:[%s216 + $0x2b0] sm:$0xf]
        %v419 = vld [vmem:[%s216 + $0x2b4] sm:$0xf]
        %v420 = vld [vmem:[%s216 + $0x2b8] sm:$0xf]
        %v421 = vld [vmem:[%s216 + $0x2bc] sm:$0xf]
        %v422 = vld [vmem:[%s216 + $0x2c0] sm:$0xf]
        %v423 = vld [vmem:[%s216 + $0x2c4] sm:$0xf]
        %v424 = vld [vmem:[%s216 + $0x2c8] sm:$0xf]
        %v425 = vld [vmem:[%s216 + $0x2cc] sm:$0xf]
        %v426 = vld [vmem:[%s216 + $0x2d0] sm:$0xf]
        %v427 = vld [vmem:[%s216 + $0x2d4] sm:$0xf]
        %v428 = vld [vmem:[%s216 + $0x2d8] sm:$0xf]
        %v429 = vld [vmem:[%s216 + $0x2dc] sm:$0xf]
        %v430 = vld [vmem:[%s216 + $0x2e0] sm:$0xf]
        %v431 = vld [vmem:[%s216 + $0x2e4] sm:$0xf]
        %v432 = vld [vmem:[%s216 + $0x2e8] sm:$0xf]
        %v433 = vld [vmem:[%s216 + $0x2ec] sm:$0xf]
        %v434 = vld [vmem:[%s216 + $0x2f0] sm:$0xf]
        %v435 = vld [vmem:[%s216 + $0x2f4] sm:$0xf]
        %v436 = vld [vmem:[%s216 + $0x2f8] sm:$0xf]
        %v437 = vld [vmem:[%s216 + $0x2fc] sm:$0xf]
        %v438 = vld [vmem:[%s216 + $0x300] sm:$0xf]
        %v439 = vld [vmem:[%s216 + $0x304] sm:$0xf]
        %v440 = vld [vmem:[%s216 + $0x308] sm:$0xf]
        %v441 = vld [vmem:[%s216 + $0x30c] sm:$0xf]
        %v442 = vld [vmem:[%s216 + $0x310] sm:$0xf]
        %v443 = vld [vmem:[%s216 + $0x314] sm:$0xf]
        %v444 = vld [vmem:[%s216 + $0x318] sm:$0xf]
        %v445 = vld [vmem:[%s216 + $0x31c] sm:$0xf]
        %v446 = vld [vmem:[%s216 + $0x320] sm:$0xf]
        %v447 = vld [vmem:[%s216 + $0x324] sm:$0xf]
        %v448 = vld [vmem:[%s216 + $0x328] sm:$0xf]
        %v449 = vld [vmem:[%s216 + $0x32c] sm:$0xf]
        %v450 = vld [vmem:[%s216 + $0x330] sm:$0xf]
        %v451 = vld [vmem:[%s216 + $0x334] sm:$0xf]
        %v452 = vld [vmem:[%s216 + $0x338] sm:$0xf]
        %v453 = vld [vmem:[%s216 + $0x33c] sm:$0xf]
        %v454 = vld [vmem:[%s216 + $0x340] sm:$0xf]
        %v455 = vld [vmem:[%s216 + $0x344] sm:$0xf]
        %v456 = vld [vmem:[%s216 + $0x348] sm:$0xf]
        %v457 = vld [vmem:[%s216 + $0x34c] sm:$0xf]
        %v458 = vld [vmem:[%s216 + $0x350] sm:$0xf]
        %v459 = vld [vmem:[%s216 + $0x354] sm:$0xf]
        %v460 = vld [vmem:[%s216 + $0x358] sm:$0xf]
        %v461 = vld [vmem:[%s216 + $0x35c] sm:$0xf]
        %v462 = vld [vmem:[%s216 + $0x360] sm:$0xf]
        %v463 = vld [vmem:[%s216 + $0x364] sm:$0xf]
        %v464 = vld [vmem:[%s216 + $0x368] sm:$0xf]
        %v465 = vld [vmem:[%s216 + $0x36c] sm:$0xf]
        %v466 = vld [vmem:[%s216 + $0x370] sm:$0xf]
        %v467 = vld [vmem:[%s216 + $0x374] sm:$0xf]
        %v468 = vld [vmem:[%s216 + $0x378] sm:$0xf]
        %v469 = vld [vmem:[%s216 + $0x37c] sm:$0xf]
        %v470 = vld [vmem:[%s216 + $0x380] sm:$0xf]
        %v471 = vld [vmem:[%s216 + $0x384] sm:$0xf]
        %v472 = vld [vmem:[%s216 + $0x388] sm:$0xf]
        %v473 = vld [vmem:[%s216 + $0x38c] sm:$0xf]
        %v474 = vld [vmem:[%s216 + $0x390] sm:$0xf]
        %v475 = vld [vmem:[%s216 + $0x394] sm:$0xf]
        %v476 = vld [vmem:[%s216 + $0x398] sm:$0xf]
        %v477 = vld [vmem:[%s216 + $0x39c] sm:$0xf]
        %v478 = vld [vmem:[%s216 + $0x3a0] sm:$0xf]
        %v479 = vld [vmem:[%s216 + $0x3a4] sm:$0xf]
        %v480 = vld [vmem:[%s216 + $0x3a8] sm:$0xf]
        %v481 = vld [vmem:[%s216 + $0x3ac] sm:$0xf]
        %v482 = vld [vmem:[%s216 + $0x3b0] sm:$0xf]
        %v483 = vld [vmem:[%s216 + $0x3b4] sm:$0xf]
        %v484 = vld [vmem:[%s216 + $0x3b8] sm:$0xf]
        %v485 = vld [vmem:[%s216 + $0x3bc] sm:$0xf]
        %v486 = vld [vmem:[%s216 + $0x3c0] sm:$0xf]
        %v487 = vld [vmem:[%s216 + $0x3c4] sm:$0xf]
        %v488 = vld [vmem:[%s216 + $0x3c8] sm:$0xf]
        %v489 = vld [vmem:[%s216 + $0x3cc] sm:$0xf]
        %v490 = vld [vmem:[%s216 + $0x3d0] sm:$0xf]
        %v491 = vld [vmem:[%s216 + $0x3d4] sm:$0xf]
        %v492 = vld [vmem:[%s216 + $0x3d8] sm:$0xf]
        %v493 = vld [vmem:[%s216 + $0x3dc] sm:$0xf]
        %v494 = vld [vmem:[%s216 + $0x3e0] sm:$0xf]
        %v495 = vld [vmem:[%s216 + $0x3e4] sm:$0xf]
        %v496 = vld [vmem:[%s216 + $0x3e8] sm:$0xf]
        %v497 = vld [vmem:[%s216 + $0x3ec] sm:$0xf]
        %v498 = vld [vmem:[%s216 + $0x3f0] sm:$0xf]
        %v499 = vld [vmem:[%s216 + $0x3f4] sm:$0xf]
        %v500 = vld [vmem:[%s216 + $0x3f8] sm:$0xf]
        %v501 = vld [vmem:[%s216 + $0x3fc] sm:$0xf]
        %v502 = vld [vmem:[%s1] sm:$0xff]
        %v503 = vld [vmem:[%s1 + $0x8] sm:$0xff]
        %v504 = vld [vmem:[%s1 + $0x10] sm:$0xff]
        %v505 = vld [vmem:[%s1 + $0x18] sm:$0xff]
        %v506 = vld [vmem:[%s1 + $0x20] sm:$0xff]
        %v507 = vld [vmem:[%s1 + $0x28] sm:$0xff]
        %v508 = vld [vmem:[%s1 + $0x30] sm:$0xff]
        %v509 = vld [vmem:[%s1 + $0x38] sm:$0xff]
        %v510 = vld [vmem:[%s1 + $0x40] sm:$0xff]
        %v511 = vld [vmem:[%s1 + $0x48] sm:$0xff]
        %v512 = vld [vmem:[%s1 + $0x50] sm:$0xff]
        %v513 = vld [vmem:[%s1 + $0x58] sm:$0xff]
        %v514 = vld [vmem:[%s1 + $0x60] sm:$0xff]
        %v515 = vld [vmem:[%s1 + $0x68] sm:$0xff]
        %v516 = vld [vmem:[%s1 + $0x70] sm:$0xff]
        %v517 = vld [vmem:[%s1 + $0x78] sm:$0xff]
        %v774 = vunpack.c.l.b16 %v246
        %v775 = vunpack.c.l.b16 %v247
        %v776 = vunpack.c.l.b16 %v248
        %v777 = vunpack.c.l.b16 %v249
        %v778 = vunpack.c.l.b16 %v250
        %v779 = vunpack.c.l.b16 %v251
        %v780 = vunpack.c.l.b16 %v252
        %v781 = vunpack.c.l.b16 %v253
        %v782 = vunpack.c.l.b16 %v254
        %v783 = vunpack.c.l.b16 %v255
        %v784 = vunpack.c.l.b16 %v256
        %v785 = vunpack.c.l.b16 %v257
        %v786 = vunpack.c.l.b16 %v258
        %v787 = vunpack.c.l.b16 %v259
        %v788 = vunpack.c.l.b16 %v260
        %v789 = vunpack.c.l.b16 %v261
        %v790 = vunpack.c.l.b16 %v262
        %v791 = vunpack.c.l.b16 %v263
        %v792 = vunpack.c.l.b16 %v264
        %v793 = vunpack.c.l.b16 %v265
        %v794 = vunpack.c.l.b16 %v266
        %v795 = vunpack.c.l.b16 %v267
        %v796 = vunpack.c.l.b16 %v268
        %v797 = vunpack.c.l.b16 %v269
        %v798 = vunpack.c.l.b16 %v270
        %v799 = vunpack.c.l.b16 %v271
        %v800 = vunpack.c.l.b16 %v272
        %v801 = vunpack.c.l.b16 %v273
        %v802 = vunpack.c.l.b16 %v274
        %v803 = vunpack.c.l.b16 %v275
        %v804 = vunpack.c.l.b16 %v276
        %v805 = vunpack.c.l.b16 %v277
        %v806 = vunpack.c.l.b16 %v278
        %v807 = vunpack.c.l.b16 %v279
        %v808 = vunpack.c.l.b16 %v280
        %v809 = vunpack.c.l.b16 %v281
        %v810 = vunpack.c.l.b16 %v282
        %v811 = vunpack.c.l.b16 %v283
        %v812 = vunpack.c.l.b16 %v284
        %v813 = vunpack.c.l.b16 %v285
        %v814 = vunpack.c.l.b16 %v286
        %v815 = vunpack.c.l.b16 %v287
        %v816 = vunpack.c.l.b16 %v288
        %v817 = vunpack.c.l.b16 %v289
        %v818 = vunpack.c.l.b16 %v290
        %v819 = vunpack.c.l.b16 %v291
        %v820 = vunpack.c.l.b16 %v292
        %v821 = vunpack.c.l.b16 %v293
        %v822 = vunpack.c.l.b16 %v294
        %v823 = vunpack.c.l.b16 %v295
        %v824 = vunpack.c.l.b16 %v296
        %v825 = vunpack.c.l.b16 %v297
        %v826 = vunpack.c.l.b16 %v298
        %v827 = vunpack.c.l.b16 %v299
        %v828 = vunpack.c.l.b16 %v300
        %v829 = vunpack.c.l.b16 %v301
        %v830 = vunpack.c.l.b16 %v302
        %v831 = vunpack.c.l.b16 %v303
        %v832 = vunpack.c.l.b16 %v304
        %v833 = vunpack.c.l.b16 %v305
        %v834 = vunpack.c.l.b16 %v306
        %v835 = vunpack.c.l.b16 %v307
        %v836 = vunpack.c.l.b16 %v308
        %v837 = vunpack.c.l.b16 %v309
        %v838 = vunpack.c.l.b16 %v310
        %v839 = vunpack.c.l.b16 %v311
        %v840 = vunpack.c.l.b16 %v312
        %v841 = vunpack.c.l.b16 %v313
        %v842 = vunpack.c.l.b16 %v314
        %v843 = vunpack.c.l.b16 %v315
        %v844 = vunpack.c.l.b16 %v316
        %v845 = vunpack.c.l.b16 %v317
        %v846 = vunpack.c.l.b16 %v318
        %v847 = vunpack.c.l.b16 %v319
        %v848 = vunpack.c.l.b16 %v320
        %v849 = vunpack.c.l.b16 %v321
        %v850 = vunpack.c.l.b16 %v322
        %v851 = vunpack.c.l.b16 %v323
        %v852 = vunpack.c.l.b16 %v324
        %v853 = vunpack.c.l.b16 %v325
        %v854 = vunpack.c.l.b16 %v326
        %v855 = vunpack.c.l.b16 %v327
        %v856 = vunpack.c.l.b16 %v328
        %v857 = vunpack.c.l.b16 %v329
        %v858 = vunpack.c.l.b16 %v330
        %v859 = vunpack.c.l.b16 %v331
        %v860 = vunpack.c.l.b16 %v332
        %v861 = vunpack.c.l.b16 %v333
        %v862 = vunpack.c.l.b16 %v334
        %v863 = vunpack.c.l.b16 %v335
        %v864 = vunpack.c.l.b16 %v336
        %v865 = vunpack.c.l.b16 %v337
        %v866 = vunpack.c.l.b16 %v338
        %v867 = vunpack.c.l.b16 %v339
        %v868 = vunpack.c.l.b16 %v340
        %v869 = vunpack.c.l.b16 %v341
        %v870 = vunpack.c.l.b16 %v342
        %v871 = vunpack.c.l.b16 %v343
        %v872 = vunpack.c.l.b16 %v344
        %v873 = vunpack.c.l.b16 %v345
        %v874 = vunpack.c.l.b16 %v346
        %v875 = vunpack.c.l.b16 %v347
        %v876 = vunpack.c.l.b16 %v348
        %v877 = vunpack.c.l.b16 %v349
        %v878 = vunpack.c.l.b16 %v350
        %v879 = vunpack.c.l.b16 %v351
        %v880 = vunpack.c.l.b16 %v352
        %v881 = vunpack.c.l.b16 %v353
        %v882 = vunpack.c.l.b16 %v354
        %v883 = vunpack.c.l.b16 %v355
        %v884 = vunpack.c.l.b16 %v356
        %v885 = vunpack.c.l.b16 %v357
        %v886 = vunpack.c.l.b16 %v358
        %v887 = vunpack.c.l.b16 %v359
        %v888 = vunpack.c.l.b16 %v360
        %v889 = vunpack.c.l.b16 %v361
        %v890 = vunpack.c.l.b16 %v362
        %v891 = vunpack.c.l.b16 %v363
        %v892 = vunpack.c.l.b16 %v364
        %v893 = vunpack.c.l.b16 %v365
        %v894 = vunpack.c.l.b16 %v366
        %v895 = vunpack.c.l.b16 %v367
        %v896 = vunpack.c.l.b16 %v368
        %v897 = vunpack.c.l.b16 %v369
        %v898 = vunpack.c.l.b16 %v370
        %v899 = vunpack.c.l.b16 %v371
        %v900 = vunpack.c.l.b16 %v372
        %v901 = vunpack.c.l.b16 %v373
        %v902 = vunpack.c.l.b16 %v374
        %v903 = vunpack.c.l.b16 %v375
        %v904 = vunpack.c.l.b16 %v376
        %v905 = vunpack.c.l.b16 %v377
        %v906 = vunpack.c.l.b16 %v378
        %v907 = vunpack.c.l.b16 %v379
        %v908 = vunpack.c.l.b16 %v380
        %v909 = vunpack.c.l.b16 %v381
        %v910 = vunpack.c.l.b16 %v382
        %v911 = vunpack.c.l.b16 %v383
        %v912 = vunpack.c.l.b16 %v384
        %v913 = vunpack.c.l.b16 %v385
        %v914 = vunpack.c.l.b16 %v386
        %v915 = vunpack.c.l.b16 %v387
        %v916 = vunpack.c.l.b16 %v388
        %v917 = vunpack.c.l.b16 %v389
        %v918 = vunpack.c.l.b16 %v390
        %v919 = vunpack.c.l.b16 %v391
        %v920 = vunpack.c.l.b16 %v392
        %v921 = vunpack.c.l.b16 %v393
        %v922 = vunpack.c.l.b16 %v394
        %v923 = vunpack.c.l.b16 %v395
        %v924 = vunpack.c.l.b16 %v396
        %v925 = vunpack.c.l.b16 %v397
        %v926 = vunpack.c.l.b16 %v398
        %v927 = vunpack.c.l.b16 %v399
        %v928 = vunpack.c.l.b16 %v400
        %v929 = vunpack.c.l.b16 %v401
        %v930 = vunpack.c.l.b16 %v402
        %v931 = vunpack.c.l.b16 %v403
        %v932 = vunpack.c.l.b16 %v404
        %v933 = vunpack.c.l.b16 %v405
        %v934 = vunpack.c.l.b16 %v406
        %v935 = vunpack.c.l.b16 %v407
        %v936 = vunpack.c.l.b16 %v408
        %v937 = vunpack.c.l.b16 %v409
        %v938 = vunpack.c.l.b16 %v410
        %v939 = vunpack.c.l.b16 %v411
        %v940 = vunpack.c.l.b16 %v412
        %v941 = vunpack.c.l.b16 %v413
        %v942 = vunpack.c.l.b16 %v414
        %v943 = vunpack.c.l.b16 %v415
        %v944 = vunpack.c.l.b16 %v416
        %v945 = vunpack.c.l.b16 %v417
        %v946 = vunpack.c.l.b16 %v418
        %v947 = vunpack.c.l.b16 %v419
        %v948 = vunpack.c.l.b16 %v420
        %v949 = vunpack.c.l.b16 %v421
        %v950 = vunpack.c.l.b16 %v422
        %v951 = vunpack.c.l.b16 %v423
        %v952 = vunpack.c.l.b16 %v424
        %v953 = vunpack.c.l.b16 %v425
        %v954 = vunpack.c.l.b16 %v426
        %v955 = vunpack.c.l.b16 %v427
        %v956 = vunpack.c.l.b16 %v428
        %v957 = vunpack.c.l.b16 %v429
        %v958 = vunpack.c.l.b16 %v430
        %v959 = vunpack.c.l.b16 %v431
        %v960 = vunpack.c.l.b16 %v432
        %v961 = vunpack.c.l.b16 %v433
        %v962 = vunpack.c.l.b16 %v434
        %v963 = vunpack.c.l.b16 %v435
        %v964 = vunpack.c.l.b16 %v436
        %v965 = vunpack.c.l.b16 %v437
        %v966 = vunpack.c.l.b16 %v438
        %v967 = vunpack.c.l.b16 %v439
        %v968 = vunpack.c.l.b16 %v440
        %v969 = vunpack.c.l.b16 %v441
        %v970 = vunpack.c.l.b16 %v442
        %v971 = vunpack.c.l.b16 %v443
        %v972 = vunpack.c.l.b16 %v444
        %v973 = vunpack.c.l.b16 %v445
        %v974 = vunpack.c.l.b16 %v446
        %v975 = vunpack.c.l.b16 %v447
        %v976 = vunpack.c.l.b16 %v448
        %v977 = vunpack.c.l.b16 %v449
        %v978 = vunpack.c.l.b16 %v450
        %v979 = vunpack.c.l.b16 %v451
        %v980 = vunpack.c.l.b16 %v452
        %v981 = vunpack.c.l.b16 %v453
        %v982 = vunpack.c.l.b16 %v454
        %v983 = vunpack.c.l.b16 %v455
        %v984 = vunpack.c.l.b16 %v456
        %v985 = vunpack.c.l.b16 %v457
        %v986 = vunpack.c.l.b16 %v458
        %v987 = vunpack.c.l.b16 %v459
        %v988 = vunpack.c.l.b16 %v460
        %v989 = vunpack.c.l.b16 %v461
        %v990 = vunpack.c.l.b16 %v462
        %v991 = vunpack.c.l.b16 %v463
        %v992 = vunpack.c.l.b16 %v464
        %v993 = vunpack.c.l.b16 %v465
        %v994 = vunpack.c.l.b16 %v466
        %v995 = vunpack.c.l.b16 %v467
        %v996 = vunpack.c.l.b16 %v468
        %v997 = vunpack.c.l.b16 %v469
        %v998 = vunpack.c.l.b16 %v470
        %v999 = vunpack.c.l.b16 %v471
        %v1000 = vunpack.c.l.b16 %v472
        %v1001 = vunpack.c.l.b16 %v473
        %v1002 = vunpack.c.l.b16 %v474
        %v1003 = vunpack.c.l.b16 %v475
        %v1004 = vunpack.c.l.b16 %v476
        %v1005 = vunpack.c.l.b16 %v477
        %v1006 = vunpack.c.l.b16 %v478
        %v1007 = vunpack.c.l.b16 %v479
        %v1008 = vunpack.c.l.b16 %v480
        %v1009 = vunpack.c.l.b16 %v481
        %v1010 = vunpack.c.l.b16 %v482
        %v1011 = vunpack.c.l.b16 %v483
        %v1012 = vunpack.c.l.b16 %v484
        %v1013 = vunpack.c.l.b16 %v485
        %v1014 = vunpack.c.l.b16 %v486
        %v1015 = vunpack.c.l.b16 %v487
        %v1016 = vunpack.c.l.b16 %v488
        %v1017 = vunpack.c.l.b16 %v489
        %v1018 = vunpack.c.l.b16 %v490
        %v1019 = vunpack.c.l.b16 %v491
        %v1020 = vunpack.c.l.b16 %v492
        %v1021 = vunpack.c.l.b16 %v493
        %v1022 = vunpack.c.l.b16 %v494
        %v1023 = vunpack.c.l.b16 %v495
        %v1024 = vunpack.c.l.b16 %v496
        %v1025 = vunpack.c.l.b16 %v497
        %v1026 = vunpack.c.l.b16 %v498
        %v1027 = vunpack.c.l.b16 %v499
        %v1028 = vunpack.c.l.b16 %v500
        %v1029 = vunpack.c.l.b16 %v501
        %v1030 = vpack.c.b16 %v775, %v774
        %v1031 = vpack.c.b16 %v777, %v776
        %v1032 = vpack.c.b16 %v779, %v778
        %v1033 = vpack.c.b16 %v781, %v780
        %v1034 = vpack.c.b16 %v783, %v782
        %v1035 = vpack.c.b16 %v785, %v784
        %v1036 = vpack.c.b16 %v787, %v786
        %v1037 = vpack.c.b16 %v789, %v788
        %v1038 = vpack.c.b16 %v791, %v790
        %v1039 = vpack.c.b16 %v793, %v792
        %v1040 = vpack.c.b16 %v795, %v794
        %v1041 = vpack.c.b16 %v797, %v796
        %v1042 = vpack.c.b16 %v799, %v798
        %v1043 = vpack.c.b16 %v801, %v800
        %v1044 = vpack.c.b16 %v803, %v802
        %v1045 = vpack.c.b16 %v805, %v804
        %v1046 = vpack.c.b16 %v807, %v806
        %v1047 = vpack.c.b16 %v809, %v808
        %v1048 = vpack.c.b16 %v811, %v810
        %v1049 = vpack.c.b16 %v813, %v812
        %v1050 = vpack.c.b16 %v815, %v814
        %v1051 = vpack.c.b16 %v817, %v816
        %v1052 = vpack.c.b16 %v819, %v818
        %v1053 = vpack.c.b16 %v821, %v820
        %v1054 = vpack.c.b16 %v823, %v822
        %v1055 = vpack.c.b16 %v825, %v824
        %v1056 = vpack.c.b16 %v827, %v826
        %v1057 = vpack.c.b16 %v829, %v828
        %v1058 = vpack.c.b16 %v831, %v830
        %v1059 = vpack.c.b16 %v833, %v832
        %v1060 = vpack.c.b16 %v835, %v834
        %v1061 = vpack.c.b16 %v837, %v836
        %v1062 = vpack.c.b16 %v839, %v838
        %v1063 = vpack.c.b16 %v841, %v840
        %v1064 = vpack.c.b16 %v843, %v842
        %v1065 = vpack.c.b16 %v845, %v844
        %v1066 = vpack.c.b16 %v847, %v846
        %v1067 = vpack.c.b16 %v849, %v848
        %v1068 = vpack.c.b16 %v851, %v850
        %v1069 = vpack.c.b16 %v853, %v852
        %v1070 = vpack.c.b16 %v855, %v854
        %v1071 = vpack.c.b16 %v857, %v856
        %v1072 = vpack.c.b16 %v859, %v858
        %v1073 = vpack.c.b16 %v861, %v860
        %v1074 = vpack.c.b16 %v863, %v862
        %v1075 = vpack.c.b16 %v865, %v864
        %v1076 = vpack.c.b16 %v867, %v866
        %v1077 = vpack.c.b16 %v869, %v868
        %v1078 = vpack.c.b16 %v871, %v870
        %v1079 = vpack.c.b16 %v873, %v872
        %v1080 = vpack.c.b16 %v875, %v874
        %v1081 = vpack.c.b16 %v877, %v876
        %v1082 = vpack.c.b16 %v879, %v878
        %v1083 = vpack.c.b16 %v881, %v880
        %v1084 = vpack.c.b16 %v883, %v882
        %v1085 = vpack.c.b16 %v885, %v884
        %v1086 = vpack.c.b16 %v887, %v886
        %v1087 = vpack.c.b16 %v889, %v888
        %v1088 = vpack.c.b16 %v891, %v890
        %v1089 = vpack.c.b16 %v893, %v892
        %v1090 = vpack.c.b16 %v895, %v894
        %v1091 = vpack.c.b16 %v897, %v896
        %v1092 = vpack.c.b16 %v899, %v898
        %v1093 = vpack.c.b16 %v901, %v900
        %v1094 = vpack.c.b16 %v903, %v902
        %v1095 = vpack.c.b16 %v905, %v904
        %v1096 = vpack.c.b16 %v907, %v906
        %v1097 = vpack.c.b16 %v909, %v908
        %v1098 = vpack.c.b16 %v911, %v910
        %v1099 = vpack.c.b16 %v913, %v912
        %v1100 = vpack.c.b16 %v915, %v914
        %v1101 = vpack.c.b16 %v917, %v916
        %v1102 = vpack.c.b16 %v919, %v918
        %v1103 = vpack.c.b16 %v921, %v920
        %v1104 = vpack.c.b16 %v923, %v922
        %v1105 = vpack.c.b16 %v925, %v924
        %v1106 = vpack.c.b16 %v927, %v926
        %v1107 = vpack.c.b16 %v929, %v928
        %v1108 = vpack.c.b16 %v931, %v930
        %v1109 = vpack.c.b16 %v933, %v932
        %v1110 = vpack.c.b16 %v935, %v934
        %v1111 = vpack.c.b16 %v937, %v936
        %v1112 = vpack.c.b16 %v939, %v938
        %v1113 = vpack.c.b16 %v941, %v940
        %v1114 = vpack.c.b16 %v943, %v942
        %v1115 = vpack.c.b16 %v945, %v944
        %v1116 = vpack.c.b16 %v947, %v946
        %v1117 = vpack.c.b16 %v949, %v948
        %v1118 = vpack.c.b16 %v951, %v950
        %v1119 = vpack.c.b16 %v953, %v952
        %v1120 = vpack.c.b16 %v955, %v954
        %v1121 = vpack.c.b16 %v957, %v956
        %v1122 = vpack.c.b16 %v959, %v958
        %v1123 = vpack.c.b16 %v961, %v960
        %v1124 = vpack.c.b16 %v963, %v962
        %v1125 = vpack.c.b16 %v965, %v964
        %v1126 = vpack.c.b16 %v967, %v966
        %v1127 = vpack.c.b16 %v969, %v968
        %v1128 = vpack.c.b16 %v971, %v970
        %v1129 = vpack.c.b16 %v973, %v972
        %v1130 = vpack.c.b16 %v975, %v974
        %v1131 = vpack.c.b16 %v977, %v976
        %v1132 = vpack.c.b16 %v979, %v978
        %v1133 = vpack.c.b16 %v981, %v980
        %v1134 = vpack.c.b16 %v983, %v982
        %v1135 = vpack.c.b16 %v985, %v984
        %v1136 = vpack.c.b16 %v987, %v986
        %v1137 = vpack.c.b16 %v989, %v988
        %v1138 = vpack.c.b16 %v991, %v990
        %v1139 = vpack.c.b16 %v993, %v992
        %v1140 = vpack.c.b16 %v995, %v994
        %v1141 = vpack.c.b16 %v997, %v996
        %v1142 = vpack.c.b16 %v999, %v998
        %v1143 = vpack.c.b16 %v1001, %v1000
        %v1144 = vpack.c.b16 %v1003, %v1002
        %v1145 = vpack.c.b16 %v1005, %v1004
        %v1146 = vpack.c.b16 %v1007, %v1006
        %v1147 = vpack.c.b16 %v1009, %v1008
        %v1148 = vpack.c.b16 %v1011, %v1010
        %v1149 = vpack.c.b16 %v1013, %v1012
        %v1150 = vpack.c.b16 %v1015, %v1014
        %v1151 = vpack.c.b16 %v1017, %v1016
        %v1152 = vpack.c.b16 %v1019, %v1018
        %v1153 = vpack.c.b16 %v1021, %v1020
        %v1154 = vpack.c.b16 %v1023, %v1022
        %v1155 = vpack.c.b16 %v1025, %v1024
        %v1156 = vpack.c.b16 %v1027, %v1026
        %v1157 = vpack.c.b16 %v1029, %v1028
        %v1302 = vunpack.c.l.b16 %v502
        %v1303 = vunpack.c.h.b16 %v502
        %v1304 = vunpack.c.l.b16 %v503
        %v1305 = vunpack.c.h.b16 %v503
        %v1306 = vunpack.c.l.b16 %v504
        %v1307 = vunpack.c.h.b16 %v504
        %v1308 = vunpack.c.l.b16 %v505
        %v1309 = vunpack.c.h.b16 %v505
        %v1310 = vunpack.c.l.b16 %v506
        %v1311 = vunpack.c.h.b16 %v506
        %v1312 = vunpack.c.l.b16 %v507
        %v1313 = vunpack.c.h.b16 %v507
        %v1314 = vunpack.c.l.b16 %v508
        %v1315 = vunpack.c.h.b16 %v508
        %v1316 = vunpack.c.l.b16 %v509
        %v1317 = vunpack.c.h.b16 %v509
        %v1318 = vunpack.c.l.b16 %v510
        %v1319 = vunpack.c.h.b16 %v510
        %v1320 = vunpack.c.l.b16 %v511
        %v1321 = vunpack.c.h.b16 %v511
        %v1322 = vunpack.c.l.b16 %v512
        %v1323 = vunpack.c.h.b16 %v512
        %v1324 = vunpack.c.l.b16 %v513
        %v1325 = vunpack.c.h.b16 %v513
        %v1326 = vunpack.c.l.b16 %v514
        %v1327 = vunpack.c.h.b16 %v514
        %v1328 = vunpack.c.l.b16 %v515
        %v1329 = vunpack.c.h.b16 %v515
        %v1330 = vunpack.c.l.b16 %v516
        %v1331 = vunpack.c.h.b16 %v516
        %v1332 = vunpack.c.l.b16 %v517
        %v1333 = vunpack.c.h.b16 %v517
        %v1334 = vpack.c.b16 %v1304, %v1302
        %v1335 = vpack.c.b16 %v1305, %v1303
        %v1336 = vpack.c.b16 %v1308, %v1306
        %v1337 = vpack.c.b16 %v1309, %v1307
        %v1338 = vpack.c.b16 %v1312, %v1310
        %v1339 = vpack.c.b16 %v1313, %v1311
        %v1340 = vpack.c.b16 %v1316, %v1314
        %v1341 = vpack.c.b16 %v1317, %v1315
        %v1342 = vpack.c.b16 %v1320, %v1318
        %v1343 = vpack.c.b16 %v1321, %v1319
        %v1344 = vpack.c.b16 %v1324, %v1322
        %v1345 = vpack.c.b16 %v1325, %v1323
        %v1346 = vpack.c.b16 %v1328, %v1326
        %v1347 = vpack.c.b16 %v1329, %v1327
        %v1348 = vpack.c.b16 %v1332, %v1330
        %v1349 = vpack.c.b16 %v1333, %v1331
        %1366 = vmatprep.subr.bf16.mxu0 %v1335
        %1367 = vmatpush1.bf16.msra.mxu0 %v1334
        %1368 = vmatprep.subr.bf16.mxu0 %v1337
        %1369 = vmatpush1.bf16.msra.mxu0 %v1336
        %1370 = vmatprep.subr.bf16.mxu0 %v1339
        %1371 = vmatpush1.bf16.msra.mxu0 %v1338
        %1372 = vmatprep.subr.bf16.mxu0 %v1341
        %1373 = vmatpush1.bf16.msra.mxu0 %v1340
        %1374 = vmatprep.subr.bf16.mxu0 %v1343
        %1375 = vmatpush1.bf16.msra.mxu0 %v1342
        %1376 = vmatprep.subr.bf16.mxu0 %v1345
        %1377 = vmatpush1.bf16.msra.mxu0 %v1344
        %1378 = vmatprep.subr.bf16.mxu0 %v1347
        %1379 = vmatpush1.bf16.msra.mxu0 %v1346
        %1380 = vmatprep.subr.bf16.mxu0 %v1349
        %1381 = vmatpush1.bf16.msra.mxu0 %v1348
        %1382 = vmatprep.subr.bf16.mxu0 0
        %1383 = vmatpush1.bf16.msra.mxu0 0
        %1384 = vmatprep.subr.bf16.mxu0 0
        %1385 = vmatpush1.bf16.msra.mxu0 0
        %1386 = vmatprep.subr.bf16.mxu0 0
        %1387 = vmatpush1.bf16.msra.mxu0 0
        %1388 = vmatprep.subr.bf16.mxu0 0
        %1389 = vmatpush1.bf16.msra.mxu0 0
        %1390 = vmatprep.subr.bf16.mxu0 0
        %1391 = vmatpush1.bf16.msra.mxu0 0
        %1392 = vmatprep.subr.bf16.mxu0 0
        %1393 = vmatpush1.bf16.msra.mxu0 0
        %1394 = vmatprep.subr.bf16.mxu0 0
        %1395 = vmatpush1.bf16.msra.mxu0 0
        %1396 = vmatprep.subr.bf16.mxu0 0
        %1397 = vmatpush1.bf16.msra.mxu0 0
        %1398 = vmatprep.mubr.bf16.mxu0 0
        %1399 = vmatmul.mubr.bf16.gmra.mrb[0].mxu0 %v1030
        %v1400 = vpop.f32.mrb[0].mxu0
        %v1401 = vadd.f32 0.0, %v1400
        %v1402 = vpop.f32.mrb[0].mxu0
        %v1403 = vadd.f32 0.0, %v1402
        %v1404 = vpop.f32.mrb[0].mxu0
        %v1405 = vadd.f32 0.0, %v1404
        %v1406 = vpop.f32.mrb[0].mxu0
        %v1407 = vadd.f32 0.0, %v1406
        %1408 = vmatprep.mubr.bf16.mxu0 0
        %1409 = vmatmul.mubr.bf16.gmra.mrb[0].mxu0 %v1031
        %v1410 = vpop.f32.mrb[0].mxu0
        %v1411 = vadd.f32 0.0, %v1410
        %v1412 = vpop.f32.mrb[0].mxu0
        %v1413 = vadd.f32 0.0, %v1412
        %v1414 = vpop.f32.mrb[0].mxu0
        %v1415 = vadd.f32 0.0, %v1414
        %v1416 = vpop.f32.mrb[0].mxu0
        %v1417 = vadd.f32 0.0, %v1416
        %1418 = vmatprep.mubr.bf16.mxu0 0
        %1419 = vmatmul.mubr.bf16.gmra.mrb[0].mxu0 %v1032
        %v1420 = vpop.f32.mrb[0].mxu0
        %v1421 = vadd.f32 0.0, %v1420
        %v1422 = vpop.f32.mrb[0].mxu0
        %v1423 = vadd.f32 0.0, %v1422
        %v1424 = vpop.f32.mrb[0].mxu0
        %v1425 = vadd.f32 0.0, %v1424
        %v1426 = vpop.f32.mrb[0].mxu0
        %v1427 = vadd.f32 0.0, %v1426
        %1428 = vmatprep.mubr.bf16.mxu0 0
        %1429 = vmatmul.mubr.bf16.gmra.mrb[0].mxu0 %v1033
        %v1430 = vpop.f32.mrb[0].mxu0
        %v1431 = vadd.f32 0.0, %v1430
        %v1432 = vpop.f32.mrb[0].mxu0
        %v1433 = vadd.f32 0.0, %v1432
        %v1434 = vpop.f32.mrb[0].mxu0
        %v1435 = vadd.f32 0.0, %v1434
        %v1436 = vpop.f32.mrb[0].mxu0
        %v1437 = vadd.f32 0.0, %v1436
        %1438 = vmatprep.mubr.bf16.mxu0 0
        %1439 = vmatmul.mubr.bf16.gmra.mrb[0].mxu0 %v1034
        %v1440 = vpop.f32.mrb[0].mxu0
        %v1441 = vadd.f32 0.0, %v1440
        %v1442 = vpop.f32.mrb[0].mxu0
        %v1443 = vadd.f32 0.0, %v1442
        %v1444 = vpop.f32.mrb[0].mxu0
        %v1445 = vadd.f32 0.0, %v1444
        %v1446 = vpop.f32.mrb[0].mxu0
        %v1447 = vadd.f32 0.0, %v1446
        %1448 = vmatprep.mubr.bf16.mxu0 0
        %1449 = vmatmul.mubr.bf16.gmra.mrb[0].mxu0 %v1035
        %v1450 = vpop.f32.mrb[0].mxu0
        %v1451 = vadd.f32 0.0, %v1450
        %v1452 = vpop.f32.mrb[0].mxu0
        %v1453 = vadd.f32 0.0, %v1452
        %v1454 = vpop.f32.mrb[0].mxu0
        %v1455 = vadd.f32 0.0, %v1454
        %v1456 = vpop.f32.mrb[0].mxu0
        %v1457 = vadd.f32 0.0, %v1456
        %1458 = vmatprep.mubr.bf16.mxu0 0
        %1459 = vmatmul.mubr.bf16.gmra.mrb[0].mxu0 %v1036
        %v1460 = vpop.f32.mrb[0].mxu0
        %v1461 = vadd.f32 0.0, %v1460
        %v1462 = vpop.f32.mrb[0].mxu0
        %v1463 = vadd.f32 0.0, %v1462
        %v1464 = vpop.f32.mrb[0].mxu0
        %v1465 = vadd.f32 0.0, %v1464
        %v1466 = vpop.f32.mrb[0].mxu0
        %v1467 = vadd.f32 0.0, %v1466
        %1468 = vmatprep.mubr.bf16.mxu0 0
        %1469 = vmatmul.mubr.bf16.gmra.mrb[0].mxu0 %v1037
        %v1470 = vpop.f32.mrb[0].mxu0
        %v1471 = vadd.f32 0.0, %v1470
        %v1472 = vpop.f32.mrb[0].mxu0
        %v1473 = vadd.f32 0.0, %v1472
        %v1474 = vpop.f32.mrb[0].mxu0
        %v1475 = vadd.f32 0.0, %v1474
        %v1476 = vpop.f32.mrb[0].mxu0
        %v1477 = vadd.f32 0.0, %v1476
        %1478 = vmatprep.mubr.bf16.mxu0 0
        %1479 = vmatmul.mubr.bf16.gmra.mrb[0].mxu0 %v1038
        %v1480 = vpop.f32.mrb[0].mxu0
        %v1481 = vadd.f32 0.0, %v1480
        %v1482 = vpop.f32.mrb[0].mxu0
        %v1483 = vadd.f32 0.0, %v1482
        %v1484 = vpop.f32.mrb[0].mxu0
        %v1485 = vadd.f32 0.0, %v1484
        %v1486 = vpop.f32.mrb[0].mxu0
        %v1487 = vadd.f32 0.0, %v1486
        %1488 = vmatprep.mubr.bf16.mxu0 0
        %1489 = vmatmul.mubr.bf16.gmra.mrb[0].mxu0 %v1039
        %v1490 = vpop.f32.mrb[0].mxu0
        %v1491 = vadd.f32 0.0, %v1490
        %v1492 = vpop.f32.mrb[0].mxu0
        %v1493 = vadd.f32 0.0, %v1492
        %v1494 = vpop.f32.mrb[0].mxu0
        %v1495 = vadd.f32 0.0, %v1494
        %v1496 = vpop.f32.mrb[0].mxu0
        %v1497 = vadd.f32 0.0, %v1496
        %1498 = vmatprep.mubr.bf16.mxu0 0
        %1499 = vmatmul.mubr.bf16.gmra.mrb[0].mxu0 %v1040
        %v1500 = vpop.f32.mrb[0].mxu0
        %v1501 = vadd.f32 0.0, %v1500
        %v1502 = vpop.f32.mrb[0].mxu0
        %v1503 = vadd.f32 0.0, %v1502
        %v1504 = vpop.f32.mrb[0].mxu0
        %v1505 = vadd.f32 0.0, %v1504
        %v1506 = vpop.f32.mrb[0].mxu0
        %v1507 = vadd.f32 0.0, %v1506
        %1508 = vmatprep.mubr.bf16.mxu0 0
        %1509 = vmatmul.mubr.bf16.gmra.mrb[0].mxu0 %v1041
        %v1510 = vpop.f32.mrb[0].mxu0
        %v1511 = vadd.f32 0.0, %v1510
        %v1512 = vpop.f32.mrb[0].mxu0
        %v1513 = vadd.f32 0.0, %v1512
        %v1514 = vpop.f32.mrb[0].mxu0
        %v1515 = vadd.f32 0.0, %v1514
        %v1516 = vpop.f32.mrb[0].mxu0
        %v1517 = vadd.f32 0.0, %v1516
        %1518 = vmatprep.mubr.bf16.mxu0 0
        %1519 = vmatmul.mubr.bf16.gmra.mrb[0].mxu0 %v1042
        %v1520 = vpop.f32.mrb[0].mxu0
        %v1521 = vadd.f32 0.0, %v1520
        %v1522 = vpop.f32.mrb[0].mxu0
        %v1523 = vadd.f32 0.0, %v1522
        %v1524 = vpop.f32.mrb[0].mxu0
        %v1525 = vadd.f32 0.0, %v1524
        %v1526 = vpop.f32.mrb[0].mxu0
        %v1527 = vadd.f32 0.0, %v1526
        %1528 = vmatprep.mubr.bf16.mxu0 0
        %1529 = vmatmul.mubr.bf16.gmra.mrb[0].mxu0 %v1043
        %v1530 = vpop.f32.mrb[0].mxu0
        %v1531 = vadd.f32 0.0, %v1530
        %v1532 = vpop.f32.mrb[0].mxu0
        %v1533 = vadd.f32 0.0, %v1532
        %v1534 = vpop.f32.mrb[0].mxu0
        %v1535 = vadd.f32 0.0, %v1534
        %v1536 = vpop.f32.mrb[0].mxu0
        %v1537 = vadd.f32 0.0, %v1536
        %1538 = vmatprep.mubr.bf16.mxu0 0
        %1539 = vmatmul.mubr.bf16.gmra.mrb[0].mxu0 %v1044
        %v1540 = vpop.f32.mrb[0].mxu0
        %v1541 = vadd.f32 0.0, %v1540
        %v1542 = vpop.f32.mrb[0].mxu0
        %v1543 = vadd.f32 0.0, %v1542
        %v1544 = vpop.f32.mrb[0].mxu0
        %v1545 = vadd.f32 0.0, %v1544
        %v1546 = vpop.f32.mrb[0].mxu0
        %v1547 = vadd.f32 0.0, %v1546
        %1548 = vmatprep.mubr.bf16.mxu0 0
        %1549 = vmatmul.mubr.bf16.gmra.mrb[0].mxu0 %v1045
        %v1550 = vpop.f32.mrb[0].mxu0
        %v1551 = vadd.f32 0.0, %v1550
        %v1552 = vpop.f32.mrb[0].mxu0
        %v1553 = vadd.f32 0.0, %v1552
        %v1554 = vpop.f32.mrb[0].mxu0
        %v1555 = vadd.f32 0.0, %v1554
        %v1556 = vpop.f32.mrb[0].mxu0
        %v1557 = vadd.f32 0.0, %v1556
        %1558 = vmatprep.mubr.bf16.mxu0 0
        %1559 = vmatmul.mubr.bf16.gmra.mrb[0].mxu0 %v1046
        %v1560 = vpop.f32.mrb[0].mxu0
        %v1561 = vadd.f32 0.0, %v1560
        %v1562 = vpop.f32.mrb[0].mxu0
        %v1563 = vadd.f32 0.0, %v1562
        %v1564 = vpop.f32.mrb[0].mxu0
        %v1565 = vadd.f32 0.0, %v1564
        %v1566 = vpop.f32.mrb[0].mxu0
        %v1567 = vadd.f32 0.0, %v1566
        %1568 = vmatprep.mubr.bf16.mxu0 0
        %1569 = vmatmul.mubr.bf16.gmra.mrb[0].mxu0 %v1047
        %v1570 = vpop.f32.mrb[0].mxu0
        %v1571 = vadd.f32 0.0, %v1570
        %v1572 = vpop.f32.mrb[0].mxu0
        %v1573 = vadd.f32 0.0, %v1572
        %v1574 = vpop.f32.mrb[0].mxu0
        %v1575 = vadd.f32 0.0, %v1574
        %v1576 = vpop.f32.mrb[0].mxu0
        %v1577 = vadd.f32 0.0, %v1576
        %1578 = vmatprep.mubr.bf16.mxu0 0
        %1579 = vmatmul.mubr.bf16.gmra.mrb[0].mxu0 %v1048
        %v1580 = vpop.f32.mrb[0].mxu0
        %v1581 = vadd.f32 0.0, %v1580
        %v1582 = vpop.f32.mrb[0].mxu0
        %v1583 = vadd.f32 0.0, %v1582
        %v1584 = vpop.f32.mrb[0].mxu0
        %v1585 = vadd.f32 0.0, %v1584
        %v1586 = vpop.f32.mrb[0].mxu0
        %v1587 = vadd.f32 0.0, %v1586
        %1588 = vmatprep.mubr.bf16.mxu0 0
        %1589 = vmatmul.mubr.bf16.gmra.mrb[0].mxu0 %v1049
        %v1590 = vpop.f32.mrb[0].mxu0
        %v1591 = vadd.f32 0.0, %v1590
        %v1592 = vpop.f32.mrb[0].mxu0
        %v1593 = vadd.f32 0.0, %v1592
        %v1594 = vpop.f32.mrb[0].mxu0
        %v1595 = vadd.f32 0.0, %v1594
        %v1596 = vpop.f32.mrb[0].mxu0
        %v1597 = vadd.f32 0.0, %v1596
        %1598 = vmatprep.mubr.bf16.mxu0 0
        %1599 = vmatmul.mubr.bf16.gmra.mrb[0].mxu0 %v1050
        %v1600 = vpop.f32.mrb[0].mxu0
        %v1601 = vadd.f32 0.0, %v1600
        %v1602 = vpop.f32.mrb[0].mxu0
        %v1603 = vadd.f32 0.0, %v1602
        %v1604 = vpop.f32.mrb[0].mxu0
        %v1605 = vadd.f32 0.0, %v1604
        %v1606 = vpop.f32.mrb[0].mxu0
        %v1607 = vadd.f32 0.0, %v1606
        %1608 = vmatprep.mubr.bf16.mxu0 0
        %1609 = vmatmul.mubr.bf16.gmra.mrb[0].mxu0 %v1051
        %v1610 = vpop.f32.mrb[0].mxu0
        %v1611 = vadd.f32 0.0, %v1610
        %v1612 = vpop.f32.mrb[0].mxu0
        %v1613 = vadd.f32 0.0, %v1612
        %v1614 = vpop.f32.mrb[0].mxu0
        %v1615 = vadd.f32 0.0, %v1614
        %v1616 = vpop.f32.mrb[0].mxu0
        %v1617 = vadd.f32 0.0, %v1616
        %1618 = vmatprep.mubr.bf16.mxu0 0
        %1619 = vmatmul.mubr.bf16.gmra.mrb[0].mxu0 %v1052
        %v1620 = vpop.f32.mrb[0].mxu0
        %v1621 = vadd.f32 0.0, %v1620
        %v1622 = vpop.f32.mrb[0].mxu0
        %v1623 = vadd.f32 0.0, %v1622
        %v1624 = vpop.f32.mrb[0].mxu0
        %v1625 = vadd.f32 0.0, %v1624
        %v1626 = vpop.f32.mrb[0].mxu0
        %v1627 = vadd.f32 0.0, %v1626
        %1628 = vmatprep.mubr.bf16.mxu0 0
        %1629 = vmatmul.mubr.bf16.gmra.mrb[0].mxu0 %v1053
        %v1630 = vpop.f32.mrb[0].mxu0
        %v1631 = vadd.f32 0.0, %v1630
        %v1632 = vpop.f32.mrb[0].mxu0
        %v1633 = vadd.f32 0.0, %v1632
        %v1634 = vpop.f32.mrb[0].mxu0
        %v1635 = vadd.f32 0.0, %v1634
        %v1636 = vpop.f32.mrb[0].mxu0
        %v1637 = vadd.f32 0.0, %v1636
        %1638 = vmatprep.mubr.bf16.mxu0 0
        %1639 = vmatmul.mubr.bf16.gmra.mrb[0].mxu0 %v1054
        %v1640 = vpop.f32.mrb[0].mxu0
        %v1641 = vadd.f32 0.0, %v1640
        %v1642 = vpop.f32.mrb[0].mxu0
        %v1643 = vadd.f32 0.0, %v1642
        %v1644 = vpop.f32.mrb[0].mxu0
        %v1645 = vadd.f32 0.0, %v1644
        %v1646 = vpop.f32.mrb[0].mxu0
        %v1647 = vadd.f32 0.0, %v1646
        %1648 = vmatprep.mubr.bf16.mxu0 0
        %1649 = vmatmul.mubr.bf16.gmra.mrb[0].mxu0 %v1055
        %v1650 = vpop.f32.mrb[0].mxu0
        %v1651 = vadd.f32 0.0, %v1650
        %v1652 = vpop.f32.mrb[0].mxu0
        %v1653 = vadd.f32 0.0, %v1652
        %v1654 = vpop.f32.mrb[0].mxu0
        %v1655 = vadd.f32 0.0, %v1654
        %v1656 = vpop.f32.mrb[0].mxu0
        %v1657 = vadd.f32 0.0, %v1656
        %1658 = vmatprep.mubr.bf16.mxu0 0
        %1659 = vmatmul.mubr.bf16.gmra.mrb[0].mxu0 %v1056
        %v1660 = vpop.f32.mrb[0].mxu0
        %v1661 = vadd.f32 0.0, %v1660
        %v1662 = vpop.f32.mrb[0].mxu0
        %v1663 = vadd.f32 0.0, %v1662
        %v1664 = vpop.f32.mrb[0].mxu0
        %v1665 = vadd.f32 0.0, %v1664
        %v1666 = vpop.f32.mrb[0].mxu0
        %v1667 = vadd.f32 0.0, %v1666
        %1668 = vmatprep.mubr.bf16.mxu0 0
        %1669 = vmatmul.mubr.bf16.gmra.mrb[0].mxu0 %v1057
        %v1670 = vpop.f32.mrb[0].mxu0
        %v1671 = vadd.f32 0.0, %v1670
        %v1672 = vpop.f32.mrb[0].mxu0
        %v1673 = vadd.f32 0.0, %v1672
        %v1674 = vpop.f32.mrb[0].mxu0
        %v1675 = vadd.f32 0.0, %v1674
        %v1676 = vpop.f32.mrb[0].mxu0
        %v1677 = vadd.f32 0.0, %v1676
        %1678 = vmatprep.mubr.bf16.mxu0 0
        %1679 = vmatmul.mubr.bf16.gmra.mrb[0].mxu0 %v1058
        %v1680 = vpop.f32.mrb[0].mxu0
        %v1681 = vadd.f32 0.0, %v1680
        %v1682 = vpop.f32.mrb[0].mxu0
        %v1683 = vadd.f32 0.0, %v1682
        %v1684 = vpop.f32.mrb[0].mxu0
        %v1685 = vadd.f32 0.0, %v1684
        %v1686 = vpop.f32.mrb[0].mxu0
        %v1687 = vadd.f32 0.0, %v1686
        %1688 = vmatprep.mubr.bf16.mxu0 0
        %1689 = vmatmul.mubr.bf16.gmra.mrb[0].mxu0 %v1059
        %v1690 = vpop.f32.mrb[0].mxu0
        %v1691 = vadd.f32 0.0, %v1690
        %v1692 = vpop.f32.mrb[0].mxu0
        %v1693 = vadd.f32 0.0, %v1692
        %v1694 = vpop.f32.mrb[0].mxu0
        %v1695 = vadd.f32 0.0, %v1694
        %v1696 = vpop.f32.mrb[0].mxu0
        %v1697 = vadd.f32 0.0, %v1696
        %1698 = vmatprep.mubr.bf16.mxu0 0
        %1699 = vmatmul.mubr.bf16.gmra.mrb[0].mxu0 %v1060
        %v1700 = vpop.f32.mrb[0].mxu0
        %v1701 = vadd.f32 0.0, %v1700
        %v1702 = vpop.f32.mrb[0].mxu0
        %v1703 = vadd.f32 0.0, %v1702
        %v1704 = vpop.f32.mrb[0].mxu0
        %v1705 = vadd.f32 0.0, %v1704
        %v1706 = vpop.f32.mrb[0].mxu0
        %v1707 = vadd.f32 0.0, %v1706
        %1708 = vmatprep.mubr.bf16.mxu0 0
        %1709 = vmatmul.mubr.bf16.gmra.mrb[0].mxu0 %v1061
        %v1710 = vpop.f32.mrb[0].mxu0
        %v1711 = vadd.f32 0.0, %v1710
        %v1712 = vpop.f32.mrb[0].mxu0
        %v1713 = vadd.f32 0.0, %v1712
        %v1714 = vpop.f32.mrb[0].mxu0
        %v1715 = vadd.f32 0.0, %v1714
        %v1716 = vpop.f32.mrb[0].mxu0
        %v1717 = vadd.f32 0.0, %v1716
        %1718 = vmatprep.mubr.bf16.mxu0 0
        %1719 = vmatmul.mubr.bf16.gmra.mrb[0].mxu0 %v1062
        %v1720 = vpop.f32.mrb[0].mxu0
        %v1721 = vadd.f32 0.0, %v1720
        %v1722 = vpop.f32.mrb[0].mxu0
        %v1723 = vadd.f32 0.0, %v1722
        %v1724 = vpop.f32.mrb[0].mxu0
        %v1725 = vadd.f32 0.0, %v1724
        %v1726 = vpop.f32.mrb[0].mxu0
        %v1727 = vadd.f32 0.0, %v1726
        %1728 = vmatprep.mubr.bf16.mxu0 0
        %1729 = vmatmul.mubr.bf16.gmra.mrb[0].mxu0 %v1063
        %v1730 = vpop.f32.mrb[0].mxu0
        %v1731 = vadd.f32 0.0, %v1730
        %v1732 = vpop.f32.mrb[0].mxu0
        %v1733 = vadd.f32 0.0, %v1732
        %v1734 = vpop.f32.mrb[0].mxu0
        %v1735 = vadd.f32 0.0, %v1734
        %v1736 = vpop.f32.mrb[0].mxu0
        %v1737 = vadd.f32 0.0, %v1736
        %1738 = vmatprep.mubr.bf16.mxu0 0
        %1739 = vmatmul.mubr.bf16.gmra.mrb[0].mxu0 %v1064
        %v1740 = vpop.f32.mrb[0].mxu0
        %v1741 = vadd.f32 0.0, %v1740
        %v1742 = vpop.f32.mrb[0].mxu0
        %v1743 = vadd.f32 0.0, %v1742
        %v1744 = vpop.f32.mrb[0].mxu0
        %v1745 = vadd.f32 0.0, %v1744
        %v1746 = vpop.f32.mrb[0].mxu0
        %v1747 = vadd.f32 0.0, %v1746
        %1748 = vmatprep.mubr.bf16.mxu0 0
        %1749 = vmatmul.mubr.bf16.gmra.mrb[0].mxu0 %v1065
        %v1750 = vpop.f32.mrb[0].mxu0
        %v1751 = vadd.f32 0.0, %v1750
        %v1752 = vpop.f32.mrb[0].mxu0
        %v1753 = vadd.f32 0.0, %v1752
        %v1754 = vpop.f32.mrb[0].mxu0
        %v1755 = vadd.f32 0.0, %v1754
        %v1756 = vpop.f32.mrb[0].mxu0
        %v1757 = vadd.f32 0.0, %v1756
        %1758 = vmatprep.mubr.bf16.mxu0 0
        %1759 = vmatmul.mubr.bf16.gmra.mrb[0].mxu0 %v1066
        %v1760 = vpop.f32.mrb[0].mxu0
        %v1761 = vadd.f32 0.0, %v1760
        %v1762 = vpop.f32.mrb[0].mxu0
        %v1763 = vadd.f32 0.0, %v1762
        %v1764 = vpop.f32.mrb[0].mxu0
        %v1765 = vadd.f32 0.0, %v1764
        %v1766 = vpop.f32.mrb[0].mxu0
        %v1767 = vadd.f32 0.0, %v1766
        %1768 = vmatprep.mubr.bf16.mxu0 0
        %1769 = vmatmul.mubr.bf16.gmra.mrb[0].mxu0 %v1067
        %v1770 = vpop.f32.mrb[0].mxu0
        %v1771 = vadd.f32 0.0, %v1770
        %v1772 = vpop.f32.mrb[0].mxu0
        %v1773 = vadd.f32 0.0, %v1772
        %v1774 = vpop.f32.mrb[0].mxu0
        %v1775 = vadd.f32 0.0, %v1774
        %v1776 = vpop.f32.mrb[0].mxu0
        %v1777 = vadd.f32 0.0, %v1776
        %1778 = vmatprep.mubr.bf16.mxu0 0
        %1779 = vmatmul.mubr.bf16.gmra.mrb[0].mxu0 %v1068
        %v1780 = vpop.f32.mrb[0].mxu0
        %v1781 = vadd.f32 0.0, %v1780
        %v1782 = vpop.f32.mrb[0].mxu0
        %v1783 = vadd.f32 0.0, %v1782
        %v1784 = vpop.f32.mrb[0].mxu0
        %v1785 = vadd.f32 0.0, %v1784
        %v1786 = vpop.f32.mrb[0].mxu0
        %v1787 = vadd.f32 0.0, %v1786
        %1788 = vmatprep.mubr.bf16.mxu0 0
        %1789 = vmatmul.mubr.bf16.gmra.mrb[0].mxu0 %v1069
        %v1790 = vpop.f32.mrb[0].mxu0
        %v1791 = vadd.f32 0.0, %v1790
        %v1792 = vpop.f32.mrb[0].mxu0
        %v1793 = vadd.f32 0.0, %v1792
        %v1794 = vpop.f32.mrb[0].mxu0
        %v1795 = vadd.f32 0.0, %v1794
        %v1796 = vpop.f32.mrb[0].mxu0
        %v1797 = vadd.f32 0.0, %v1796
        %1798 = vmatprep.mubr.bf16.mxu0 0
        %1799 = vmatmul.mubr.bf16.gmra.mrb[0].mxu0 %v1070
        %v1800 = vpop.f32.mrb[0].mxu0
        %v1801 = vadd.f32 0.0, %v1800
        %v1802 = vpop.f32.mrb[0].mxu0
        %v1803 = vadd.f32 0.0, %v1802
        %v1804 = vpop.f32.mrb[0].mxu0
        %v1805 = vadd.f32 0.0, %v1804
        %v1806 = vpop.f32.mrb[0].mxu0
        %v1807 = vadd.f32 0.0, %v1806
        %1808 = vmatprep.mubr.bf16.mxu0 0
        %1809 = vmatmul.mubr.bf16.gmra.mrb[0].mxu0 %v1071
        %v1810 = vpop.f32.mrb[0].mxu0
        %v1811 = vadd.f32 0.0, %v1810
        %v1812 = vpop.f32.mrb[0].mxu0
        %v1813 = vadd.f32 0.0, %v1812
        %v1814 = vpop.f32.mrb[0].mxu0
        %v1815 = vadd.f32 0.0, %v1814
        %v1816 = vpop.f32.mrb[0].mxu0
        %v1817 = vadd.f32 0.0, %v1816
        %1818 = vmatprep.mubr.bf16.mxu0 0
        %1819 = vmatmul.mubr.bf16.gmra.mrb[0].mxu0 %v1072
        %v1820 = vpop.f32.mrb[0].mxu0
        %v1821 = vadd.f32 0.0, %v1820
        %v1822 = vpop.f32.mrb[0].mxu0
        %v1823 = vadd.f32 0.0, %v1822
        %v1824 = vpop.f32.mrb[0].mxu0
        %v1825 = vadd.f32 0.0, %v1824
        %v1826 = vpop.f32.mrb[0].mxu0
        %v1827 = vadd.f32 0.0, %v1826
        %1828 = vmatprep.mubr.bf16.mxu0 0
        %1829 = vmatmul.mubr.bf16.gmra.mrb[0].mxu0 %v1073
        %v1830 = vpop.f32.mrb[0].mxu0
        %v1831 = vadd.f32 0.0, %v1830
        %v1832 = vpop.f32.mrb[0].mxu0
        %v1833 = vadd.f32 0.0, %v1832
        %v1834 = vpop.f32.mrb[0].mxu0
        %v1835 = vadd.f32 0.0, %v1834
        %v1836 = vpop.f32.mrb[0].mxu0
        %v1837 = vadd.f32 0.0, %v1836
        %1838 = vmatprep.mubr.bf16.mxu0 0
        %1839 = vmatmul.mubr.bf16.gmra.mrb[0].mxu0 %v1074
        %v1840 = vpop.f32.mrb[0].mxu0
        %v1841 = vadd.f32 0.0, %v1840
        %v1842 = vpop.f32.mrb[0].mxu0
        %v1843 = vadd.f32 0.0, %v1842
        %v1844 = vpop.f32.mrb[0].mxu0
        %v1845 = vadd.f32 0.0, %v1844
        %v1846 = vpop.f32.mrb[0].mxu0
        %v1847 = vadd.f32 0.0, %v1846
        %1848 = vmatprep.mubr.bf16.mxu0 0
        %1849 = vmatmul.mubr.bf16.gmra.mrb[0].mxu0 %v1075
        %v1850 = vpop.f32.mrb[0].mxu0
        %v1851 = vadd.f32 0.0, %v1850
        %v1852 = vpop.f32.mrb[0].mxu0
        %v1853 = vadd.f32 0.0, %v1852
        %v1854 = vpop.f32.mrb[0].mxu0
        %v1855 = vadd.f32 0.0, %v1854
        %v1856 = vpop.f32.mrb[0].mxu0
        %v1857 = vadd.f32 0.0, %v1856
        %1858 = vmatprep.mubr.bf16.mxu0 0
        %1859 = vmatmul.mubr.bf16.gmra.mrb[0].mxu0 %v1076
        %v1860 = vpop.f32.mrb[0].mxu0
        %v1861 = vadd.f32 0.0, %v1860
        %v1862 = vpop.f32.mrb[0].mxu0
        %v1863 = vadd.f32 0.0, %v1862
        %v1864 = vpop.f32.mrb[0].mxu0
        %v1865 = vadd.f32 0.0, %v1864
        %v1866 = vpop.f32.mrb[0].mxu0
        %v1867 = vadd.f32 0.0, %v1866
        %1868 = vmatprep.mubr.bf16.mxu0 0
        %1869 = vmatmul.mubr.bf16.gmra.mrb[0].mxu0 %v1077
        %v1870 = vpop.f32.mrb[0].mxu0
        %v1871 = vadd.f32 0.0, %v1870
        %v1872 = vpop.f32.mrb[0].mxu0
        %v1873 = vadd.f32 0.0, %v1872
        %v1874 = vpop.f32.mrb[0].mxu0
        %v1875 = vadd.f32 0.0, %v1874
        %v1876 = vpop.f32.mrb[0].mxu0
        %v1877 = vadd.f32 0.0, %v1876
        %1878 = vmatprep.mubr.bf16.mxu0 0
        %1879 = vmatmul.mubr.bf16.gmra.mrb[0].mxu0 %v1078
        %v1880 = vpop.f32.mrb[0].mxu0
        %v1881 = vadd.f32 0.0, %v1880
        %v1882 = vpop.f32.mrb[0].mxu0
        %v1883 = vadd.f32 0.0, %v1882
        %v1884 = vpop.f32.mrb[0].mxu0
        %v1885 = vadd.f32 0.0, %v1884
        %v1886 = vpop.f32.mrb[0].mxu0
        %v1887 = vadd.f32 0.0, %v1886
        %1888 = vmatprep.mubr.bf16.mxu0 0
        %1889 = vmatmul.mubr.bf16.gmra.mrb[0].mxu0 %v1079
        %v1890 = vpop.f32.mrb[0].mxu0
        %v1891 = vadd.f32 0.0, %v1890
        %v1892 = vpop.f32.mrb[0].mxu0
        %v1893 = vadd.f32 0.0, %v1892
        %v1894 = vpop.f32.mrb[0].mxu0
        %v1895 = vadd.f32 0.0, %v1894
        %v1896 = vpop.f32.mrb[0].mxu0
        %v1897 = vadd.f32 0.0, %v1896
        %1898 = vmatprep.mubr.bf16.mxu0 0
        %1899 = vmatmul.mubr.bf16.gmra.mrb[0].mxu0 %v1080
        %v1900 = vpop.f32.mrb[0].mxu0
        %v1901 = vadd.f32 0.0, %v1900
        %v1902 = vpop.f32.mrb[0].mxu0
        %v1903 = vadd.f32 0.0, %v1902
        %v1904 = vpop.f32.mrb[0].mxu0
        %v1905 = vadd.f32 0.0, %v1904
        %v1906 = vpop.f32.mrb[0].mxu0
        %v1907 = vadd.f32 0.0, %v1906
        %1908 = vmatprep.mubr.bf16.mxu0 0
        %1909 = vmatmul.mubr.bf16.gmra.mrb[0].mxu0 %v1081
        %v1910 = vpop.f32.mrb[0].mxu0
        %v1911 = vadd.f32 0.0, %v1910
        %v1912 = vpop.f32.mrb[0].mxu0
        %v1913 = vadd.f32 0.0, %v1912
        %v1914 = vpop.f32.mrb[0].mxu0
        %v1915 = vadd.f32 0.0, %v1914
        %v1916 = vpop.f32.mrb[0].mxu0
        %v1917 = vadd.f32 0.0, %v1916
        %1918 = vmatprep.mubr.bf16.mxu0 0
        %1919 = vmatmul.mubr.bf16.gmra.mrb[0].mxu0 %v1082
        %v1920 = vpop.f32.mrb[0].mxu0
        %v1921 = vadd.f32 0.0, %v1920
        %v1922 = vpop.f32.mrb[0].mxu0
        %v1923 = vadd.f32 0.0, %v1922
        %v1924 = vpop.f32.mrb[0].mxu0
        %v1925 = vadd.f32 0.0, %v1924
        %v1926 = vpop.f32.mrb[0].mxu0
        %v1927 = vadd.f32 0.0, %v1926
        %1928 = vmatprep.mubr.bf16.mxu0 0
        %1929 = vmatmul.mubr.bf16.gmra.mrb[0].mxu0 %v1083
        %v1930 = vpop.f32.mrb[0].mxu0
        %v1931 = vadd.f32 0.0, %v1930
        %v1932 = vpop.f32.mrb[0].mxu0
        %v1933 = vadd.f32 0.0, %v1932
        %v1934 = vpop.f32.mrb[0].mxu0
        %v1935 = vadd.f32 0.0, %v1934
        %v1936 = vpop.f32.mrb[0].mxu0
        %v1937 = vadd.f32 0.0, %v1936
        %1938 = vmatprep.mubr.bf16.mxu0 0
        %1939 = vmatmul.mubr.bf16.gmra.mrb[0].mxu0 %v1084
        %v1940 = vpop.f32.mrb[0].mxu0
        %v1941 = vadd.f32 0.0, %v1940
        %v1942 = vpop.f32.mrb[0].mxu0
        %v1943 = vadd.f32 0.0, %v1942
        %v1944 = vpop.f32.mrb[0].mxu0
        %v1945 = vadd.f32 0.0, %v1944
        %v1946 = vpop.f32.mrb[0].mxu0
        %v1947 = vadd.f32 0.0, %v1946
        %1948 = vmatprep.mubr.bf16.mxu0 0
        %1949 = vmatmul.mubr.bf16.gmra.mrb[0].mxu0 %v1085
        %v1950 = vpop.f32.mrb[0].mxu0
        %v1951 = vadd.f32 0.0, %v1950
        %v1952 = vpop.f32.mrb[0].mxu0
        %v1953 = vadd.f32 0.0, %v1952
        %v1954 = vpop.f32.mrb[0].mxu0
        %v1955 = vadd.f32 0.0, %v1954
        %v1956 = vpop.f32.mrb[0].mxu0
        %v1957 = vadd.f32 0.0, %v1956
        %1958 = vmatprep.mubr.bf16.mxu0 0
        %1959 = vmatmul.mubr.bf16.gmra.mrb[0].mxu0 %v1086
        %v1960 = vpop.f32.mrb[0].mxu0
        %v1961 = vadd.f32 0.0, %v1960
        %v1962 = vpop.f32.mrb[0].mxu0
        %v1963 = vadd.f32 0.0, %v1962
        %v1964 = vpop.f32.mrb[0].mxu0
        %v1965 = vadd.f32 0.0, %v1964
        %v1966 = vpop.f32.mrb[0].mxu0
        %v1967 = vadd.f32 0.0, %v1966
        %1968 = vmatprep.mubr.bf16.mxu0 0
        %1969 = vmatmul.mubr.bf16.gmra.mrb[0].mxu0 %v1087
        %v1970 = vpop.f32.mrb[0].mxu0
        %v1971 = vadd.f32 0.0, %v1970
        %v1972 = vpop.f32.mrb[0].mxu0
        %v1973 = vadd.f32 0.0, %v1972
        %v1974 = vpop.f32.mrb[0].mxu0
        %v1975 = vadd.f32 0.0, %v1974
        %v1976 = vpop.f32.mrb[0].mxu0
        %v1977 = vadd.f32 0.0, %v1976
        %1978 = vmatprep.mubr.bf16.mxu0 0
        %1979 = vmatmul.mubr.bf16.gmra.mrb[0].mxu0 %v1088
        %v1980 = vpop.f32.mrb[0].mxu0
        %v1981 = vadd.f32 0.0, %v1980
        %v1982 = vpop.f32.mrb[0].mxu0
        %v1983 = vadd.f32 0.0, %v1982
        %v1984 = vpop.f32.mrb[0].mxu0
        %v1985 = vadd.f32 0.0, %v1984
        %v1986 = vpop.f32.mrb[0].mxu0
        %v1987 = vadd.f32 0.0, %v1986
        %1988 = vmatprep.mubr.bf16.mxu0 0
        %1989 = vmatmul.mubr.bf16.gmra.mrb[0].mxu0 %v1089
        %v1990 = vpop.f32.mrb[0].mxu0
        %v1991 = vadd.f32 0.0, %v1990
        %v1992 = vpop.f32.mrb[0].mxu0
        %v1993 = vadd.f32 0.0, %v1992
        %v1994 = vpop.f32.mrb[0].mxu0
        %v1995 = vadd.f32 0.0, %v1994
        %v1996 = vpop.f32.mrb[0].mxu0
        %v1997 = vadd.f32 0.0, %v1996
        %1998 = vmatprep.mubr.bf16.mxu0 0
        %1999 = vmatmul.mubr.bf16.gmra.mrb[0].mxu0 %v1090
        %v2000 = vpop.f32.mrb[0].mxu0
        %v2001 = vadd.f32 0.0, %v2000
        %v2002 = vpop.f32.mrb[0].mxu0
        %v2003 = vadd.f32 0.0, %v2002
        %v2004 = vpop.f32.mrb[0].mxu0
        %v2005 = vadd.f32 0.0, %v2004
        %v2006 = vpop.f32.mrb[0].mxu0
        %v2007 = vadd.f32 0.0, %v2006
        %2008 = vmatprep.mubr.bf16.mxu0 0
        %2009 = vmatmul.mubr.bf16.gmra.mrb[0].mxu0 %v1091
        %v2010 = vpop.f32.mrb[0].mxu0
        %v2011 = vadd.f32 0.0, %v2010
        %v2012 = vpop.f32.mrb[0].mxu0
        %v2013 = vadd.f32 0.0, %v2012
        %v2014 = vpop.f32.mrb[0].mxu0
        %v2015 = vadd.f32 0.0, %v2014
        %v2016 = vpop.f32.mrb[0].mxu0
        %v2017 = vadd.f32 0.0, %v2016
        %2018 = vmatprep.mubr.bf16.mxu0 0
        %2019 = vmatmul.mubr.bf16.gmra.mrb[0].mxu0 %v1092
        %v2020 = vpop.f32.mrb[0].mxu0
        %v2021 = vadd.f32 0.0, %v2020
        %v2022 = vpop.f32.mrb[0].mxu0
        %v2023 = vadd.f32 0.0, %v2022
        %v2024 = vpop.f32.mrb[0].mxu0
        %v2025 = vadd.f32 0.0, %v2024
        %v2026 = vpop.f32.mrb[0].mxu0
        %v2027 = vadd.f32 0.0, %v2026
        %2028 = vmatprep.mubr.bf16.mxu0 0
        %2029 = vmatmul.mubr.bf16.gmra.mrb[0].mxu0 %v1093
        %v2030 = vpop.f32.mrb[0].mxu0
        %v2031 = vadd.f32 0.0, %v2030
        %v2032 = vpop.f32.mrb[0].mxu0
        %v2033 = vadd.f32 0.0, %v2032
        %v2034 = vpop.f32.mrb[0].mxu0
        %v2035 = vadd.f32 0.0, %v2034
        %v2036 = vpop.f32.mrb[0].mxu0
        %v2037 = vadd.f32 0.0, %v2036
        %2038 = vmatprep.mubr.bf16.mxu0 0
        %2039 = vmatmul.mubr.bf16.gmra.mrb[0].mxu0 %v1094
        %v2040 = vpop.f32.mrb[0].mxu0
        %v2041 = vadd.f32 0.0, %v2040
        %v2042 = vpop.f32.mrb[0].mxu0
        %v2043 = vadd.f32 0.0, %v2042
        %v2044 = vpop.f32.mrb[0].mxu0
        %v2045 = vadd.f32 0.0, %v2044
        %v2046 = vpop.f32.mrb[0].mxu0
        %v2047 = vadd.f32 0.0, %v2046
        %2048 = vmatprep.mubr.bf16.mxu0 0
        %2049 = vmatmul.mubr.bf16.gmra.mrb[0].mxu0 %v1095
        %v2050 = vpop.f32.mrb[0].mxu0
        %v2051 = vadd.f32 0.0, %v2050
        %v2052 = vpop.f32.mrb[0].mxu0
        %v2053 = vadd.f32 0.0, %v2052
        %v2054 = vpop.f32.mrb[0].mxu0
        %v2055 = vadd.f32 0.0, %v2054
        %v2056 = vpop.f32.mrb[0].mxu0
        %v2057 = vadd.f32 0.0, %v2056
        %2058 = vmatprep.mubr.bf16.mxu0 0
        %2059 = vmatmul.mubr.bf16.gmra.mrb[0].mxu0 %v1096
        %v2060 = vpop.f32.mrb[0].mxu0
        %v2061 = vadd.f32 0.0, %v2060
        %v2062 = vpop.f32.mrb[0].mxu0
        %v2063 = vadd.f32 0.0, %v2062
        %v2064 = vpop.f32.mrb[0].mxu0
        %v2065 = vadd.f32 0.0, %v2064
        %v2066 = vpop.f32.mrb[0].mxu0
        %v2067 = vadd.f32 0.0, %v2066
        %2068 = vmatprep.mubr.bf16.mxu0 0
        %2069 = vmatmul.mubr.bf16.gmra.mrb[0].mxu0 %v1097
        %v2070 = vpop.f32.mrb[0].mxu0
        %v2071 = vadd.f32 0.0, %v2070
        %v2072 = vpop.f32.mrb[0].mxu0
        %v2073 = vadd.f32 0.0, %v2072
        %v2074 = vpop.f32.mrb[0].mxu0
        %v2075 = vadd.f32 0.0, %v2074
        %v2076 = vpop.f32.mrb[0].mxu0
        %v2077 = vadd.f32 0.0, %v2076
        %2078 = vmatprep.mubr.bf16.mxu0 0
        %2079 = vmatmul.mubr.bf16.gmra.mrb[0].mxu0 %v1098
        %v2080 = vpop.f32.mrb[0].mxu0
        %v2081 = vadd.f32 0.0, %v2080
        %v2082 = vpop.f32.mrb[0].mxu0
        %v2083 = vadd.f32 0.0, %v2082
        %v2084 = vpop.f32.mrb[0].mxu0
        %v2085 = vadd.f32 0.0, %v2084
        %v2086 = vpop.f32.mrb[0].mxu0
        %v2087 = vadd.f32 0.0, %v2086
        %2088 = vmatprep.mubr.bf16.mxu0 0
        %2089 = vmatmul.mubr.bf16.gmra.mrb[0].mxu0 %v1099
        %v2090 = vpop.f32.mrb[0].mxu0
        %v2091 = vadd.f32 0.0, %v2090
        %v2092 = vpop.f32.mrb[0].mxu0
        %v2093 = vadd.f32 0.0, %v2092
        %v2094 = vpop.f32.mrb[0].mxu0
        %v2095 = vadd.f32 0.0, %v2094
        %v2096 = vpop.f32.mrb[0].mxu0
        %v2097 = vadd.f32 0.0, %v2096
        %2098 = vmatprep.mubr.bf16.mxu0 0
        %2099 = vmatmul.mubr.bf16.gmra.mrb[0].mxu0 %v1100
        %v2100 = vpop.f32.mrb[0].mxu0
        %v2101 = vadd.f32 0.0, %v2100
        %v2102 = vpop.f32.mrb[0].mxu0
        %v2103 = vadd.f32 0.0, %v2102
        %v2104 = vpop.f32.mrb[0].mxu0
        %v2105 = vadd.f32 0.0, %v2104
        %v2106 = vpop.f32.mrb[0].mxu0
        %v2107 = vadd.f32 0.0, %v2106
        %2108 = vmatprep.mubr.bf16.mxu0 0
        %2109 = vmatmul.mubr.bf16.gmra.mrb[0].mxu0 %v1101
        %v2110 = vpop.f32.mrb[0].mxu0
        %v2111 = vadd.f32 0.0, %v2110
        %v2112 = vpop.f32.mrb[0].mxu0
        %v2113 = vadd.f32 0.0, %v2112
        %v2114 = vpop.f32.mrb[0].mxu0
        %v2115 = vadd.f32 0.0, %v2114
        %v2116 = vpop.f32.mrb[0].mxu0
        %v2117 = vadd.f32 0.0, %v2116
        %2118 = vmatprep.mubr.bf16.mxu0 0
        %2119 = vmatmul.mubr.bf16.gmra.mrb[0].mxu0 %v1102
        %v2120 = vpop.f32.mrb[0].mxu0
        %v2121 = vadd.f32 0.0, %v2120
        %v2122 = vpop.f32.mrb[0].mxu0
        %v2123 = vadd.f32 0.0, %v2122
        %v2124 = vpop.f32.mrb[0].mxu0
        %v2125 = vadd.f32 0.0, %v2124
        %v2126 = vpop.f32.mrb[0].mxu0
        %v2127 = vadd.f32 0.0, %v2126
        %2128 = vmatprep.mubr.bf16.mxu0 0
        %2129 = vmatmul.mubr.bf16.gmra.mrb[0].mxu0 %v1103
        %v2130 = vpop.f32.mrb[0].mxu0
        %v2131 = vadd.f32 0.0, %v2130
        %v2132 = vpop.f32.mrb[0].mxu0
        %v2133 = vadd.f32 0.0, %v2132
        %v2134 = vpop.f32.mrb[0].mxu0
        %v2135 = vadd.f32 0.0, %v2134
        %v2136 = vpop.f32.mrb[0].mxu0
        %v2137 = vadd.f32 0.0, %v2136
        %2138 = vmatprep.mubr.bf16.mxu0 0
        %2139 = vmatmul.mubr.bf16.gmra.mrb[0].mxu0 %v1104
        %v2140 = vpop.f32.mrb[0].mxu0
        %v2141 = vadd.f32 0.0, %v2140
        %v2142 = vpop.f32.mrb[0].mxu0
        %v2143 = vadd.f32 0.0, %v2142
        %v2144 = vpop.f32.mrb[0].mxu0
        %v2145 = vadd.f32 0.0, %v2144
        %v2146 = vpop.f32.mrb[0].mxu0
        %v2147 = vadd.f32 0.0, %v2146
        %2148 = vmatprep.mubr.bf16.mxu0 0
        %2149 = vmatmul.mubr.bf16.gmra.mrb[0].mxu0 %v1105
        %v2150 = vpop.f32.mrb[0].mxu0
        %v2151 = vadd.f32 0.0, %v2150
        %v2152 = vpop.f32.mrb[0].mxu0
        %v2153 = vadd.f32 0.0, %v2152
        %v2154 = vpop.f32.mrb[0].mxu0
        %v2155 = vadd.f32 0.0, %v2154
        %v2156 = vpop.f32.mrb[0].mxu0
        %v2157 = vadd.f32 0.0, %v2156
        %2158 = vmatprep.mubr.bf16.mxu0 0
        %2159 = vmatmul.mubr.bf16.gmra.mrb[0].mxu0 %v1106
        %v2160 = vpop.f32.mrb[0].mxu0
        %v2161 = vadd.f32 0.0, %v2160
        %v2162 = vpop.f32.mrb[0].mxu0
        %v2163 = vadd.f32 0.0, %v2162
        %v2164 = vpop.f32.mrb[0].mxu0
        %v2165 = vadd.f32 0.0, %v2164
        %v2166 = vpop.f32.mrb[0].mxu0
        %v2167 = vadd.f32 0.0, %v2166
        %2168 = vmatprep.mubr.bf16.mxu0 0
        %2169 = vmatmul.mubr.bf16.gmra.mrb[0].mxu0 %v1107
        %v2170 = vpop.f32.mrb[0].mxu0
        %v2171 = vadd.f32 0.0, %v2170
        %v2172 = vpop.f32.mrb[0].mxu0
        %v2173 = vadd.f32 0.0, %v2172
        %v2174 = vpop.f32.mrb[0].mxu0
        %v2175 = vadd.f32 0.0, %v2174
        %v2176 = vpop.f32.mrb[0].mxu0
        %v2177 = vadd.f32 0.0, %v2176
        %2178 = vmatprep.mubr.bf16.mxu0 0
        %2179 = vmatmul.mubr.bf16.gmra.mrb[0].mxu0 %v1108
        %v2180 = vpop.f32.mrb[0].mxu0
        %v2181 = vadd.f32 0.0, %v2180
        %v2182 = vpop.f32.mrb[0].mxu0
        %v2183 = vadd.f32 0.0, %v2182
        %v2184 = vpop.f32.mrb[0].mxu0
        %v2185 = vadd.f32 0.0, %v2184
        %v2186 = vpop.f32.mrb[0].mxu0
        %v2187 = vadd.f32 0.0, %v2186
        %2188 = vmatprep.mubr.bf16.mxu0 0
        %2189 = vmatmul.mubr.bf16.gmra.mrb[0].mxu0 %v1109
        %v2190 = vpop.f32.mrb[0].mxu0
        %v2191 = vadd.f32 0.0, %v2190
        %v2192 = vpop.f32.mrb[0].mxu0
        %v2193 = vadd.f32 0.0, %v2192
        %v2194 = vpop.f32.mrb[0].mxu0
        %v2195 = vadd.f32 0.0, %v2194
        %v2196 = vpop.f32.mrb[0].mxu0
        %v2197 = vadd.f32 0.0, %v2196
        %2198 = vmatprep.mubr.bf16.mxu0 0
        %2199 = vmatmul.mubr.bf16.gmra.mrb[0].mxu0 %v1110
        %v2200 = vpop.f32.mrb[0].mxu0
        %v2201 = vadd.f32 0.0, %v2200
        %v2202 = vpop.f32.mrb[0].mxu0
        %v2203 = vadd.f32 0.0, %v2202
        %v2204 = vpop.f32.mrb[0].mxu0
        %v2205 = vadd.f32 0.0, %v2204
        %v2206 = vpop.f32.mrb[0].mxu0
        %v2207 = vadd.f32 0.0, %v2206
        %2208 = vmatprep.mubr.bf16.mxu0 0
        %2209 = vmatmul.mubr.bf16.gmra.mrb[0].mxu0 %v1111
        %v2210 = vpop.f32.mrb[0].mxu0
        %v2211 = vadd.f32 0.0, %v2210
        %v2212 = vpop.f32.mrb[0].mxu0
        %v2213 = vadd.f32 0.0, %v2212
        %v2214 = vpop.f32.mrb[0].mxu0
        %v2215 = vadd.f32 0.0, %v2214
        %v2216 = vpop.f32.mrb[0].mxu0
        %v2217 = vadd.f32 0.0, %v2216
        %2218 = vmatprep.mubr.bf16.mxu0 0
        %2219 = vmatmul.mubr.bf16.gmra.mrb[0].mxu0 %v1112
        %v2220 = vpop.f32.mrb[0].mxu0
        %v2221 = vadd.f32 0.0, %v2220
        %v2222 = vpop.f32.mrb[0].mxu0
        %v2223 = vadd.f32 0.0, %v2222
        %v2224 = vpop.f32.mrb[0].mxu0
        %v2225 = vadd.f32 0.0, %v2224
        %v2226 = vpop.f32.mrb[0].mxu0
        %v2227 = vadd.f32 0.0, %v2226
        %2228 = vmatprep.mubr.bf16.mxu0 0
        %2229 = vmatmul.mubr.bf16.gmra.mrb[0].mxu0 %v1113
        %v2230 = vpop.f32.mrb[0].mxu0
        %v2231 = vadd.f32 0.0, %v2230
        %v2232 = vpop.f32.mrb[0].mxu0
        %v2233 = vadd.f32 0.0, %v2232
        %v2234 = vpop.f32.mrb[0].mxu0
        %v2235 = vadd.f32 0.0, %v2234
        %v2236 = vpop.f32.mrb[0].mxu0
        %v2237 = vadd.f32 0.0, %v2236
        %2238 = vmatprep.mubr.bf16.mxu0 0
        %2239 = vmatmul.mubr.bf16.gmra.mrb[0].mxu0 %v1114
        %v2240 = vpop.f32.mrb[0].mxu0
        %v2241 = vadd.f32 0.0, %v2240
        %v2242 = vpop.f32.mrb[0].mxu0
        %v2243 = vadd.f32 0.0, %v2242
        %v2244 = vpop.f32.mrb[0].mxu0
        %v2245 = vadd.f32 0.0, %v2244
        %v2246 = vpop.f32.mrb[0].mxu0
        %v2247 = vadd.f32 0.0, %v2246
        %2248 = vmatprep.mubr.bf16.mxu0 0
        %2249 = vmatmul.mubr.bf16.gmra.mrb[0].mxu0 %v1115
        %v2250 = vpop.f32.mrb[0].mxu0
        %v2251 = vadd.f32 0.0, %v2250
        %v2252 = vpop.f32.mrb[0].mxu0
        %v2253 = vadd.f32 0.0, %v2252
        %v2254 = vpop.f32.mrb[0].mxu0
        %v2255 = vadd.f32 0.0, %v2254
        %v2256 = vpop.f32.mrb[0].mxu0
        %v2257 = vadd.f32 0.0, %v2256
        %2258 = vmatprep.mubr.bf16.mxu0 0
        %2259 = vmatmul.mubr.bf16.gmra.mrb[0].mxu0 %v1116
        %v2260 = vpop.f32.mrb[0].mxu0
        %v2261 = vadd.f32 0.0, %v2260
        %v2262 = vpop.f32.mrb[0].mxu0
        %v2263 = vadd.f32 0.0, %v2262
        %v2264 = vpop.f32.mrb[0].mxu0
        %v2265 = vadd.f32 0.0, %v2264
        %v2266 = vpop.f32.mrb[0].mxu0
        %v2267 = vadd.f32 0.0, %v2266
        %2268 = vmatprep.mubr.bf16.mxu0 0
        %2269 = vmatmul.mubr.bf16.gmra.mrb[0].mxu0 %v1117
        %v2270 = vpop.f32.mrb[0].mxu0
        %v2271 = vadd.f32 0.0, %v2270
        %v2272 = vpop.f32.mrb[0].mxu0
        %v2273 = vadd.f32 0.0, %v2272
        %v2274 = vpop.f32.mrb[0].mxu0
        %v2275 = vadd.f32 0.0, %v2274
        %v2276 = vpop.f32.mrb[0].mxu0
        %v2277 = vadd.f32 0.0, %v2276
        %2278 = vmatprep.mubr.bf16.mxu0 0
        %2279 = vmatmul.mubr.bf16.gmra.mrb[0].mxu0 %v1118
        %v2280 = vpop.f32.mrb[0].mxu0
        %v2281 = vadd.f32 0.0, %v2280
        %v2282 = vpop.f32.mrb[0].mxu0
        %v2283 = vadd.f32 0.0, %v2282
        %v2284 = vpop.f32.mrb[0].mxu0
        %v2285 = vadd.f32 0.0, %v2284
        %v2286 = vpop.f32.mrb[0].mxu0
        %v2287 = vadd.f32 0.0, %v2286
        %2288 = vmatprep.mubr.bf16.mxu0 0
        %2289 = vmatmul.mubr.bf16.gmra.mrb[0].mxu0 %v1119
        %v2290 = vpop.f32.mrb[0].mxu0
        %v2291 = vadd.f32 0.0, %v2290
        %v2292 = vpop.f32.mrb[0].mxu0
        %v2293 = vadd.f32 0.0, %v2292
        %v2294 = vpop.f32.mrb[0].mxu0
        %v2295 = vadd.f32 0.0, %v2294
        %v2296 = vpop.f32.mrb[0].mxu0
        %v2297 = vadd.f32 0.0, %v2296
        %2298 = vmatprep.mubr.bf16.mxu0 0
        %2299 = vmatmul.mubr.bf16.gmra.mrb[0].mxu0 %v1120
        %v2300 = vpop.f32.mrb[0].mxu0
        %v2301 = vadd.f32 0.0, %v2300
        %v2302 = vpop.f32.mrb[0].mxu0
        %v2303 = vadd.f32 0.0, %v2302
        %v2304 = vpop.f32.mrb[0].mxu0
        %v2305 = vadd.f32 0.0, %v2304
        %v2306 = vpop.f32.mrb[0].mxu0
        %v2307 = vadd.f32 0.0, %v2306
        %2308 = vmatprep.mubr.bf16.mxu0 0
        %2309 = vmatmul.mubr.bf16.gmra.mrb[0].mxu0 %v1121
        %v2310 = vpop.f32.mrb[0].mxu0
        %v2311 = vadd.f32 0.0, %v2310
        %v2312 = vpop.f32.mrb[0].mxu0
        %v2313 = vadd.f32 0.0, %v2312
        %v2314 = vpop.f32.mrb[0].mxu0
        %v2315 = vadd.f32 0.0, %v2314
        %v2316 = vpop.f32.mrb[0].mxu0
        %v2317 = vadd.f32 0.0, %v2316
        %2318 = vmatprep.mubr.bf16.mxu0 0
        %2319 = vmatmul.mubr.bf16.gmra.mrb[0].mxu0 %v1122
        %v2320 = vpop.f32.mrb[0].mxu0
        %v2321 = vadd.f32 0.0, %v2320
        %v2322 = vpop.f32.mrb[0].mxu0
        %v2323 = vadd.f32 0.0, %v2322
        %v2324 = vpop.f32.mrb[0].mxu0
        %v2325 = vadd.f32 0.0, %v2324
        %v2326 = vpop.f32.mrb[0].mxu0
        %v2327 = vadd.f32 0.0, %v2326
        %2328 = vmatprep.mubr.bf16.mxu0 0
        %2329 = vmatmul.mubr.bf16.gmra.mrb[0].mxu0 %v1123
        %v2330 = vpop.f32.mrb[0].mxu0
        %v2331 = vadd.f32 0.0, %v2330
        %v2332 = vpop.f32.mrb[0].mxu0
        %v2333 = vadd.f32 0.0, %v2332
        %v2334 = vpop.f32.mrb[0].mxu0
        %v2335 = vadd.f32 0.0, %v2334
        %v2336 = vpop.f32.mrb[0].mxu0
        %v2337 = vadd.f32 0.0, %v2336
        %2338 = vmatprep.mubr.bf16.mxu0 0
        %2339 = vmatmul.mubr.bf16.gmra.mrb[0].mxu0 %v1124
        %v2340 = vpop.f32.mrb[0].mxu0
        %v2341 = vadd.f32 0.0, %v2340
        %v2342 = vpop.f32.mrb[0].mxu0
        %v2343 = vadd.f32 0.0, %v2342
        %v2344 = vpop.f32.mrb[0].mxu0
        %v2345 = vadd.f32 0.0, %v2344
        %v2346 = vpop.f32.mrb[0].mxu0
        %v2347 = vadd.f32 0.0, %v2346
        %2348 = vmatprep.mubr.bf16.mxu0 0
        %2349 = vmatmul.mubr.bf16.gmra.mrb[0].mxu0 %v1125
        %v2350 = vpop.f32.mrb[0].mxu0
        %v2351 = vadd.f32 0.0, %v2350
        %v2352 = vpop.f32.mrb[0].mxu0
        %v2353 = vadd.f32 0.0, %v2352
        %v2354 = vpop.f32.mrb[0].mxu0
        %v2355 = vadd.f32 0.0, %v2354
        %v2356 = vpop.f32.mrb[0].mxu0
        %v2357 = vadd.f32 0.0, %v2356
        %2358 = vmatprep.mubr.bf16.mxu0 0
        %2359 = vmatmul.mubr.bf16.gmra.mrb[0].mxu0 %v1126
        %v2360 = vpop.f32.mrb[0].mxu0
        %v2361 = vadd.f32 0.0, %v2360
        %v2362 = vpop.f32.mrb[0].mxu0
        %v2363 = vadd.f32 0.0, %v2362
        %v2364 = vpop.f32.mrb[0].mxu0
        %v2365 = vadd.f32 0.0, %v2364
        %v2366 = vpop.f32.mrb[0].mxu0
        %v2367 = vadd.f32 0.0, %v2366
        %2368 = vmatprep.mubr.bf16.mxu0 0
        %2369 = vmatmul.mubr.bf16.gmra.mrb[0].mxu0 %v1127
        %v2370 = vpop.f32.mrb[0].mxu0
        %v2371 = vadd.f32 0.0, %v2370
        %v2372 = vpop.f32.mrb[0].mxu0
        %v2373 = vadd.f32 0.0, %v2372
        %v2374 = vpop.f32.mrb[0].mxu0
        %v2375 = vadd.f32 0.0, %v2374
        %v2376 = vpop.f32.mrb[0].mxu0
        %v2377 = vadd.f32 0.0, %v2376
        %2378 = vmatprep.mubr.bf16.mxu0 0
        %2379 = vmatmul.mubr.bf16.gmra.mrb[0].mxu0 %v1128
        %v2380 = vpop.f32.mrb[0].mxu0
        %v2381 = vadd.f32 0.0, %v2380
        %v2382 = vpop.f32.mrb[0].mxu0
        %v2383 = vadd.f32 0.0, %v2382
        %v2384 = vpop.f32.mrb[0].mxu0
        %v2385 = vadd.f32 0.0, %v2384
        %v2386 = vpop.f32.mrb[0].mxu0
        %v2387 = vadd.f32 0.0, %v2386
        %2388 = vmatprep.mubr.bf16.mxu0 0
        %2389 = vmatmul.mubr.bf16.gmra.mrb[0].mxu0 %v1129
        %v2390 = vpop.f32.mrb[0].mxu0
        %v2391 = vadd.f32 0.0, %v2390
        %v2392 = vpop.f32.mrb[0].mxu0
        %v2393 = vadd.f32 0.0, %v2392
        %v2394 = vpop.f32.mrb[0].mxu0
        %v2395 = vadd.f32 0.0, %v2394
        %v2396 = vpop.f32.mrb[0].mxu0
        %v2397 = vadd.f32 0.0, %v2396
        %2398 = vmatprep.mubr.bf16.mxu0 0
        %2399 = vmatmul.mubr.bf16.gmra.mrb[0].mxu0 %v1130
        %v2400 = vpop.f32.mrb[0].mxu0
        %v2401 = vadd.f32 0.0, %v2400
        %v2402 = vpop.f32.mrb[0].mxu0
        %v2403 = vadd.f32 0.0, %v2402
        %v2404 = vpop.f32.mrb[0].mxu0
        %v2405 = vadd.f32 0.0, %v2404
        %v2406 = vpop.f32.mrb[0].mxu0
        %v2407 = vadd.f32 0.0, %v2406
        %2408 = vmatprep.mubr.bf16.mxu0 0
        %2409 = vmatmul.mubr.bf16.gmra.mrb[0].mxu0 %v1131
        %v2410 = vpop.f32.mrb[0].mxu0
        %v2411 = vadd.f32 0.0, %v2410
        %v2412 = vpop.f32.mrb[0].mxu0
        %v2413 = vadd.f32 0.0, %v2412
        %v2414 = vpop.f32.mrb[0].mxu0
        %v2415 = vadd.f32 0.0, %v2414
        %v2416 = vpop.f32.mrb[0].mxu0
        %v2417 = vadd.f32 0.0, %v2416
        %2418 = vmatprep.mubr.bf16.mxu0 0
        %2419 = vmatmul.mubr.bf16.gmra.mrb[0].mxu0 %v1132
        %v2420 = vpop.f32.mrb[0].mxu0
        %v2421 = vadd.f32 0.0, %v2420
        %v2422 = vpop.f32.mrb[0].mxu0
        %v2423 = vadd.f32 0.0, %v2422
        %v2424 = vpop.f32.mrb[0].mxu0
        %v2425 = vadd.f32 0.0, %v2424
        %v2426 = vpop.f32.mrb[0].mxu0
        %v2427 = vadd.f32 0.0, %v2426
        %2428 = vmatprep.mubr.bf16.mxu0 0
        %2429 = vmatmul.mubr.bf16.gmra.mrb[0].mxu0 %v1133
        %v2430 = vpop.f32.mrb[0].mxu0
        %v2431 = vadd.f32 0.0, %v2430
        %v2432 = vpop.f32.mrb[0].mxu0
        %v2433 = vadd.f32 0.0, %v2432
        %v2434 = vpop.f32.mrb[0].mxu0
        %v2435 = vadd.f32 0.0, %v2434
        %v2436 = vpop.f32.mrb[0].mxu0
        %v2437 = vadd.f32 0.0, %v2436
        %2438 = vmatprep.mubr.bf16.mxu0 0
        %2439 = vmatmul.mubr.bf16.gmra.mrb[0].mxu0 %v1134
        %v2440 = vpop.f32.mrb[0].mxu0
        %v2441 = vadd.f32 0.0, %v2440
        %v2442 = vpop.f32.mrb[0].mxu0
        %v2443 = vadd.f32 0.0, %v2442
        %v2444 = vpop.f32.mrb[0].mxu0
        %v2445 = vadd.f32 0.0, %v2444
        %v2446 = vpop.f32.mrb[0].mxu0
        %v2447 = vadd.f32 0.0, %v2446
        %2448 = vmatprep.mubr.bf16.mxu0 0
        %2449 = vmatmul.mubr.bf16.gmra.mrb[0].mxu0 %v1135
        %v2450 = vpop.f32.mrb[0].mxu0
        %v2451 = vadd.f32 0.0, %v2450
        %v2452 = vpop.f32.mrb[0].mxu0
        %v2453 = vadd.f32 0.0, %v2452
        %v2454 = vpop.f32.mrb[0].mxu0
        %v2455 = vadd.f32 0.0, %v2454
        %v2456 = vpop.f32.mrb[0].mxu0
        %v2457 = vadd.f32 0.0, %v2456
        %2458 = vmatprep.mubr.bf16.mxu0 0
        %2459 = vmatmul.mubr.bf16.gmra.mrb[0].mxu0 %v1136
        %v2460 = vpop.f32.mrb[0].mxu0
        %v2461 = vadd.f32 0.0, %v2460
        %v2462 = vpop.f32.mrb[0].mxu0
        %v2463 = vadd.f32 0.0, %v2462
        %v2464 = vpop.f32.mrb[0].mxu0
        %v2465 = vadd.f32 0.0, %v2464
        %v2466 = vpop.f32.mrb[0].mxu0
        %v2467 = vadd.f32 0.0, %v2466
        %2468 = vmatprep.mubr.bf16.mxu0 0
        %2469 = vmatmul.mubr.bf16.gmra.mrb[0].mxu0 %v1137
        %v2470 = vpop.f32.mrb[0].mxu0
        %v2471 = vadd.f32 0.0, %v2470
        %v2472 = vpop.f32.mrb[0].mxu0
        %v2473 = vadd.f32 0.0, %v2472
        %v2474 = vpop.f32.mrb[0].mxu0
        %v2475 = vadd.f32 0.0, %v2474
        %v2476 = vpop.f32.mrb[0].mxu0
        %v2477 = vadd.f32 0.0, %v2476
        %2478 = vmatprep.mubr.bf16.mxu0 0
        %2479 = vmatmul.mubr.bf16.gmra.mrb[0].mxu0 %v1138
        %v2480 = vpop.f32.mrb[0].mxu0
        %v2481 = vadd.f32 0.0, %v2480
        %v2482 = vpop.f32.mrb[0].mxu0
        %v2483 = vadd.f32 0.0, %v2482
        %v2484 = vpop.f32.mrb[0].mxu0
        %v2485 = vadd.f32 0.0, %v2484
        %v2486 = vpop.f32.mrb[0].mxu0
        %v2487 = vadd.f32 0.0, %v2486
        %2488 = vmatprep.mubr.bf16.mxu0 0
        %2489 = vmatmul.mubr.bf16.gmra.mrb[0].mxu0 %v1139
        %v2490 = vpop.f32.mrb[0].mxu0
        %v2491 = vadd.f32 0.0, %v2490
        %v2492 = vpop.f32.mrb[0].mxu0
        %v2493 = vadd.f32 0.0, %v2492
        %v2494 = vpop.f32.mrb[0].mxu0
        %v2495 = vadd.f32 0.0, %v2494
        %v2496 = vpop.f32.mrb[0].mxu0
        %v2497 = vadd.f32 0.0, %v2496
        %2498 = vmatprep.mubr.bf16.mxu0 0
        %2499 = vmatmul.mubr.bf16.gmra.mrb[0].mxu0 %v1140
        %v2500 = vpop.f32.mrb[0].mxu0
        %v2501 = vadd.f32 0.0, %v2500
        %v2502 = vpop.f32.mrb[0].mxu0
        %v2503 = vadd.f32 0.0, %v2502
        %v2504 = vpop.f32.mrb[0].mxu0
        %v2505 = vadd.f32 0.0, %v2504
        %v2506 = vpop.f32.mrb[0].mxu0
        %v2507 = vadd.f32 0.0, %v2506
        %2508 = vmatprep.mubr.bf16.mxu0 0
        %2509 = vmatmul.mubr.bf16.gmra.mrb[0].mxu0 %v1141
        %v2510 = vpop.f32.mrb[0].mxu0
        %v2511 = vadd.f32 0.0, %v2510
        %v2512 = vpop.f32.mrb[0].mxu0
        %v2513 = vadd.f32 0.0, %v2512
        %v2514 = vpop.f32.mrb[0].mxu0
        %v2515 = vadd.f32 0.0, %v2514
        %v2516 = vpop.f32.mrb[0].mxu0
        %v2517 = vadd.f32 0.0, %v2516
        %2518 = vmatprep.mubr.bf16.mxu0 0
        %2519 = vmatmul.mubr.bf16.gmra.mrb[0].mxu0 %v1142
        %v2520 = vpop.f32.mrb[0].mxu0
        %v2521 = vadd.f32 0.0, %v2520
        %v2522 = vpop.f32.mrb[0].mxu0
        %v2523 = vadd.f32 0.0, %v2522
        %v2524 = vpop.f32.mrb[0].mxu0
        %v2525 = vadd.f32 0.0, %v2524
        %v2526 = vpop.f32.mrb[0].mxu0
        %v2527 = vadd.f32 0.0, %v2526
        %2528 = vmatprep.mubr.bf16.mxu0 0
        %2529 = vmatmul.mubr.bf16.gmra.mrb[0].mxu0 %v1143
        %v2530 = vpop.f32.mrb[0].mxu0
        %v2531 = vadd.f32 0.0, %v2530
        %v2532 = vpop.f32.mrb[0].mxu0
        %v2533 = vadd.f32 0.0, %v2532
        %v2534 = vpop.f32.mrb[0].mxu0
        %v2535 = vadd.f32 0.0, %v2534
        %v2536 = vpop.f32.mrb[0].mxu0
        %v2537 = vadd.f32 0.0, %v2536
        %2538 = vmatprep.mubr.bf16.mxu0 0
        %2539 = vmatmul.mubr.bf16.gmra.mrb[0].mxu0 %v1144
        %v2540 = vpop.f32.mrb[0].mxu0
        %v2541 = vadd.f32 0.0, %v2540
        %v2542 = vpop.f32.mrb[0].mxu0
        %v2543 = vadd.f32 0.0, %v2542
        %v2544 = vpop.f32.mrb[0].mxu0
        %v2545 = vadd.f32 0.0, %v2544
        %v2546 = vpop.f32.mrb[0].mxu0
        %v2547 = vadd.f32 0.0, %v2546
        %2548 = vmatprep.mubr.bf16.mxu0 0
        %2549 = vmatmul.mubr.bf16.gmra.mrb[0].mxu0 %v1145
        %v2550 = vpop.f32.mrb[0].mxu0
        %v2551 = vadd.f32 0.0, %v2550
        %v2552 = vpop.f32.mrb[0].mxu0
        %v2553 = vadd.f32 0.0, %v2552
        %v2554 = vpop.f32.mrb[0].mxu0
        %v2555 = vadd.f32 0.0, %v2554
        %v2556 = vpop.f32.mrb[0].mxu0
        %v2557 = vadd.f32 0.0, %v2556
        %2558 = vmatprep.mubr.bf16.mxu0 0
        %2559 = vmatmul.mubr.bf16.gmra.mrb[0].mxu0 %v1146
        %v2560 = vpop.f32.mrb[0].mxu0
        %v2561 = vadd.f32 0.0, %v2560
        %v2562 = vpop.f32.mrb[0].mxu0
        %v2563 = vadd.f32 0.0, %v2562
        %v2564 = vpop.f32.mrb[0].mxu0
        %v2565 = vadd.f32 0.0, %v2564
        %v2566 = vpop.f32.mrb[0].mxu0
        %v2567 = vadd.f32 0.0, %v2566
        %2568 = vmatprep.mubr.bf16.mxu0 0
        %2569 = vmatmul.mubr.bf16.gmra.mrb[0].mxu0 %v1147
        %v2570 = vpop.f32.mrb[0].mxu0
        %v2571 = vadd.f32 0.0, %v2570
        %v2572 = vpop.f32.mrb[0].mxu0
        %v2573 = vadd.f32 0.0, %v2572
        %v2574 = vpop.f32.mrb[0].mxu0
        %v2575 = vadd.f32 0.0, %v2574
        %v2576 = vpop.f32.mrb[0].mxu0
        %v2577 = vadd.f32 0.0, %v2576
        %2578 = vmatprep.mubr.bf16.mxu0 0
        %2579 = vmatmul.mubr.bf16.gmra.mrb[0].mxu0 %v1148
        %v2580 = vpop.f32.mrb[0].mxu0
        %v2581 = vadd.f32 0.0, %v2580
        %v2582 = vpop.f32.mrb[0].mxu0
        %v2583 = vadd.f32 0.0, %v2582
        %v2584 = vpop.f32.mrb[0].mxu0
        %v2585 = vadd.f32 0.0, %v2584
        %v2586 = vpop.f32.mrb[0].mxu0
        %v2587 = vadd.f32 0.0, %v2586
        %2588 = vmatprep.mubr.bf16.mxu0 0
        %2589 = vmatmul.mubr.bf16.gmra.mrb[0].mxu0 %v1149
        %v2590 = vpop.f32.mrb[0].mxu0
        %v2591 = vadd.f32 0.0, %v2590
        %v2592 = vpop.f32.mrb[0].mxu0
        %v2593 = vadd.f32 0.0, %v2592
        %v2594 = vpop.f32.mrb[0].mxu0
        %v2595 = vadd.f32 0.0, %v2594
        %v2596 = vpop.f32.mrb[0].mxu0
        %v2597 = vadd.f32 0.0, %v2596
        %2598 = vmatprep.mubr.bf16.mxu0 0
        %2599 = vmatmul.mubr.bf16.gmra.mrb[0].mxu0 %v1150
        %v2600 = vpop.f32.mrb[0].mxu0
        %v2601 = vadd.f32 0.0, %v2600
        %v2602 = vpop.f32.mrb[0].mxu0
        %v2603 = vadd.f32 0.0, %v2602
        %v2604 = vpop.f32.mrb[0].mxu0
        %v2605 = vadd.f32 0.0, %v2604
        %v2606 = vpop.f32.mrb[0].mxu0
        %v2607 = vadd.f32 0.0, %v2606
        %2608 = vmatprep.mubr.bf16.mxu0 0
        %2609 = vmatmul.mubr.bf16.gmra.mrb[0].mxu0 %v1151
        %v2610 = vpop.f32.mrb[0].mxu0
        %v2611 = vadd.f32 0.0, %v2610
        %v2612 = vpop.f32.mrb[0].mxu0
        %v2613 = vadd.f32 0.0, %v2612
        %v2614 = vpop.f32.mrb[0].mxu0
        %v2615 = vadd.f32 0.0, %v2614
        %v2616 = vpop.f32.mrb[0].mxu0
        %v2617 = vadd.f32 0.0, %v2616
        %2618 = vmatprep.mubr.bf16.mxu0 0
        %2619 = vmatmul.mubr.bf16.gmra.mrb[0].mxu0 %v1152
        %v2620 = vpop.f32.mrb[0].mxu0
        %v2621 = vadd.f32 0.0, %v2620
        %v2622 = vpop.f32.mrb[0].mxu0
        %v2623 = vadd.f32 0.0, %v2622
        %v2624 = vpop.f32.mrb[0].mxu0
        %v2625 = vadd.f32 0.0, %v2624
        %v2626 = vpop.f32.mrb[0].mxu0
        %v2627 = vadd.f32 0.0, %v2626
        %2628 = vmatprep.mubr.bf16.mxu0 0
        %2629 = vmatmul.mubr.bf16.gmra.mrb[0].mxu0 %v1153
        %v2630 = vpop.f32.mrb[0].mxu0
        %v2631 = vadd.f32 0.0, %v2630
        %v2632 = vpop.f32.mrb[0].mxu0
        %v2633 = vadd.f32 0.0, %v2632
        %v2634 = vpop.f32.mrb[0].mxu0
        %v2635 = vadd.f32 0.0, %v2634
        %v2636 = vpop.f32.mrb[0].mxu0
        %v2637 = vadd.f32 0.0, %v2636
        %2638 = vmatprep.mubr.bf16.mxu0 0
        %2639 = vmatmul.mubr.bf16.gmra.mrb[0].mxu0 %v1154
        %v2640 = vpop.f32.mrb[0].mxu0
        %v2641 = vadd.f32 0.0, %v2640
        %v2642 = vpop.f32.mrb[0].mxu0
        %v2643 = vadd.f32 0.0, %v2642
        %v2644 = vpop.f32.mrb[0].mxu0
        %v2645 = vadd.f32 0.0, %v2644
        %v2646 = vpop.f32.mrb[0].mxu0
        %v2647 = vadd.f32 0.0, %v2646
        %2648 = vmatprep.mubr.bf16.mxu0 0
        %2649 = vmatmul.mubr.bf16.gmra.mrb[0].mxu0 %v1155
        %v2650 = vpop.f32.mrb[0].mxu0
        %v2651 = vadd.f32 0.0, %v2650
        %v2652 = vpop.f32.mrb[0].mxu0
        %v2653 = vadd.f32 0.0, %v2652
        %v2654 = vpop.f32.mrb[0].mxu0
        %v2655 = vadd.f32 0.0, %v2654
        %v2656 = vpop.f32.mrb[0].mxu0
        %v2657 = vadd.f32 0.0, %v2656
        %2658 = vmatprep.mubr.bf16.mxu0 0
        %2659 = vmatmul.mubr.bf16.gmra.mrb[0].mxu0 %v1156
        %v2660 = vpop.f32.mrb[0].mxu0
        %v2661 = vadd.f32 0.0, %v2660
        %v2662 = vpop.f32.mrb[0].mxu0
        %v2663 = vadd.f32 0.0, %v2662
        %v2664 = vpop.f32.mrb[0].mxu0
        %v2665 = vadd.f32 0.0, %v2664
        %v2666 = vpop.f32.mrb[0].mxu0
        %v2667 = vadd.f32 0.0, %v2666
        %2668 = vmatprep.mubr.bf16.mxu0 0
        %2669 = vmatmul.mubr.bf16.gmra.mrb[0].mxu0 %v1157
        %v2670 = vpop.f32.mrb[0].mxu0
        %v2671 = vadd.f32 0.0, %v2670
        %v2672 = vpop.f32.mrb[0].mxu0
        %v2673 = vadd.f32 0.0, %v2672
        %v2674 = vpop.f32.mrb[0].mxu0
        %v2675 = vadd.f32 0.0, %v2674
        %v2676 = vpop.f32.mrb[0].mxu0
        %v2677 = vadd.f32 0.0, %v2676
        %2678 = vdwg.mxu0
        %v2679 = vld [vmem:[%s2] sm:$0x1]
        %v2681 = vlaneseq
        %v2682 = vshrl.u32 %v2681, 7
        %v2683 = vsub.s32 0, %v2682
        %v2684 = vrot.slane %v2679, %v2683
        %v2686 = vadd.f32 %v1401, %v2684
        %v2687 = vadd.f32 %v1405, %v2684
        %v2688 = vadd.f32 %v1411, %v2684
        %v2689 = vadd.f32 %v1415, %v2684
        %v2690 = vadd.f32 %v1421, %v2684
        %v2691 = vadd.f32 %v1425, %v2684
        %v2692 = vadd.f32 %v1431, %v2684
        %v2693 = vadd.f32 %v1435, %v2684
        %v2694 = vadd.f32 %v1441, %v2684
        %v2695 = vadd.f32 %v1445, %v2684
        %v2696 = vadd.f32 %v1451, %v2684
        %v2697 = vadd.f32 %v1455, %v2684
        %v2698 = vadd.f32 %v1461, %v2684
        %v2699 = vadd.f32 %v1465, %v2684
        %v2700 = vadd.f32 %v1471, %v2684
        %v2701 = vadd.f32 %v1475, %v2684
        %v2702 = vadd.f32 %v1481, %v2684
        %v2703 = vadd.f32 %v1485, %v2684
        %v2704 = vadd.f32 %v1491, %v2684
        %v2705 = vadd.f32 %v1495, %v2684
        %v2706 = vadd.f32 %v1501, %v2684
        %v2707 = vadd.f32 %v1505, %v2684
        %v2708 = vadd.f32 %v1511, %v2684
        %v2709 = vadd.f32 %v1515, %v2684
        %v2710 = vadd.f32 %v1521, %v2684
        %v2711 = vadd.f32 %v1525, %v2684
        %v2712 = vadd.f32 %v1531, %v2684
        %v2713 = vadd.f32 %v1535, %v2684
        %v2714 = vadd.f32 %v1541, %v2684
        %v2715 = vadd.f32 %v1545, %v2684
        %v2716 = vadd.f32 %v1551, %v2684
        %v2717 = vadd.f32 %v1555, %v2684
        %v2718 = vadd.f32 %v1561, %v2684
        %v2719 = vadd.f32 %v1565, %v2684
        %v2720 = vadd.f32 %v1571, %v2684
        %v2721 = vadd.f32 %v1575, %v2684
        %v2722 = vadd.f32 %v1581, %v2684
        %v2723 = vadd.f32 %v1585, %v2684
        %v2724 = vadd.f32 %v1591, %v2684
        %v2725 = vadd.f32 %v1595, %v2684
        %v2726 = vadd.f32 %v1601, %v2684
        %v2727 = vadd.f32 %v1605, %v2684
        %v2728 = vadd.f32 %v1611, %v2684
        %v2729 = vadd.f32 %v1615, %v2684
        %v2730 = vadd.f32 %v1621, %v2684
        %v2731 = vadd.f32 %v1625, %v2684
        %v2732 = vadd.f32 %v1631, %v2684
        %v2733 = vadd.f32 %v1635, %v2684
        %v2734 = vadd.f32 %v1641, %v2684
        %v2735 = vadd.f32 %v1645, %v2684
        %v2736 = vadd.f32 %v1651, %v2684
        %v2737 = vadd.f32 %v1655, %v2684
        %v2738 = vadd.f32 %v1661, %v2684
        %v2739 = vadd.f32 %v1665, %v2684
        %v2740 = vadd.f32 %v1671, %v2684
        %v2741 = vadd.f32 %v1675, %v2684
        %v2742 = vadd.f32 %v1681, %v2684
        %v2743 = vadd.f32 %v1685, %v2684
        %v2744 = vadd.f32 %v1691, %v2684
        %v2745 = vadd.f32 %v1695, %v2684
        %v2746 = vadd.f32 %v1701, %v2684
        %v2747 = vadd.f32 %v1705, %v2684
        %v2748 = vadd.f32 %v1711, %v2684
        %v2749 = vadd.f32 %v1715, %v2684
        %v2750 = vadd.f32 %v1721, %v2684
        %v2751 = vadd.f32 %v1725, %v2684
        %v2752 = vadd.f32 %v1731, %v2684
        %v2753 = vadd.f32 %v1735, %v2684
        %v2754 = vadd.f32 %v1741, %v2684
        %v2755 = vadd.f32 %v1745, %v2684
        %v2756 = vadd.f32 %v1751, %v2684
        %v2757 = vadd.f32 %v1755, %v2684
        %v2758 = vadd.f32 %v1761, %v2684
        %v2759 = vadd.f32 %v1765, %v2684
        %v2760 = vadd.f32 %v1771, %v2684
        %v2761 = vadd.f32 %v1775, %v2684
        %v2762 = vadd.f32 %v1781, %v2684
        %v2763 = vadd.f32 %v1785, %v2684
        %v2764 = vadd.f32 %v1791, %v2684
        %v2765 = vadd.f32 %v1795, %v2684
        %v2766 = vadd.f32 %v1801, %v2684
        %v2767 = vadd.f32 %v1805, %v2684
        %v2768 = vadd.f32 %v1811, %v2684
        %v2769 = vadd.f32 %v1815, %v2684
        %v2770 = vadd.f32 %v1821, %v2684
        %v2771 = vadd.f32 %v1825, %v2684
        %v2772 = vadd.f32 %v1831, %v2684
        %v2773 = vadd.f32 %v1835, %v2684
        %v2774 = vadd.f32 %v1841, %v2684
        %v2775 = vadd.f32 %v1845, %v2684
        %v2776 = vadd.f32 %v1851, %v2684
        %v2777 = vadd.f32 %v1855, %v2684
        %v2778 = vadd.f32 %v1861, %v2684
        %v2779 = vadd.f32 %v1865, %v2684
        %v2780 = vadd.f32 %v1871, %v2684
        %v2781 = vadd.f32 %v1875, %v2684
        %v2782 = vadd.f32 %v1881, %v2684
        %v2783 = vadd.f32 %v1885, %v2684
        %v2784 = vadd.f32 %v1891, %v2684
        %v2785 = vadd.f32 %v1895, %v2684
        %v2786 = vadd.f32 %v1901, %v2684
        %v2787 = vadd.f32 %v1905, %v2684
        %v2788 = vadd.f32 %v1911, %v2684
        %v2789 = vadd.f32 %v1915, %v2684
        %v2790 = vadd.f32 %v1921, %v2684
        %v2791 = vadd.f32 %v1925, %v2684
        %v2792 = vadd.f32 %v1931, %v2684
        %v2793 = vadd.f32 %v1935, %v2684
        %v2794 = vadd.f32 %v1941, %v2684
        %v2795 = vadd.f32 %v1945, %v2684
        %v2796 = vadd.f32 %v1951, %v2684
        %v2797 = vadd.f32 %v1955, %v2684
        %v2798 = vadd.f32 %v1961, %v2684
        %v2799 = vadd.f32 %v1965, %v2684
        %v2800 = vadd.f32 %v1971, %v2684
        %v2801 = vadd.f32 %v1975, %v2684
        %v2802 = vadd.f32 %v1981, %v2684
        %v2803 = vadd.f32 %v1985, %v2684
        %v2804 = vadd.f32 %v1991, %v2684
        %v2805 = vadd.f32 %v1995, %v2684
        %v2806 = vadd.f32 %v2001, %v2684
        %v2807 = vadd.f32 %v2005, %v2684
        %v2808 = vadd.f32 %v2011, %v2684
        %v2809 = vadd.f32 %v2015, %v2684
        %v2810 = vadd.f32 %v2021, %v2684
        %v2811 = vadd.f32 %v2025, %v2684
        %v2812 = vadd.f32 %v2031, %v2684
        %v2813 = vadd.f32 %v2035, %v2684
        %v2814 = vadd.f32 %v2041, %v2684
        %v2815 = vadd.f32 %v2045, %v2684
        %v2816 = vadd.f32 %v2051, %v2684
        %v2817 = vadd.f32 %v2055, %v2684
        %v2818 = vadd.f32 %v2061, %v2684
        %v2819 = vadd.f32 %v2065, %v2684
        %v2820 = vadd.f32 %v2071, %v2684
        %v2821 = vadd.f32 %v2075, %v2684
        %v2822 = vadd.f32 %v2081, %v2684
        %v2823 = vadd.f32 %v2085, %v2684
        %v2824 = vadd.f32 %v2091, %v2684
        %v2825 = vadd.f32 %v2095, %v2684
        %v2826 = vadd.f32 %v2101, %v2684
        %v2827 = vadd.f32 %v2105, %v2684
        %v2828 = vadd.f32 %v2111, %v2684
        %v2829 = vadd.f32 %v2115, %v2684
        %v2830 = vadd.f32 %v2121, %v2684
        %v2831 = vadd.f32 %v2125, %v2684
        %v2832 = vadd.f32 %v2131, %v2684
        %v2833 = vadd.f32 %v2135, %v2684
        %v2834 = vadd.f32 %v2141, %v2684
        %v2835 = vadd.f32 %v2145, %v2684
        %v2836 = vadd.f32 %v2151, %v2684
        %v2837 = vadd.f32 %v2155, %v2684
        %v2838 = vadd.f32 %v2161, %v2684
        %v2839 = vadd.f32 %v2165, %v2684
        %v2840 = vadd.f32 %v2171, %v2684
        %v2841 = vadd.f32 %v2175, %v2684
        %v2842 = vadd.f32 %v2181, %v2684
        %v2843 = vadd.f32 %v2185, %v2684
        %v2844 = vadd.f32 %v2191, %v2684
        %v2845 = vadd.f32 %v2195, %v2684
        %v2846 = vadd.f32 %v2201, %v2684
        %v2847 = vadd.f32 %v2205, %v2684
        %v2848 = vadd.f32 %v2211, %v2684
        %v2849 = vadd.f32 %v2215, %v2684
        %v2850 = vadd.f32 %v2221, %v2684
        %v2851 = vadd.f32 %v2225, %v2684
        %v2852 = vadd.f32 %v2231, %v2684
        %v2853 = vadd.f32 %v2235, %v2684
        %v2854 = vadd.f32 %v2241, %v2684
        %v2855 = vadd.f32 %v2245, %v2684
        %v2856 = vadd.f32 %v2251, %v2684
        %v2857 = vadd.f32 %v2255, %v2684
        %v2858 = vadd.f32 %v2261, %v2684
        %v2859 = vadd.f32 %v2265, %v2684
        %v2860 = vadd.f32 %v2271, %v2684
        %v2861 = vadd.f32 %v2275, %v2684
        %v2862 = vadd.f32 %v2281, %v2684
        %v2863 = vadd.f32 %v2285, %v2684
        %v2864 = vadd.f32 %v2291, %v2684
        %v2865 = vadd.f32 %v2295, %v2684
        %v2866 = vadd.f32 %v2301, %v2684
        %v2867 = vadd.f32 %v2305, %v2684
        %v2868 = vadd.f32 %v2311, %v2684
        %v2869 = vadd.f32 %v2315, %v2684
        %v2870 = vadd.f32 %v2321, %v2684
        %v2871 = vadd.f32 %v2325, %v2684
        %v2872 = vadd.f32 %v2331, %v2684
        %v2873 = vadd.f32 %v2335, %v2684
        %v2874 = vadd.f32 %v2341, %v2684
        %v2875 = vadd.f32 %v2345, %v2684
        %v2876 = vadd.f32 %v2351, %v2684
        %v2877 = vadd.f32 %v2355, %v2684
        %v2878 = vadd.f32 %v2361, %v2684
        %v2879 = vadd.f32 %v2365, %v2684
        %v2880 = vadd.f32 %v2371, %v2684
        %v2881 = vadd.f32 %v2375, %v2684
        %v2882 = vadd.f32 %v2381, %v2684
        %v2883 = vadd.f32 %v2385, %v2684
        %v2884 = vadd.f32 %v2391, %v2684
        %v2885 = vadd.f32 %v2395, %v2684
        %v2886 = vadd.f32 %v2401, %v2684
        %v2887 = vadd.f32 %v2405, %v2684
        %v2888 = vadd.f32 %v2411, %v2684
        %v2889 = vadd.f32 %v2415, %v2684
        %v2890 = vadd.f32 %v2421, %v2684
        %v2891 = vadd.f32 %v2425, %v2684
        %v2892 = vadd.f32 %v2431, %v2684
        %v2893 = vadd.f32 %v2435, %v2684
        %v2894 = vadd.f32 %v2441, %v2684
        %v2895 = vadd.f32 %v2445, %v2684
        %v2896 = vadd.f32 %v2451, %v2684
        %v2897 = vadd.f32 %v2455, %v2684
        %v2898 = vadd.f32 %v2461, %v2684
        %v2899 = vadd.f32 %v2465, %v2684
        %v2900 = vadd.f32 %v2471, %v2684
        %v2901 = vadd.f32 %v2475, %v2684
        %v2902 = vadd.f32 %v2481, %v2684
        %v2903 = vadd.f32 %v2485, %v2684
        %v2904 = vadd.f32 %v2491, %v2684
        %v2905 = vadd.f32 %v2495, %v2684
        %v2906 = vadd.f32 %v2501, %v2684
        %v2907 = vadd.f32 %v2505, %v2684
        %v2908 = vadd.f32 %v2511, %v2684
        %v2909 = vadd.f32 %v2515, %v2684
        %v2910 = vadd.f32 %v2521, %v2684
        %v2911 = vadd.f32 %v2525, %v2684
        %v2912 = vadd.f32 %v2531, %v2684
        %v2913 = vadd.f32 %v2535, %v2684
        %v2914 = vadd.f32 %v2541, %v2684
        %v2915 = vadd.f32 %v2545, %v2684
        %v2916 = vadd.f32 %v2551, %v2684
        %v2917 = vadd.f32 %v2555, %v2684
        %v2918 = vadd.f32 %v2561, %v2684
        %v2919 = vadd.f32 %v2565, %v2684
        %v2920 = vadd.f32 %v2571, %v2684
        %v2921 = vadd.f32 %v2575, %v2684
        %v2922 = vadd.f32 %v2581, %v2684
        %v2923 = vadd.f32 %v2585, %v2684
        %v2924 = vadd.f32 %v2591, %v2684
        %v2925 = vadd.f32 %v2595, %v2684
        %v2926 = vadd.f32 %v2601, %v2684
        %v2927 = vadd.f32 %v2605, %v2684
        %v2928 = vadd.f32 %v2611, %v2684
        %v2929 = vadd.f32 %v2615, %v2684
        %v2930 = vadd.f32 %v2621, %v2684
        %v2931 = vadd.f32 %v2625, %v2684
        %v2932 = vadd.f32 %v2631, %v2684
        %v2933 = vadd.f32 %v2635, %v2684
        %v2934 = vadd.f32 %v2641, %v2684
        %v2935 = vadd.f32 %v2645, %v2684
        %v2936 = vadd.f32 %v2651, %v2684
        %v2937 = vadd.f32 %v2655, %v2684
        %v2938 = vadd.f32 %v2661, %v2684
        %v2939 = vadd.f32 %v2665, %v2684
        %v2940 = vadd.f32 %v2671, %v2684
        %v2941 = vadd.f32 %v2675, %v2684
        %v2942 = vmax.f32 %v2686, 0.0
        %v2943 = vmax.f32 %v2687, 0.0
        %v2944 = vmax.f32 %v2688, 0.0
        %v2945 = vmax.f32 %v2689, 0.0
        %v2946 = vmax.f32 %v2690, 0.0
        %v2947 = vmax.f32 %v2691, 0.0
        %v2948 = vmax.f32 %v2692, 0.0
        %v2949 = vmax.f32 %v2693, 0.0
        %v2950 = vmax.f32 %v2694, 0.0
        %v2951 = vmax.f32 %v2695, 0.0
        %v2952 = vmax.f32 %v2696, 0.0
        %v2953 = vmax.f32 %v2697, 0.0
        %v2954 = vmax.f32 %v2698, 0.0
        %v2955 = vmax.f32 %v2699, 0.0
        %v2956 = vmax.f32 %v2700, 0.0
        %v2957 = vmax.f32 %v2701, 0.0
        %v2958 = vmax.f32 %v2702, 0.0
        %v2959 = vmax.f32 %v2703, 0.0
        %v2960 = vmax.f32 %v2704, 0.0
        %v2961 = vmax.f32 %v2705, 0.0
        %v2962 = vmax.f32 %v2706, 0.0
        %v2963 = vmax.f32 %v2707, 0.0
        %v2964 = vmax.f32 %v2708, 0.0
        %v2965 = vmax.f32 %v2709, 0.0
        %v2966 = vmax.f32 %v2710, 0.0
        %v2967 = vmax.f32 %v2711, 0.0
        %v2968 = vmax.f32 %v2712, 0.0
        %v2969 = vmax.f32 %v2713, 0.0
        %v2970 = vmax.f32 %v2714, 0.0
        %v2971 = vmax.f32 %v2715, 0.0
        %v2972 = vmax.f32 %v2716, 0.0
        %v2973 = vmax.f32 %v2717, 0.0
        %v2974 = vmax.f32 %v2718, 0.0
        %v2975 = vmax.f32 %v2719, 0.0
        %v2976 = vmax.f32 %v2720, 0.0
        %v2977 = vmax.f32 %v2721, 0.0
        %v2978 = vmax.f32 %v2722, 0.0
        %v2979 = vmax.f32 %v2723, 0.0
        %v2980 = vmax.f32 %v2724, 0.0
        %v2981 = vmax.f32 %v2725, 0.0
        %v2982 = vmax.f32 %v2726, 0.0
        %v2983 = vmax.f32 %v2727, 0.0
        %v2984 = vmax.f32 %v2728, 0.0
        %v2985 = vmax.f32 %v2729, 0.0
        %v2986 = vmax.f32 %v2730, 0.0
        %v2987 = vmax.f32 %v2731, 0.0
        %v2988 = vmax.f32 %v2732, 0.0
        %v2989 = vmax.f32 %v2733, 0.0
        %v2990 = vmax.f32 %v2734, 0.0
        %v2991 = vmax.f32 %v2735, 0.0
        %v2992 = vmax.f32 %v2736, 0.0
        %v2993 = vmax.f32 %v2737, 0.0
        %v2994 = vmax.f32 %v2738, 0.0
        %v2995 = vmax.f32 %v2739, 0.0
        %v2996 = vmax.f32 %v2740, 0.0
        %v2997 = vmax.f32 %v2741, 0.0
        %v2998 = vmax.f32 %v2742, 0.0
        %v2999 = vmax.f32 %v2743, 0.0
        %v3000 = vmax.f32 %v2744, 0.0
        %v3001 = vmax.f32 %v2745, 0.0
        %v3002 = vmax.f32 %v2746, 0.0
        %v3003 = vmax.f32 %v2747, 0.0
        %v3004 = vmax.f32 %v2748, 0.0
        %v3005 = vmax.f32 %v2749, 0.0
        %v3006 = vmax.f32 %v2750, 0.0
        %v3007 = vmax.f32 %v2751, 0.0
        %v3008 = vmax.f32 %v2752, 0.0
        %v3009 = vmax.f32 %v2753, 0.0
        %v3010 = vmax.f32 %v2754, 0.0
        %v3011 = vmax.f32 %v2755, 0.0
        %v3012 = vmax.f32 %v2756, 0.0
        %v3013 = vmax.f32 %v2757, 0.0
        %v3014 = vmax.f32 %v2758, 0.0
        %v3015 = vmax.f32 %v2759, 0.0
        %v3016 = vmax.f32 %v2760, 0.0
        %v3017 = vmax.f32 %v2761, 0.0
        %v3018 = vmax.f32 %v2762, 0.0
        %v3019 = vmax.f32 %v2763, 0.0
        %v3020 = vmax.f32 %v2764, 0.0
        %v3021 = vmax.f32 %v2765, 0.0
        %v3022 = vmax.f32 %v2766, 0.0
        %v3023 = vmax.f32 %v2767, 0.0
        %v3024 = vmax.f32 %v2768, 0.0
        %v3025 = vmax.f32 %v2769, 0.0
        %v3026 = vmax.f32 %v2770, 0.0
        %v3027 = vmax.f32 %v2771, 0.0
        %v3028 = vmax.f32 %v2772, 0.0
        %v3029 = vmax.f32 %v2773, 0.0
        %v3030 = vmax.f32 %v2774, 0.0
        %v3031 = vmax.f32 %v2775, 0.0
        %v3032 = vmax.f32 %v2776, 0.0
        %v3033 = vmax.f32 %v2777, 0.0
        %v3034 = vmax.f32 %v2778, 0.0
        %v3035 = vmax.f32 %v2779, 0.0
        %v3036 = vmax.f32 %v2780, 0.0
        %v3037 = vmax.f32 %v2781, 0.0
        %v3038 = vmax.f32 %v2782, 0.0
        %v3039 = vmax.f32 %v2783, 0.0
        %v3040 = vmax.f32 %v2784, 0.0
        %v3041 = vmax.f32 %v2785, 0.0
        %v3042 = vmax.f32 %v2786, 0.0
        %v3043 = vmax.f32 %v2787, 0.0
        %v3044 = vmax.f32 %v2788, 0.0
        %v3045 = vmax.f32 %v2789, 0.0
        %v3046 = vmax.f32 %v2790, 0.0
        %v3047 = vmax.f32 %v2791, 0.0
        %v3048 = vmax.f32 %v2792, 0.0
        %v3049 = vmax.f32 %v2793, 0.0
        %v3050 = vmax.f32 %v2794, 0.0
        %v3051 = vmax.f32 %v2795, 0.0
        %v3052 = vmax.f32 %v2796, 0.0
        %v3053 = vmax.f32 %v2797, 0.0
        %v3054 = vmax.f32 %v2798, 0.0
        %v3055 = vmax.f32 %v2799, 0.0
        %v3056 = vmax.f32 %v2800, 0.0
        %v3057 = vmax.f32 %v2801, 0.0
        %v3058 = vmax.f32 %v2802, 0.0
        %v3059 = vmax.f32 %v2803, 0.0
        %v3060 = vmax.f32 %v2804, 0.0
        %v3061 = vmax.f32 %v2805, 0.0
        %v3062 = vmax.f32 %v2806, 0.0
        %v3063 = vmax.f32 %v2807, 0.0
        %v3064 = vmax.f32 %v2808, 0.0
        %v3065 = vmax.f32 %v2809, 0.0
        %v3066 = vmax.f32 %v2810, 0.0
        %v3067 = vmax.f32 %v2811, 0.0
        %v3068 = vmax.f32 %v2812, 0.0
        %v3069 = vmax.f32 %v2813, 0.0
        %v3070 = vmax.f32 %v2814, 0.0
        %v3071 = vmax.f32 %v2815, 0.0
        %v3072 = vmax.f32 %v2816, 0.0
        %v3073 = vmax.f32 %v2817, 0.0
        %v3074 = vmax.f32 %v2818, 0.0
        %v3075 = vmax.f32 %v2819, 0.0
        %v3076 = vmax.f32 %v2820, 0.0
        %v3077 = vmax.f32 %v2821, 0.0
        %v3078 = vmax.f32 %v2822, 0.0
        %v3079 = vmax.f32 %v2823, 0.0
        %v3080 = vmax.f32 %v2824, 0.0
        %v3081 = vmax.f32 %v2825, 0.0
        %v3082 = vmax.f32 %v2826, 0.0
        %v3083 = vmax.f32 %v2827, 0.0
        %v3084 = vmax.f32 %v2828, 0.0
        %v3085 = vmax.f32 %v2829, 0.0
        %v3086 = vmax.f32 %v2830, 0.0
        %v3087 = vmax.f32 %v2831, 0.0
        %v3088 = vmax.f32 %v2832, 0.0
        %v3089 = vmax.f32 %v2833, 0.0
        %v3090 = vmax.f32 %v2834, 0.0
        %v3091 = vmax.f32 %v2835, 0.0
        %v3092 = vmax.f32 %v2836, 0.0
        %v3093 = vmax.f32 %v2837, 0.0
        %v3094 = vmax.f32 %v2838, 0.0
        %v3095 = vmax.f32 %v2839, 0.0
        %v3096 = vmax.f32 %v2840, 0.0
        %v3097 = vmax.f32 %v2841, 0.0
        %v3098 = vmax.f32 %v2842, 0.0
        %v3099 = vmax.f32 %v2843, 0.0
        %v3100 = vmax.f32 %v2844, 0.0
        %v3101 = vmax.f32 %v2845, 0.0
        %v3102 = vmax.f32 %v2846, 0.0
        %v3103 = vmax.f32 %v2847, 0.0
        %v3104 = vmax.f32 %v2848, 0.0
        %v3105 = vmax.f32 %v2849, 0.0
        %v3106 = vmax.f32 %v2850, 0.0
        %v3107 = vmax.f32 %v2851, 0.0
        %v3108 = vmax.f32 %v2852, 0.0
        %v3109 = vmax.f32 %v2853, 0.0
        %v3110 = vmax.f32 %v2854, 0.0
        %v3111 = vmax.f32 %v2855, 0.0
        %v3112 = vmax.f32 %v2856, 0.0
        %v3113 = vmax.f32 %v2857, 0.0
        %v3114 = vmax.f32 %v2858, 0.0
        %v3115 = vmax.f32 %v2859, 0.0
        %v3116 = vmax.f32 %v2860, 0.0
        %v3117 = vmax.f32 %v2861, 0.0
        %v3118 = vmax.f32 %v2862, 0.0
        %v3119 = vmax.f32 %v2863, 0.0
        %v3120 = vmax.f32 %v2864, 0.0
        %v3121 = vmax.f32 %v2865, 0.0
        %v3122 = vmax.f32 %v2866, 0.0
        %v3123 = vmax.f32 %v2867, 0.0
        %v3124 = vmax.f32 %v2868, 0.0
        %v3125 = vmax.f32 %v2869, 0.0
        %v3126 = vmax.f32 %v2870, 0.0
        %v3127 = vmax.f32 %v2871, 0.0
        %v3128 = vmax.f32 %v2872, 0.0
        %v3129 = vmax.f32 %v2873, 0.0
        %v3130 = vmax.f32 %v2874, 0.0
        %v3131 = vmax.f32 %v2875, 0.0
        %v3132 = vmax.f32 %v2876, 0.0
        %v3133 = vmax.f32 %v2877, 0.0
        %v3134 = vmax.f32 %v2878, 0.0
        %v3135 = vmax.f32 %v2879, 0.0
        %v3136 = vmax.f32 %v2880, 0.0
        %v3137 = vmax.f32 %v2881, 0.0
        %v3138 = vmax.f32 %v2882, 0.0
        %v3139 = vmax.f32 %v2883, 0.0
        %v3140 = vmax.f32 %v2884, 0.0
        %v3141 = vmax.f32 %v2885, 0.0
        %v3142 = vmax.f32 %v2886, 0.0
        %v3143 = vmax.f32 %v2887, 0.0
        %v3144 = vmax.f32 %v2888, 0.0
        %v3145 = vmax.f32 %v2889, 0.0
        %v3146 = vmax.f32 %v2890, 0.0
        %v3147 = vmax.f32 %v2891, 0.0
        %v3148 = vmax.f32 %v2892, 0.0
        %v3149 = vmax.f32 %v2893, 0.0
        %v3150 = vmax.f32 %v2894, 0.0
        %v3151 = vmax.f32 %v2895, 0.0
        %v3152 = vmax.f32 %v2896, 0.0
        %v3153 = vmax.f32 %v2897, 0.0
        %v3154 = vmax.f32 %v2898, 0.0
        %v3155 = vmax.f32 %v2899, 0.0
        %v3156 = vmax.f32 %v2900, 0.0
        %v3157 = vmax.f32 %v2901, 0.0
        %v3158 = vmax.f32 %v2902, 0.0
        %v3159 = vmax.f32 %v2903, 0.0
        %v3160 = vmax.f32 %v2904, 0.0
        %v3161 = vmax.f32 %v2905, 0.0
        %v3162 = vmax.f32 %v2906, 0.0
        %v3163 = vmax.f32 %v2907, 0.0
        %v3164 = vmax.f32 %v2908, 0.0
        %v3165 = vmax.f32 %v2909, 0.0
        %v3166 = vmax.f32 %v2910, 0.0
        %v3167 = vmax.f32 %v2911, 0.0
        %v3168 = vmax.f32 %v2912, 0.0
        %v3169 = vmax.f32 %v2913, 0.0
        %v3170 = vmax.f32 %v2914, 0.0
        %v3171 = vmax.f32 %v2915, 0.0
        %v3172 = vmax.f32 %v2916, 0.0
        %v3173 = vmax.f32 %v2917, 0.0
        %v3174 = vmax.f32 %v2918, 0.0
        %v3175 = vmax.f32 %v2919, 0.0
        %v3176 = vmax.f32 %v2920, 0.0
        %v3177 = vmax.f32 %v2921, 0.0
        %v3178 = vmax.f32 %v2922, 0.0
        %v3179 = vmax.f32 %v2923, 0.0
        %v3180 = vmax.f32 %v2924, 0.0
        %v3181 = vmax.f32 %v2925, 0.0
        %v3182 = vmax.f32 %v2926, 0.0
        %v3183 = vmax.f32 %v2927, 0.0
        %v3184 = vmax.f32 %v2928, 0.0
        %v3185 = vmax.f32 %v2929, 0.0
        %v3186 = vmax.f32 %v2930, 0.0
        %v3187 = vmax.f32 %v2931, 0.0
        %v3188 = vmax.f32 %v2932, 0.0
        %v3189 = vmax.f32 %v2933, 0.0
        %v3190 = vmax.f32 %v2934, 0.0
        %v3191 = vmax.f32 %v2935, 0.0
        %v3192 = vmax.f32 %v2936, 0.0
        %v3193 = vmax.f32 %v2937, 0.0
        %v3194 = vmax.f32 %v2938, 0.0
        %v3195 = vmax.f32 %v2939, 0.0
        %v3196 = vmax.f32 %v2940, 0.0
        %v3197 = vmax.f32 %v2941, 0.0
        %v3198 = vpack.c.bf16 %v2943, %v2942
        %v3199 = vpack.c.bf16 %v2945, %v2944
        %v3200 = vpack.c.bf16 %v2947, %v2946
        %v3201 = vpack.c.bf16 %v2949, %v2948
        %v3202 = vpack.c.bf16 %v2951, %v2950
        %v3203 = vpack.c.bf16 %v2953, %v2952
        %v3204 = vpack.c.bf16 %v2955, %v2954
        %v3205 = vpack.c.bf16 %v2957, %v2956
        %v3206 = vpack.c.bf16 %v2959, %v2958
        %v3207 = vpack.c.bf16 %v2961, %v2960
        %v3208 = vpack.c.bf16 %v2963, %v2962
        %v3209 = vpack.c.bf16 %v2965, %v2964
        %v3210 = vpack.c.bf16 %v2967, %v2966
        %v3211 = vpack.c.bf16 %v2969, %v2968
        %v3212 = vpack.c.bf16 %v2971, %v2970
        %v3213 = vpack.c.bf16 %v2973, %v2972
        %v3214 = vpack.c.bf16 %v2975, %v2974
        %v3215 = vpack.c.bf16 %v2977, %v2976
        %v3216 = vpack.c.bf16 %v2979, %v2978
        %v3217 = vpack.c.bf16 %v2981, %v2980
        %v3218 = vpack.c.bf16 %v2983, %v2982
        %v3219 = vpack.c.bf16 %v2985, %v2984
        %v3220 = vpack.c.bf16 %v2987, %v2986
        %v3221 = vpack.c.bf16 %v2989, %v2988
        %v3222 = vpack.c.bf16 %v2991, %v2990
        %v3223 = vpack.c.bf16 %v2993, %v2992
        %v3224 = vpack.c.bf16 %v2995, %v2994
        %v3225 = vpack.c.bf16 %v2997, %v2996
        %v3226 = vpack.c.bf16 %v2999, %v2998
        %v3227 = vpack.c.bf16 %v3001, %v3000
        %v3228 = vpack.c.bf16 %v3003, %v3002
        %v3229 = vpack.c.bf16 %v3005, %v3004
        %v3230 = vpack.c.bf16 %v3007, %v3006
        %v3231 = vpack.c.bf16 %v3009, %v3008
        %v3232 = vpack.c.bf16 %v3011, %v3010
        %v3233 = vpack.c.bf16 %v3013, %v3012
        %v3234 = vpack.c.bf16 %v3015, %v3014
        %v3235 = vpack.c.bf16 %v3017, %v3016
        %v3236 = vpack.c.bf16 %v3019, %v3018
        %v3237 = vpack.c.bf16 %v3021, %v3020
        %v3238 = vpack.c.bf16 %v3023, %v3022
        %v3239 = vpack.c.bf16 %v3025, %v3024
        %v3240 = vpack.c.bf16 %v3027, %v3026
        %v3241 = vpack.c.bf16 %v3029, %v3028
        %v3242 = vpack.c.bf16 %v3031, %v3030
        %v3243 = vpack.c.bf16 %v3033, %v3032
        %v3244 = vpack.c.bf16 %v3035, %v3034
        %v3245 = vpack.c.bf16 %v3037, %v3036
        %v3246 = vpack.c.bf16 %v3039, %v3038
        %v3247 = vpack.c.bf16 %v3041, %v3040
        %v3248 = vpack.c.bf16 %v3043, %v3042
        %v3249 = vpack.c.bf16 %v3045, %v3044
        %v3250 = vpack.c.bf16 %v3047, %v3046
        %v3251 = vpack.c.bf16 %v3049, %v3048
        %v3252 = vpack.c.bf16 %v3051, %v3050
        %v3253 = vpack.c.bf16 %v3053, %v3052
        %v3254 = vpack.c.bf16 %v3055, %v3054
        %v3255 = vpack.c.bf16 %v3057, %v3056
        %v3256 = vpack.c.bf16 %v3059, %v3058
        %v3257 = vpack.c.bf16 %v3061, %v3060
        %v3258 = vpack.c.bf16 %v3063, %v3062
        %v3259 = vpack.c.bf16 %v3065, %v3064
        %v3260 = vpack.c.bf16 %v3067, %v3066
        %v3261 = vpack.c.bf16 %v3069, %v3068
        %v3262 = vpack.c.bf16 %v3071, %v3070
        %v3263 = vpack.c.bf16 %v3073, %v3072
        %v3264 = vpack.c.bf16 %v3075, %v3074
        %v3265 = vpack.c.bf16 %v3077, %v3076
        %v3266 = vpack.c.bf16 %v3079, %v3078
        %v3267 = vpack.c.bf16 %v3081, %v3080
        %v3268 = vpack.c.bf16 %v3083, %v3082
        %v3269 = vpack.c.bf16 %v3085, %v3084
        %v3270 = vpack.c.bf16 %v3087, %v3086
        %v3271 = vpack.c.bf16 %v3089, %v3088
        %v3272 = vpack.c.bf16 %v3091, %v3090
        %v3273 = vpack.c.bf16 %v3093, %v3092
        %v3274 = vpack.c.bf16 %v3095, %v3094
        %v3275 = vpack.c.bf16 %v3097, %v3096
        %v3276 = vpack.c.bf16 %v3099, %v3098
        %v3277 = vpack.c.bf16 %v3101, %v3100
        %v3278 = vpack.c.bf16 %v3103, %v3102
        %v3279 = vpack.c.bf16 %v3105, %v3104
        %v3280 = vpack.c.bf16 %v3107, %v3106
        %v3281 = vpack.c.bf16 %v3109, %v3108
        %v3282 = vpack.c.bf16 %v3111, %v3110
        %v3283 = vpack.c.bf16 %v3113, %v3112
        %v3284 = vpack.c.bf16 %v3115, %v3114
        %v3285 = vpack.c.bf16 %v3117, %v3116
        %v3286 = vpack.c.bf16 %v3119, %v3118
        %v3287 = vpack.c.bf16 %v3121, %v3120
        %v3288 = vpack.c.bf16 %v3123, %v3122
        %v3289 = vpack.c.bf16 %v3125, %v3124
        %v3290 = vpack.c.bf16 %v3127, %v3126
        %v3291 = vpack.c.bf16 %v3129, %v3128
        %v3292 = vpack.c.bf16 %v3131, %v3130
        %v3293 = vpack.c.bf16 %v3133, %v3132
        %v3294 = vpack.c.bf16 %v3135, %v3134
        %v3295 = vpack.c.bf16 %v3137, %v3136
        %v3296 = vpack.c.bf16 %v3139, %v3138
        %v3297 = vpack.c.bf16 %v3141, %v3140
        %v3298 = vpack.c.bf16 %v3143, %v3142
        %v3299 = vpack.c.bf16 %v3145, %v3144
        %v3300 = vpack.c.bf16 %v3147, %v3146
        %v3301 = vpack.c.bf16 %v3149, %v3148
        %v3302 = vpack.c.bf16 %v3151, %v3150
        %v3303 = vpack.c.bf16 %v3153, %v3152
        %v3304 = vpack.c.bf16 %v3155, %v3154
        %v3305 = vpack.c.bf16 %v3157, %v3156
        %v3306 = vpack.c.bf16 %v3159, %v3158
        %v3307 = vpack.c.bf16 %v3161, %v3160
        %v3308 = vpack.c.bf16 %v3163, %v3162
        %v3309 = vpack.c.bf16 %v3165, %v3164
        %v3310 = vpack.c.bf16 %v3167, %v3166
        %v3311 = vpack.c.bf16 %v3169, %v3168
        %v3312 = vpack.c.bf16 %v3171, %v3170
        %v3313 = vpack.c.bf16 %v3173, %v3172
        %v3314 = vpack.c.bf16 %v3175, %v3174
        %v3315 = vpack.c.bf16 %v3177, %v3176
        %v3316 = vpack.c.bf16 %v3179, %v3178
        %v3317 = vpack.c.bf16 %v3181, %v3180
        %v3318 = vpack.c.bf16 %v3183, %v3182
        %v3319 = vpack.c.bf16 %v3185, %v3184
        %v3320 = vpack.c.bf16 %v3187, %v3186
        %v3321 = vpack.c.bf16 %v3189, %v3188
        %v3322 = vpack.c.bf16 %v3191, %v3190
        %v3323 = vpack.c.bf16 %v3193, %v3192
        %v3324 = vpack.c.bf16 %v3195, %v3194
        %v3325 = vpack.c.bf16 %v3197, %v3196
        %v3326 = vld [vmem:[%s3] sm:$0xf]
        %v3327 = vld [vmem:[%s3 + $0x4] sm:$0xf]
        %v3328 = vld [vmem:[%s3 + $0x8] sm:$0xf]
        %v3329 = vld [vmem:[%s3 + $0xc] sm:$0xf]
        %v3330 = vld [vmem:[%s3 + $0x10] sm:$0xf]
        %v3331 = vld [vmem:[%s3 + $0x14] sm:$0xf]
        %v3332 = vld [vmem:[%s3 + $0x18] sm:$0xf]
        %v3333 = vld [vmem:[%s3 + $0x1c] sm:$0xf]
        %v3334 = vld [vmem:[%s3 + $0x20] sm:$0xf]
        %v3335 = vld [vmem:[%s3 + $0x24] sm:$0xf]
        %v3336 = vld [vmem:[%s3 + $0x28] sm:$0xf]
        %v3337 = vld [vmem:[%s3 + $0x2c] sm:$0xf]
        %v3338 = vld [vmem:[%s3 + $0x30] sm:$0xf]
        %v3339 = vld [vmem:[%s3 + $0x34] sm:$0xf]
        %v3340 = vld [vmem:[%s3 + $0x38] sm:$0xf]
        %v3341 = vld [vmem:[%s3 + $0x3c] sm:$0xf]
        %v3358 = vunpack.c.l.b16 %v3326
        %v3359 = vunpack.c.l.b16 %v3327
        %v3360 = vunpack.c.l.b16 %v3328
        %v3361 = vunpack.c.l.b16 %v3329
        %v3362 = vunpack.c.l.b16 %v3330
        %v3363 = vunpack.c.l.b16 %v3331
        %v3364 = vunpack.c.l.b16 %v3332
        %v3365 = vunpack.c.l.b16 %v3333
        %v3366 = vunpack.c.l.b16 %v3334
        %v3367 = vunpack.c.l.b16 %v3335
        %v3368 = vunpack.c.l.b16 %v3336
        %v3369 = vunpack.c.l.b16 %v3337
        %v3370 = vunpack.c.l.b16 %v3338
        %v3371 = vunpack.c.l.b16 %v3339
        %v3372 = vunpack.c.l.b16 %v3340
        %v3373 = vunpack.c.l.b16 %v3341
        %v3374 = vpack.c.b16 %v3359, %v3358
        %v3375 = vpack.c.b16 %v3361, %v3360
        %v3376 = vpack.c.b16 %v3363, %v3362
        %v3377 = vpack.c.b16 %v3365, %v3364
        %v3378 = vpack.c.b16 %v3367, %v3366
        %v3379 = vpack.c.b16 %v3369, %v3368
        %v3380 = vpack.c.b16 %v3371, %v3370
        %v3381 = vpack.c.b16 %v3373, %v3372
        %3390 = vmatprep.subr.bf16.mxu0 0
        %3391 = vmatpush1.bf16.msra.mxu0 %v3374
        %3392 = vmatprep.subr.bf16.mxu0 0
        %3393 = vmatpush1.bf16.msra.mxu0 %v3375
        %3394 = vmatprep.subr.bf16.mxu0 0
        %3395 = vmatpush1.bf16.msra.mxu0 %v3376
        %3396 = vmatprep.subr.bf16.mxu0 0
        %3397 = vmatpush1.bf16.msra.mxu0 %v3377
        %3398 = vmatprep.subr.bf16.mxu0 0
        %3399 = vmatpush1.bf16.msra.mxu0 %v3378
        %3400 = vmatprep.subr.bf16.mxu0 0
        %3401 = vmatpush1.bf16.msra.mxu0 %v3379
        %3402 = vmatprep.subr.bf16.mxu0 0
        %3403 = vmatpush1.bf16.msra.mxu0 %v3380
        %3404 = vmatprep.subr.bf16.mxu0 0
        %3405 = vmatpush1.bf16.msra.mxu0 %v3381
        %3406 = vmatprep.subr.bf16.mxu0 0
        %3407 = vmatpush1.bf16.msra.mxu0 0
        %3408 = vmatprep.subr.bf16.mxu0 0
        %3409 = vmatpush1.bf16.msra.mxu0 0
        %3410 = vmatprep.subr.bf16.mxu0 0
        %3411 = vmatpush1.bf16.msra.mxu0 0
        %3412 = vmatprep.subr.bf16.mxu0 0
        %3413 = vmatpush1.bf16.msra.mxu0 0
        %3414 = vmatprep.subr.bf16.mxu0 0
        %3415 = vmatpush1.bf16.msra.mxu0 0
        %3416 = vmatprep.subr.bf16.mxu0 0
        %3417 = vmatpush1.bf16.msra.mxu0 0
        %3418 = vmatprep.subr.bf16.mxu0 0
        %3419 = vmatpush1.bf16.msra.mxu0 0
        %3420 = vmatprep.subr.bf16.mxu0 0
        %3421 = vmatpush1.bf16.msra.mxu0 0
        %3422 = vmatprep.mubr.bf16.mxu0 0
        %3423 = vmatmul.mubr.bf16.gmra.mrb[0].mxu0 %v3198
        %v3424 = vpop.f32.mrb[0].mxu0
        %v3425 = vadd.f32 %v1403, %v3424
        %v3426 = vpop.f32.mrb[0].mxu0
        %v3427 = vpop.f32.mrb[0].mxu0
        %v3428 = vadd.f32 %v1407, %v3427
        %v3429 = vpop.f32.mrb[0].mxu0
        %3430 = vmatprep.mubr.bf16.mxu0 0
        %3431 = vmatmul.mubr.bf16.gmra.mrb[0].mxu0 %v3199
        %v3432 = vpop.f32.mrb[0].mxu0
        %v3433 = vadd.f32 %v1413, %v3432
        %v3434 = vpop.f32.mrb[0].mxu0
        %v3435 = vpop.f32.mrb[0].mxu0
        %v3436 = vadd.f32 %v1417, %v3435
        %v3437 = vpop.f32.mrb[0].mxu0
        %3438 = vmatprep.mubr.bf16.mxu0 0
        %3439 = vmatmul.mubr.bf16.gmra.mrb[0].mxu0 %v3200
        %v3440 = vpop.f32.mrb[0].mxu0
        %v3441 = vadd.f32 %v1423, %v3440
        %v3442 = vpop.f32.mrb[0].mxu0
        %v3443 = vpop.f32.mrb[0].mxu0
        %v3444 = vadd.f32 %v1427, %v3443
        %v3445 = vpop.f32.mrb[0].mxu0
        %3446 = vmatprep.mubr.bf16.mxu0 0
        %3447 = vmatmul.mubr.bf16.gmra.mrb[0].mxu0 %v3201
        %v3448 = vpop.f32.mrb[0].mxu0
        %v3449 = vadd.f32 %v1433, %v3448
        %v3450 = vpop.f32.mrb[0].mxu0
        %v3451 = vpop.f32.mrb[0].mxu0
        %v3452 = vadd.f32 %v1437, %v3451
        %v3453 = vpop.f32.mrb[0].mxu0
        %3454 = vmatprep.mubr.bf16.mxu0 0
        %3455 = vmatmul.mubr.bf16.gmra.mrb[0].mxu0 %v3202
        %v3456 = vpop.f32.mrb[0].mxu0
        %v3457 = vadd.f32 %v1443, %v3456
        %v3458 = vpop.f32.mrb[0].mxu0
        %v3459 = vpop.f32.mrb[0].mxu0
        %v3460 = vadd.f32 %v1447, %v3459
        %v3461 = vpop.f32.mrb[0].mxu0
        %3462 = vmatprep.mubr.bf16.mxu0 0
        %3463 = vmatmul.mubr.bf16.gmra.mrb[0].mxu0 %v3203
        %v3464 = vpop.f32.mrb[0].mxu0
        %v3465 = vadd.f32 %v1453, %v3464
        %v3466 = vpop.f32.mrb[0].mxu0
        %v3467 = vpop.f32.mrb[0].mxu0
        %v3468 = vadd.f32 %v1457, %v3467
        %v3469 = vpop.f32.mrb[0].mxu0
        %3470 = vmatprep.mubr.bf16.mxu0 0
        %3471 = vmatmul.mubr.bf16.gmra.mrb[0].mxu0 %v3204
        %v3472 = vpop.f32.mrb[0].mxu0
        %v3473 = vadd.f32 %v1463, %v3472
        %v3474 = vpop.f32.mrb[0].mxu0
        %v3475 = vpop.f32.mrb[0].mxu0
        %v3476 = vadd.f32 %v1467, %v3475
        %v3477 = vpop.f32.mrb[0].mxu0
        %3478 = vmatprep.mubr.bf16.mxu0 0
        %3479 = vmatmul.mubr.bf16.gmra.mrb[0].mxu0 %v3205
        %v3480 = vpop.f32.mrb[0].mxu0
        %v3481 = vadd.f32 %v1473, %v3480
        %v3482 = vpop.f32.mrb[0].mxu0
        %v3483 = vpop.f32.mrb[0].mxu0
        %v3484 = vadd.f32 %v1477, %v3483
        %v3485 = vpop.f32.mrb[0].mxu0
        %3486 = vmatprep.mubr.bf16.mxu0 0
        %3487 = vmatmul.mubr.bf16.gmra.mrb[0].mxu0 %v3206
        %v3488 = vpop.f32.mrb[0].mxu0
        %v3489 = vadd.f32 %v1483, %v3488
        %v3490 = vpop.f32.mrb[0].mxu0
        %v3491 = vpop.f32.mrb[0].mxu0
        %v3492 = vadd.f32 %v1487, %v3491
        %v3493 = vpop.f32.mrb[0].mxu0
        %3494 = vmatprep.mubr.bf16.mxu0 0
        %3495 = vmatmul.mubr.bf16.gmra.mrb[0].mxu0 %v3207
        %v3496 = vpop.f32.mrb[0].mxu0
        %v3497 = vadd.f32 %v1493, %v3496
        %v3498 = vpop.f32.mrb[0].mxu0
        %v3499 = vpop.f32.mrb[0].mxu0
        %v3500 = vadd.f32 %v1497, %v3499
        %v3501 = vpop.f32.mrb[0].mxu0
        %3502 = vmatprep.mubr.bf16.mxu0 0
        %3503 = vmatmul.mubr.bf16.gmra.mrb[0].mxu0 %v3208
        %v3504 = vpop.f32.mrb[0].mxu0
        %v3505 = vadd.f32 %v1503, %v3504
        %v3506 = vpop.f32.mrb[0].mxu0
        %v3507 = vpop.f32.mrb[0].mxu0
        %v3508 = vadd.f32 %v1507, %v3507
        %v3509 = vpop.f32.mrb[0].mxu0
        %3510 = vmatprep.mubr.bf16.mxu0 0
        %3511 = vmatmul.mubr.bf16.gmra.mrb[0].mxu0 %v3209
        %v3512 = vpop.f32.mrb[0].mxu0
        %v3513 = vadd.f32 %v1513, %v3512
        %v3514 = vpop.f32.mrb[0].mxu0
        %v3515 = vpop.f32.mrb[0].mxu0
        %v3516 = vadd.f32 %v1517, %v3515
        %v3517 = vpop.f32.mrb[0].mxu0
        %3518 = vmatprep.mubr.bf16.mxu0 0
        %3519 = vmatmul.mubr.bf16.gmra.mrb[0].mxu0 %v3210
        %v3520 = vpop.f32.mrb[0].mxu0
        %v3521 = vadd.f32 %v1523, %v3520
        %v3522 = vpop.f32.mrb[0].mxu0
        %v3523 = vpop.f32.mrb[0].mxu0
        %v3524 = vadd.f32 %v1527, %v3523
        %v3525 = vpop.f32.mrb[0].mxu0
        %3526 = vmatprep.mubr.bf16.mxu0 0
        %3527 = vmatmul.mubr.bf16.gmra.mrb[0].mxu0 %v3211
        %v3528 = vpop.f32.mrb[0].mxu0
        %v3529 = vadd.f32 %v1533, %v3528
        %v3530 = vpop.f32.mrb[0].mxu0
        %v3531 = vpop.f32.mrb[0].mxu0
        %v3532 = vadd.f32 %v1537, %v3531
        %v3533 = vpop.f32.mrb[0].mxu0
        %3534 = vmatprep.mubr.bf16.mxu0 0
        %3535 = vmatmul.mubr.bf16.gmra.mrb[0].mxu0 %v3212
        %v3536 = vpop.f32.mrb[0].mxu0
        %v3537 = vadd.f32 %v1543, %v3536
        %v3538 = vpop.f32.mrb[0].mxu0
        %v3539 = vpop.f32.mrb[0].mxu0
        %v3540 = vadd.f32 %v1547, %v3539
        %v3541 = vpop.f32.mrb[0].mxu0
        %3542 = vmatprep.mubr.bf16.mxu0 0
        %3543 = vmatmul.mubr.bf16.gmra.mrb[0].mxu0 %v3213
        %v3544 = vpop.f32.mrb[0].mxu0
        %v3545 = vadd.f32 %v1553, %v3544
        %v3546 = vpop.f32.mrb[0].mxu0
        %v3547 = vpop.f32.mrb[0].mxu0
        %v3548 = vadd.f32 %v1557, %v3547
        %v3549 = vpop.f32.mrb[0].mxu0
        %3550 = vmatprep.mubr.bf16.mxu0 0
        %3551 = vmatmul.mubr.bf16.gmra.mrb[0].mxu0 %v3214
        %v3552 = vpop.f32.mrb[0].mxu0
        %v3553 = vadd.f32 %v1563, %v3552
        %v3554 = vpop.f32.mrb[0].mxu0
        %v3555 = vpop.f32.mrb[0].mxu0
        %v3556 = vadd.f32 %v1567, %v3555
        %v3557 = vpop.f32.mrb[0].mxu0
        %3558 = vmatprep.mubr.bf16.mxu0 0
        %3559 = vmatmul.mubr.bf16.gmra.mrb[0].mxu0 %v3215
        %v3560 = vpop.f32.mrb[0].mxu0
        %v3561 = vadd.f32 %v1573, %v3560
        %v3562 = vpop.f32.mrb[0].mxu0
        %v3563 = vpop.f32.mrb[0].mxu0
        %v3564 = vadd.f32 %v1577, %v3563
        %v3565 = vpop.f32.mrb[0].mxu0
        %3566 = vmatprep.mubr.bf16.mxu0 0
        %3567 = vmatmul.mubr.bf16.gmra.mrb[0].mxu0 %v3216
        %v3568 = vpop.f32.mrb[0].mxu0
        %v3569 = vadd.f32 %v1583, %v3568
        %v3570 = vpop.f32.mrb[0].mxu0
        %v3571 = vpop.f32.mrb[0].mxu0
        %v3572 = vadd.f32 %v1587, %v3571
        %v3573 = vpop.f32.mrb[0].mxu0
        %3574 = vmatprep.mubr.bf16.mxu0 0
        %3575 = vmatmul.mubr.bf16.gmra.mrb[0].mxu0 %v3217
        %v3576 = vpop.f32.mrb[0].mxu0
        %v3577 = vadd.f32 %v1593, %v3576
        %v3578 = vpop.f32.mrb[0].mxu0
        %v3579 = vpop.f32.mrb[0].mxu0
        %v3580 = vadd.f32 %v1597, %v3579
        %v3581 = vpop.f32.mrb[0].mxu0
        %3582 = vmatprep.mubr.bf16.mxu0 0
        %3583 = vmatmul.mubr.bf16.gmra.mrb[0].mxu0 %v3218
        %v3584 = vpop.f32.mrb[0].mxu0
        %v3585 = vadd.f32 %v1603, %v3584
        %v3586 = vpop.f32.mrb[0].mxu0
        %v3587 = vpop.f32.mrb[0].mxu0
        %v3588 = vadd.f32 %v1607, %v3587
        %v3589 = vpop.f32.mrb[0].mxu0
        %3590 = vmatprep.mubr.bf16.mxu0 0
        %3591 = vmatmul.mubr.bf16.gmra.mrb[0].mxu0 %v3219
        %v3592 = vpop.f32.mrb[0].mxu0
        %v3593 = vadd.f32 %v1613, %v3592
        %v3594 = vpop.f32.mrb[0].mxu0
        %v3595 = vpop.f32.mrb[0].mxu0
        %v3596 = vadd.f32 %v1617, %v3595
        %v3597 = vpop.f32.mrb[0].mxu0
        %3598 = vmatprep.mubr.bf16.mxu0 0
        %3599 = vmatmul.mubr.bf16.gmra.mrb[0].mxu0 %v3220
        %v3600 = vpop.f32.mrb[0].mxu0
        %v3601 = vadd.f32 %v1623, %v3600
        %v3602 = vpop.f32.mrb[0].mxu0
        %v3603 = vpop.f32.mrb[0].mxu0
        %v3604 = vadd.f32 %v1627, %v3603
        %v3605 = vpop.f32.mrb[0].mxu0
        %3606 = vmatprep.mubr.bf16.mxu0 0
        %3607 = vmatmul.mubr.bf16.gmra.mrb[0].mxu0 %v3221
        %v3608 = vpop.f32.mrb[0].mxu0
        %v3609 = vadd.f32 %v1633, %v3608
        %v3610 = vpop.f32.mrb[0].mxu0
        %v3611 = vpop.f32.mrb[0].mxu0
        %v3612 = vadd.f32 %v1637, %v3611
        %v3613 = vpop.f32.mrb[0].mxu0
        %3614 = vmatprep.mubr.bf16.mxu0 0
        %3615 = vmatmul.mubr.bf16.gmra.mrb[0].mxu0 %v3222
        %v3616 = vpop.f32.mrb[0].mxu0
        %v3617 = vadd.f32 %v1643, %v3616
        %v3618 = vpop.f32.mrb[0].mxu0
        %v3619 = vpop.f32.mrb[0].mxu0
        %v3620 = vadd.f32 %v1647, %v3619
        %v3621 = vpop.f32.mrb[0].mxu0
        %3622 = vmatprep.mubr.bf16.mxu0 0
        %3623 = vmatmul.mubr.bf16.gmra.mrb[0].mxu0 %v3223
        %v3624 = vpop.f32.mrb[0].mxu0
        %v3625 = vadd.f32 %v1653, %v3624
        %v3626 = vpop.f32.mrb[0].mxu0
        %v3627 = vpop.f32.mrb[0].mxu0
        %v3628 = vadd.f32 %v1657, %v3627
        %v3629 = vpop.f32.mrb[0].mxu0
        %3630 = vmatprep.mubr.bf16.mxu0 0
        %3631 = vmatmul.mubr.bf16.gmra.mrb[0].mxu0 %v3224
        %v3632 = vpop.f32.mrb[0].mxu0
        %v3633 = vadd.f32 %v1663, %v3632
        %v3634 = vpop.f32.mrb[0].mxu0
        %v3635 = vpop.f32.mrb[0].mxu0
        %v3636 = vadd.f32 %v1667, %v3635
        %v3637 = vpop.f32.mrb[0].mxu0
        %3638 = vmatprep.mubr.bf16.mxu0 0
        %3639 = vmatmul.mubr.bf16.gmra.mrb[0].mxu0 %v3225
        %v3640 = vpop.f32.mrb[0].mxu0
        %v3641 = vadd.f32 %v1673, %v3640
        %v3642 = vpop.f32.mrb[0].mxu0
        %v3643 = vpop.f32.mrb[0].mxu0
        %v3644 = vadd.f32 %v1677, %v3643
        %v3645 = vpop.f32.mrb[0].mxu0
        %3646 = vmatprep.mubr.bf16.mxu0 0
        %3647 = vmatmul.mubr.bf16.gmra.mrb[0].mxu0 %v3226
        %v3648 = vpop.f32.mrb[0].mxu0
        %v3649 = vadd.f32 %v1683, %v3648
        %v3650 = vpop.f32.mrb[0].mxu0
        %v3651 = vpop.f32.mrb[0].mxu0
        %v3652 = vadd.f32 %v1687, %v3651
        %v3653 = vpop.f32.mrb[0].mxu0
        %3654 = vmatprep.mubr.bf16.mxu0 0
        %3655 = vmatmul.mubr.bf16.gmra.mrb[0].mxu0 %v3227
        %v3656 = vpop.f32.mrb[0].mxu0
        %v3657 = vadd.f32 %v1693, %v3656
        %v3658 = vpop.f32.mrb[0].mxu0
        %v3659 = vpop.f32.mrb[0].mxu0
        %v3660 = vadd.f32 %v1697, %v3659
        %v3661 = vpop.f32.mrb[0].mxu0
        %3662 = vmatprep.mubr.bf16.mxu0 0
        %3663 = vmatmul.mubr.bf16.gmra.mrb[0].mxu0 %v3228
        %v3664 = vpop.f32.mrb[0].mxu0
        %v3665 = vadd.f32 %v1703, %v3664
        %v3666 = vpop.f32.mrb[0].mxu0
        %v3667 = vpop.f32.mrb[0].mxu0
        %v3668 = vadd.f32 %v1707, %v3667
        %v3669 = vpop.f32.mrb[0].mxu0
        %3670 = vmatprep.mubr.bf16.mxu0 0
        %3671 = vmatmul.mubr.bf16.gmra.mrb[0].mxu0 %v3229
        %v3672 = vpop.f32.mrb[0].mxu0
        %v3673 = vadd.f32 %v1713, %v3672
        %v3674 = vpop.f32.mrb[0].mxu0
        %v3675 = vpop.f32.mrb[0].mxu0
        %v3676 = vadd.f32 %v1717, %v3675
        %v3677 = vpop.f32.mrb[0].mxu0
        %3678 = vmatprep.mubr.bf16.mxu0 0
        %3679 = vmatmul.mubr.bf16.gmra.mrb[0].mxu0 %v3230
        %v3680 = vpop.f32.mrb[0].mxu0
        %v3681 = vadd.f32 %v1723, %v3680
        %v3682 = vpop.f32.mrb[0].mxu0
        %v3683 = vpop.f32.mrb[0].mxu0
        %v3684 = vadd.f32 %v1727, %v3683
        %v3685 = vpop.f32.mrb[0].mxu0
        %3686 = vmatprep.mubr.bf16.mxu0 0
        %3687 = vmatmul.mubr.bf16.gmra.mrb[0].mxu0 %v3231
        %v3688 = vpop.f32.mrb[0].mxu0
        %v3689 = vadd.f32 %v1733, %v3688
        %v3690 = vpop.f32.mrb[0].mxu0
        %v3691 = vpop.f32.mrb[0].mxu0
        %v3692 = vadd.f32 %v1737, %v3691
        %v3693 = vpop.f32.mrb[0].mxu0
        %3694 = vmatprep.mubr.bf16.mxu0 0
        %3695 = vmatmul.mubr.bf16.gmra.mrb[0].mxu0 %v3232
        %v3696 = vpop.f32.mrb[0].mxu0
        %v3697 = vadd.f32 %v1743, %v3696
        %v3698 = vpop.f32.mrb[0].mxu0
        %v3699 = vpop.f32.mrb[0].mxu0
        %v3700 = vadd.f32 %v1747, %v3699
        %v3701 = vpop.f32.mrb[0].mxu0
        %3702 = vmatprep.mubr.bf16.mxu0 0
        %3703 = vmatmul.mubr.bf16.gmra.mrb[0].mxu0 %v3233
        %v3704 = vpop.f32.mrb[0].mxu0
        %v3705 = vadd.f32 %v1753, %v3704
        %v3706 = vpop.f32.mrb[0].mxu0
        %v3707 = vpop.f32.mrb[0].mxu0
        %v3708 = vadd.f32 %v1757, %v3707
        %v3709 = vpop.f32.mrb[0].mxu0
        %3710 = vmatprep.mubr.bf16.mxu0 0
        %3711 = vmatmul.mubr.bf16.gmra.mrb[0].mxu0 %v3234
        %v3712 = vpop.f32.mrb[0].mxu0
        %v3713 = vadd.f32 %v1763, %v3712
        %v3714 = vpop.f32.mrb[0].mxu0
        %v3715 = vpop.f32.mrb[0].mxu0
        %v3716 = vadd.f32 %v1767, %v3715
        %v3717 = vpop.f32.mrb[0].mxu0
        %3718 = vmatprep.mubr.bf16.mxu0 0
        %3719 = vmatmul.mubr.bf16.gmra.mrb[0].mxu0 %v3235
        %v3720 = vpop.f32.mrb[0].mxu0
        %v3721 = vadd.f32 %v1773, %v3720
        %v3722 = vpop.f32.mrb[0].mxu0
        %v3723 = vpop.f32.mrb[0].mxu0
        %v3724 = vadd.f32 %v1777, %v3723
        %v3725 = vpop.f32.mrb[0].mxu0
        %3726 = vmatprep.mubr.bf16.mxu0 0
        %3727 = vmatmul.mubr.bf16.gmra.mrb[0].mxu0 %v3236
        %v3728 = vpop.f32.mrb[0].mxu0
        %v3729 = vadd.f32 %v1783, %v3728
        %v3730 = vpop.f32.mrb[0].mxu0
        %v3731 = vpop.f32.mrb[0].mxu0
        %v3732 = vadd.f32 %v1787, %v3731
        %v3733 = vpop.f32.mrb[0].mxu0
        %3734 = vmatprep.mubr.bf16.mxu0 0
        %3735 = vmatmul.mubr.bf16.gmra.mrb[0].mxu0 %v3237
        %v3736 = vpop.f32.mrb[0].mxu0
        %v3737 = vadd.f32 %v1793, %v3736
        %v3738 = vpop.f32.mrb[0].mxu0
        %v3739 = vpop.f32.mrb[0].mxu0
        %v3740 = vadd.f32 %v1797, %v3739
        %v3741 = vpop.f32.mrb[0].mxu0
        %3742 = vmatprep.mubr.bf16.mxu0 0
        %3743 = vmatmul.mubr.bf16.gmra.mrb[0].mxu0 %v3238
        %v3744 = vpop.f32.mrb[0].mxu0
        %v3745 = vadd.f32 %v1803, %v3744
        %v3746 = vpop.f32.mrb[0].mxu0
        %v3747 = vpop.f32.mrb[0].mxu0
        %v3748 = vadd.f32 %v1807, %v3747
        %v3749 = vpop.f32.mrb[0].mxu0
        %3750 = vmatprep.mubr.bf16.mxu0 0
        %3751 = vmatmul.mubr.bf16.gmra.mrb[0].mxu0 %v3239
        %v3752 = vpop.f32.mrb[0].mxu0
        %v3753 = vadd.f32 %v1813, %v3752
        %v3754 = vpop.f32.mrb[0].mxu0
        %v3755 = vpop.f32.mrb[0].mxu0
        %v3756 = vadd.f32 %v1817, %v3755
        %v3757 = vpop.f32.mrb[0].mxu0
        %3758 = vmatprep.mubr.bf16.mxu0 0
        %3759 = vmatmul.mubr.bf16.gmra.mrb[0].mxu0 %v3240
        %v3760 = vpop.f32.mrb[0].mxu0
        %v3761 = vadd.f32 %v1823, %v3760
        %v3762 = vpop.f32.mrb[0].mxu0
        %v3763 = vpop.f32.mrb[0].mxu0
        %v3764 = vadd.f32 %v1827, %v3763
        %v3765 = vpop.f32.mrb[0].mxu0
        %3766 = vmatprep.mubr.bf16.mxu0 0
        %3767 = vmatmul.mubr.bf16.gmra.mrb[0].mxu0 %v3241
        %v3768 = vpop.f32.mrb[0].mxu0
        %v3769 = vadd.f32 %v1833, %v3768
        %v3770 = vpop.f32.mrb[0].mxu0
        %v3771 = vpop.f32.mrb[0].mxu0
        %v3772 = vadd.f32 %v1837, %v3771
        %v3773 = vpop.f32.mrb[0].mxu0
        %3774 = vmatprep.mubr.bf16.mxu0 0
        %3775 = vmatmul.mubr.bf16.gmra.mrb[0].mxu0 %v3242
        %v3776 = vpop.f32.mrb[0].mxu0
        %v3777 = vadd.f32 %v1843, %v3776
        %v3778 = vpop.f32.mrb[0].mxu0
        %v3779 = vpop.f32.mrb[0].mxu0
        %v3780 = vadd.f32 %v1847, %v3779
        %v3781 = vpop.f32.mrb[0].mxu0
        %3782 = vmatprep.mubr.bf16.mxu0 0
        %3783 = vmatmul.mubr.bf16.gmra.mrb[0].mxu0 %v3243
        %v3784 = vpop.f32.mrb[0].mxu0
        %v3785 = vadd.f32 %v1853, %v3784
        %v3786 = vpop.f32.mrb[0].mxu0
        %v3787 = vpop.f32.mrb[0].mxu0
        %v3788 = vadd.f32 %v1857, %v3787
        %v3789 = vpop.f32.mrb[0].mxu0
        %3790 = vmatprep.mubr.bf16.mxu0 0
        %3791 = vmatmul.mubr.bf16.gmra.mrb[0].mxu0 %v3244
        %v3792 = vpop.f32.mrb[0].mxu0
        %v3793 = vadd.f32 %v1863, %v3792
        %v3794 = vpop.f32.mrb[0].mxu0
        %v3795 = vpop.f32.mrb[0].mxu0
        %v3796 = vadd.f32 %v1867, %v3795
        %v3797 = vpop.f32.mrb[0].mxu0
        %3798 = vmatprep.mubr.bf16.mxu0 0
        %3799 = vmatmul.mubr.bf16.gmra.mrb[0].mxu0 %v3245
        %v3800 = vpop.f32.mrb[0].mxu0
        %v3801 = vadd.f32 %v1873, %v3800
        %v3802 = vpop.f32.mrb[0].mxu0
        %v3803 = vpop.f32.mrb[0].mxu0
        %v3804 = vadd.f32 %v1877, %v3803
        %v3805 = vpop.f32.mrb[0].mxu0
        %3806 = vmatprep.mubr.bf16.mxu0 0
        %3807 = vmatmul.mubr.bf16.gmra.mrb[0].mxu0 %v3246
        %v3808 = vpop.f32.mrb[0].mxu0
        %v3809 = vadd.f32 %v1883, %v3808
        %v3810 = vpop.f32.mrb[0].mxu0
        %v3811 = vpop.f32.mrb[0].mxu0
        %v3812 = vadd.f32 %v1887, %v3811
        %v3813 = vpop.f32.mrb[0].mxu0
        %3814 = vmatprep.mubr.bf16.mxu0 0
        %3815 = vmatmul.mubr.bf16.gmra.mrb[0].mxu0 %v3247
        %v3816 = vpop.f32.mrb[0].mxu0
        %v3817 = vadd.f32 %v1893, %v3816
        %v3818 = vpop.f32.mrb[0].mxu0
        %v3819 = vpop.f32.mrb[0].mxu0
        %v3820 = vadd.f32 %v1897, %v3819
        %v3821 = vpop.f32.mrb[0].mxu0
        %3822 = vmatprep.mubr.bf16.mxu0 0
        %3823 = vmatmul.mubr.bf16.gmra.mrb[0].mxu0 %v3248
        %v3824 = vpop.f32.mrb[0].mxu0
        %v3825 = vadd.f32 %v1903, %v3824
        %v3826 = vpop.f32.mrb[0].mxu0
        %v3827 = vpop.f32.mrb[0].mxu0
        %v3828 = vadd.f32 %v1907, %v3827
        %v3829 = vpop.f32.mrb[0].mxu0
        %3830 = vmatprep.mubr.bf16.mxu0 0
        %3831 = vmatmul.mubr.bf16.gmra.mrb[0].mxu0 %v3249
        %v3832 = vpop.f32.mrb[0].mxu0
        %v3833 = vadd.f32 %v1913, %v3832
        %v3834 = vpop.f32.mrb[0].mxu0
        %v3835 = vpop.f32.mrb[0].mxu0
        %v3836 = vadd.f32 %v1917, %v3835
        %v3837 = vpop.f32.mrb[0].mxu0
        %3838 = vmatprep.mubr.bf16.mxu0 0
        %3839 = vmatmul.mubr.bf16.gmra.mrb[0].mxu0 %v3250
        %v3840 = vpop.f32.mrb[0].mxu0
        %v3841 = vadd.f32 %v1923, %v3840
        %v3842 = vpop.f32.mrb[0].mxu0
        %v3843 = vpop.f32.mrb[0].mxu0
        %v3844 = vadd.f32 %v1927, %v3843
        %v3845 = vpop.f32.mrb[0].mxu0
        %3846 = vmatprep.mubr.bf16.mxu0 0
        %3847 = vmatmul.mubr.bf16.gmra.mrb[0].mxu0 %v3251
        %v3848 = vpop.f32.mrb[0].mxu0
        %v3849 = vadd.f32 %v1933, %v3848
        %v3850 = vpop.f32.mrb[0].mxu0
        %v3851 = vpop.f32.mrb[0].mxu0
        %v3852 = vadd.f32 %v1937, %v3851
        %v3853 = vpop.f32.mrb[0].mxu0
        %3854 = vmatprep.mubr.bf16.mxu0 0
        %3855 = vmatmul.mubr.bf16.gmra.mrb[0].mxu0 %v3252
        %v3856 = vpop.f32.mrb[0].mxu0
        %v3857 = vadd.f32 %v1943, %v3856
        %v3858 = vpop.f32.mrb[0].mxu0
        %v3859 = vpop.f32.mrb[0].mxu0
        %v3860 = vadd.f32 %v1947, %v3859
        %v3861 = vpop.f32.mrb[0].mxu0
        %3862 = vmatprep.mubr.bf16.mxu0 0
        %3863 = vmatmul.mubr.bf16.gmra.mrb[0].mxu0 %v3253
        %v3864 = vpop.f32.mrb[0].mxu0
        %v3865 = vadd.f32 %v1953, %v3864
        %v3866 = vpop.f32.mrb[0].mxu0
        %v3867 = vpop.f32.mrb[0].mxu0
        %v3868 = vadd.f32 %v1957, %v3867
        %v3869 = vpop.f32.mrb[0].mxu0
        %3870 = vmatprep.mubr.bf16.mxu0 0
        %3871 = vmatmul.mubr.bf16.gmra.mrb[0].mxu0 %v3254
        %v3872 = vpop.f32.mrb[0].mxu0
        %v3873 = vadd.f32 %v1963, %v3872
        %v3874 = vpop.f32.mrb[0].mxu0
        %v3875 = vpop.f32.mrb[0].mxu0
        %v3876 = vadd.f32 %v1967, %v3875
        %v3877 = vpop.f32.mrb[0].mxu0
        %3878 = vmatprep.mubr.bf16.mxu0 0
        %3879 = vmatmul.mubr.bf16.gmra.mrb[0].mxu0 %v3255
        %v3880 = vpop.f32.mrb[0].mxu0
        %v3881 = vadd.f32 %v1973, %v3880
        %v3882 = vpop.f32.mrb[0].mxu0
        %v3883 = vpop.f32.mrb[0].mxu0
        %v3884 = vadd.f32 %v1977, %v3883
        %v3885 = vpop.f32.mrb[0].mxu0
        %3886 = vmatprep.mubr.bf16.mxu0 0
        %3887 = vmatmul.mubr.bf16.gmra.mrb[0].mxu0 %v3256
        %v3888 = vpop.f32.mrb[0].mxu0
        %v3889 = vadd.f32 %v1983, %v3888
        %v3890 = vpop.f32.mrb[0].mxu0
        %v3891 = vpop.f32.mrb[0].mxu0
        %v3892 = vadd.f32 %v1987, %v3891
        %v3893 = vpop.f32.mrb[0].mxu0
        %3894 = vmatprep.mubr.bf16.mxu0 0
        %3895 = vmatmul.mubr.bf16.gmra.mrb[0].mxu0 %v3257
        %v3896 = vpop.f32.mrb[0].mxu0
        %v3897 = vadd.f32 %v1993, %v3896
        %v3898 = vpop.f32.mrb[0].mxu0
        %v3899 = vpop.f32.mrb[0].mxu0
        %v3900 = vadd.f32 %v1997, %v3899
        %v3901 = vpop.f32.mrb[0].mxu0
        %3902 = vmatprep.mubr.bf16.mxu0 0
        %3903 = vmatmul.mubr.bf16.gmra.mrb[0].mxu0 %v3258
        %v3904 = vpop.f32.mrb[0].mxu0
        %v3905 = vadd.f32 %v2003, %v3904
        %v3906 = vpop.f32.mrb[0].mxu0
        %v3907 = vpop.f32.mrb[0].mxu0
        %v3908 = vadd.f32 %v2007, %v3907
        %v3909 = vpop.f32.mrb[0].mxu0
        %3910 = vmatprep.mubr.bf16.mxu0 0
        %3911 = vmatmul.mubr.bf16.gmra.mrb[0].mxu0 %v3259
        %v3912 = vpop.f32.mrb[0].mxu0
        %v3913 = vadd.f32 %v2013, %v3912
        %v3914 = vpop.f32.mrb[0].mxu0
        %v3915 = vpop.f32.mrb[0].mxu0
        %v3916 = vadd.f32 %v2017, %v3915
        %v3917 = vpop.f32.mrb[0].mxu0
        %3918 = vmatprep.mubr.bf16.mxu0 0
        %3919 = vmatmul.mubr.bf16.gmra.mrb[0].mxu0 %v3260
        %v3920 = vpop.f32.mrb[0].mxu0
        %v3921 = vadd.f32 %v2023, %v3920
        %v3922 = vpop.f32.mrb[0].mxu0
        %v3923 = vpop.f32.mrb[0].mxu0
        %v3924 = vadd.f32 %v2027, %v3923
        %v3925 = vpop.f32.mrb[0].mxu0
        %3926 = vmatprep.mubr.bf16.mxu0 0
        %3927 = vmatmul.mubr.bf16.gmra.mrb[0].mxu0 %v3261
        %v3928 = vpop.f32.mrb[0].mxu0
        %v3929 = vadd.f32 %v2033, %v3928
        %v3930 = vpop.f32.mrb[0].mxu0
        %v3931 = vpop.f32.mrb[0].mxu0
        %v3932 = vadd.f32 %v2037, %v3931
        %v3933 = vpop.f32.mrb[0].mxu0
        %3934 = vmatprep.mubr.bf16.mxu0 0
        %3935 = vmatmul.mubr.bf16.gmra.mrb[0].mxu0 %v3262
        %v3936 = vpop.f32.mrb[0].mxu0
        %v3937 = vadd.f32 %v2043, %v3936
        %v3938 = vpop.f32.mrb[0].mxu0
        %v3939 = vpop.f32.mrb[0].mxu0
        %v3940 = vadd.f32 %v2047, %v3939
        %v3941 = vpop.f32.mrb[0].mxu0
        %3942 = vmatprep.mubr.bf16.mxu0 0
        %3943 = vmatmul.mubr.bf16.gmra.mrb[0].mxu0 %v3263
        %v3944 = vpop.f32.mrb[0].mxu0
        %v3945 = vadd.f32 %v2053, %v3944
        %v3946 = vpop.f32.mrb[0].mxu0
        %v3947 = vpop.f32.mrb[0].mxu0
        %v3948 = vadd.f32 %v2057, %v3947
        %v3949 = vpop.f32.mrb[0].mxu0
        %3950 = vmatprep.mubr.bf16.mxu0 0
        %3951 = vmatmul.mubr.bf16.gmra.mrb[0].mxu0 %v3264
        %v3952 = vpop.f32.mrb[0].mxu0
        %v3953 = vadd.f32 %v2063, %v3952
        %v3954 = vpop.f32.mrb[0].mxu0
        %v3955 = vpop.f32.mrb[0].mxu0
        %v3956 = vadd.f32 %v2067, %v3955
        %v3957 = vpop.f32.mrb[0].mxu0
        %3958 = vmatprep.mubr.bf16.mxu0 0
        %3959 = vmatmul.mubr.bf16.gmra.mrb[0].mxu0 %v3265
        %v3960 = vpop.f32.mrb[0].mxu0
        %v3961 = vadd.f32 %v2073, %v3960
        %v3962 = vpop.f32.mrb[0].mxu0
        %v3963 = vpop.f32.mrb[0].mxu0
        %v3964 = vadd.f32 %v2077, %v3963
        %v3965 = vpop.f32.mrb[0].mxu0
        %3966 = vmatprep.mubr.bf16.mxu0 0
        %3967 = vmatmul.mubr.bf16.gmra.mrb[0].mxu0 %v3266
        %v3968 = vpop.f32.mrb[0].mxu0
        %v3969 = vadd.f32 %v2083, %v3968
        %v3970 = vpop.f32.mrb[0].mxu0
        %v3971 = vpop.f32.mrb[0].mxu0
        %v3972 = vadd.f32 %v2087, %v3971
        %v3973 = vpop.f32.mrb[0].mxu0
        %3974 = vmatprep.mubr.bf16.mxu0 0
        %3975 = vmatmul.mubr.bf16.gmra.mrb[0].mxu0 %v3267
        %v3976 = vpop.f32.mrb[0].mxu0
        %v3977 = vadd.f32 %v2093, %v3976
        %v3978 = vpop.f32.mrb[0].mxu0
        %v3979 = vpop.f32.mrb[0].mxu0
        %v3980 = vadd.f32 %v2097, %v3979
        %v3981 = vpop.f32.mrb[0].mxu0
        %3982 = vmatprep.mubr.bf16.mxu0 0
        %3983 = vmatmul.mubr.bf16.gmra.mrb[0].mxu0 %v3268
        %v3984 = vpop.f32.mrb[0].mxu0
        %v3985 = vadd.f32 %v2103, %v3984
        %v3986 = vpop.f32.mrb[0].mxu0
        %v3987 = vpop.f32.mrb[0].mxu0
        %v3988 = vadd.f32 %v2107, %v3987
        %v3989 = vpop.f32.mrb[0].mxu0
        %3990 = vmatprep.mubr.bf16.mxu0 0
        %3991 = vmatmul.mubr.bf16.gmra.mrb[0].mxu0 %v3269
        %v3992 = vpop.f32.mrb[0].mxu0
        %v3993 = vadd.f32 %v2113, %v3992
        %v3994 = vpop.f32.mrb[0].mxu0
        %v3995 = vpop.f32.mrb[0].mxu0
        %v3996 = vadd.f32 %v2117, %v3995
        %v3997 = vpop.f32.mrb[0].mxu0
        %3998 = vmatprep.mubr.bf16.mxu0 0
        %3999 = vmatmul.mubr.bf16.gmra.mrb[0].mxu0 %v3270
        %v4000 = vpop.f32.mrb[0].mxu0
        %v4001 = vadd.f32 %v2123, %v4000
        %v4002 = vpop.f32.mrb[0].mxu0
        %v4003 = vpop.f32.mrb[0].mxu0
        %v4004 = vadd.f32 %v2127, %v4003
        %v4005 = vpop.f32.mrb[0].mxu0
        %4006 = vmatprep.mubr.bf16.mxu0 0
        %4007 = vmatmul.mubr.bf16.gmra.mrb[0].mxu0 %v3271
        %v4008 = vpop.f32.mrb[0].mxu0
        %v4009 = vadd.f32 %v2133, %v4008
        %v4010 = vpop.f32.mrb[0].mxu0
        %v4011 = vpop.f32.mrb[0].mxu0
        %v4012 = vadd.f32 %v2137, %v4011
        %v4013 = vpop.f32.mrb[0].mxu0
        %4014 = vmatprep.mubr.bf16.mxu0 0
        %4015 = vmatmul.mubr.bf16.gmra.mrb[0].mxu0 %v3272
        %v4016 = vpop.f32.mrb[0].mxu0
        %v4017 = vadd.f32 %v2143, %v4016
        %v4018 = vpop.f32.mrb[0].mxu0
        %v4019 = vpop.f32.mrb[0].mxu0
        %v4020 = vadd.f32 %v2147, %v4019
        %v4021 = vpop.f32.mrb[0].mxu0
        %4022 = vmatprep.mubr.bf16.mxu0 0
        %4023 = vmatmul.mubr.bf16.gmra.mrb[0].mxu0 %v3273
        %v4024 = vpop.f32.mrb[0].mxu0
        %v4025 = vadd.f32 %v2153, %v4024
        %v4026 = vpop.f32.mrb[0].mxu0
        %v4027 = vpop.f32.mrb[0].mxu0
        %v4028 = vadd.f32 %v2157, %v4027
        %v4029 = vpop.f32.mrb[0].mxu0
        %4030 = vmatprep.mubr.bf16.mxu0 0
        %4031 = vmatmul.mubr.bf16.gmra.mrb[0].mxu0 %v3274
        %v4032 = vpop.f32.mrb[0].mxu0
        %v4033 = vadd.f32 %v2163, %v4032
        %v4034 = vpop.f32.mrb[0].mxu0
        %v4035 = vpop.f32.mrb[0].mxu0
        %v4036 = vadd.f32 %v2167, %v4035
        %v4037 = vpop.f32.mrb[0].mxu0
        %4038 = vmatprep.mubr.bf16.mxu0 0
        %4039 = vmatmul.mubr.bf16.gmra.mrb[0].mxu0 %v3275
        %v4040 = vpop.f32.mrb[0].mxu0
        %v4041 = vadd.f32 %v2173, %v4040
        %v4042 = vpop.f32.mrb[0].mxu0
        %v4043 = vpop.f32.mrb[0].mxu0
        %v4044 = vadd.f32 %v2177, %v4043
        %v4045 = vpop.f32.mrb[0].mxu0
        %4046 = vmatprep.mubr.bf16.mxu0 0
        %4047 = vmatmul.mubr.bf16.gmra.mrb[0].mxu0 %v3276
        %v4048 = vpop.f32.mrb[0].mxu0
        %v4049 = vadd.f32 %v2183, %v4048
        %v4050 = vpop.f32.mrb[0].mxu0
        %v4051 = vpop.f32.mrb[0].mxu0
        %v4052 = vadd.f32 %v2187, %v4051
        %v4053 = vpop.f32.mrb[0].mxu0
        %4054 = vmatprep.mubr.bf16.mxu0 0
        %4055 = vmatmul.mubr.bf16.gmra.mrb[0].mxu0 %v3277
        %v4056 = vpop.f32.mrb[0].mxu0
        %v4057 = vadd.f32 %v2193, %v4056
        %v4058 = vpop.f32.mrb[0].mxu0
        %v4059 = vpop.f32.mrb[0].mxu0
        %v4060 = vadd.f32 %v2197, %v4059
        %v4061 = vpop.f32.mrb[0].mxu0
        %4062 = vmatprep.mubr.bf16.mxu0 0
        %4063 = vmatmul.mubr.bf16.gmra.mrb[0].mxu0 %v3278
        %v4064 = vpop.f32.mrb[0].mxu0
        %v4065 = vadd.f32 %v2203, %v4064
        %v4066 = vpop.f32.mrb[0].mxu0
        %v4067 = vpop.f32.mrb[0].mxu0
        %v4068 = vadd.f32 %v2207, %v4067
        %v4069 = vpop.f32.mrb[0].mxu0
        %4070 = vmatprep.mubr.bf16.mxu0 0
        %4071 = vmatmul.mubr.bf16.gmra.mrb[0].mxu0 %v3279
        %v4072 = vpop.f32.mrb[0].mxu0
        %v4073 = vadd.f32 %v2213, %v4072
        %v4074 = vpop.f32.mrb[0].mxu0
        %v4075 = vpop.f32.mrb[0].mxu0
        %v4076 = vadd.f32 %v2217, %v4075
        %v4077 = vpop.f32.mrb[0].mxu0
        %4078 = vmatprep.mubr.bf16.mxu0 0
        %4079 = vmatmul.mubr.bf16.gmra.mrb[0].mxu0 %v3280
        %v4080 = vpop.f32.mrb[0].mxu0
        %v4081 = vadd.f32 %v2223, %v4080
        %v4082 = vpop.f32.mrb[0].mxu0
        %v4083 = vpop.f32.mrb[0].mxu0
        %v4084 = vadd.f32 %v2227, %v4083
        %v4085 = vpop.f32.mrb[0].mxu0
        %4086 = vmatprep.mubr.bf16.mxu0 0
        %4087 = vmatmul.mubr.bf16.gmra.mrb[0].mxu0 %v3281
        %v4088 = vpop.f32.mrb[0].mxu0
        %v4089 = vadd.f32 %v2233, %v4088
        %v4090 = vpop.f32.mrb[0].mxu0
        %v4091 = vpop.f32.mrb[0].mxu0
        %v4092 = vadd.f32 %v2237, %v4091
        %v4093 = vpop.f32.mrb[0].mxu0
        %4094 = vmatprep.mubr.bf16.mxu0 0
        %4095 = vmatmul.mubr.bf16.gmra.mrb[0].mxu0 %v3282
        %v4096 = vpop.f32.mrb[0].mxu0
        %v4097 = vadd.f32 %v2243, %v4096
        %v4098 = vpop.f32.mrb[0].mxu0
        %v4099 = vpop.f32.mrb[0].mxu0
        %v4100 = vadd.f32 %v2247, %v4099
        %v4101 = vpop.f32.mrb[0].mxu0
        %4102 = vmatprep.mubr.bf16.mxu0 0
        %4103 = vmatmul.mubr.bf16.gmra.mrb[0].mxu0 %v3283
        %v4104 = vpop.f32.mrb[0].mxu0
        %v4105 = vadd.f32 %v2253, %v4104
        %v4106 = vpop.f32.mrb[0].mxu0
        %v4107 = vpop.f32.mrb[0].mxu0
        %v4108 = vadd.f32 %v2257, %v4107
        %v4109 = vpop.f32.mrb[0].mxu0
        %4110 = vmatprep.mubr.bf16.mxu0 0
        %4111 = vmatmul.mubr.bf16.gmra.mrb[0].mxu0 %v3284
        %v4112 = vpop.f32.mrb[0].mxu0
        %v4113 = vadd.f32 %v2263, %v4112
        %v4114 = vpop.f32.mrb[0].mxu0
        %v4115 = vpop.f32.mrb[0].mxu0
        %v4116 = vadd.f32 %v2267, %v4115
        %v4117 = vpop.f32.mrb[0].mxu0
        %4118 = vmatprep.mubr.bf16.mxu0 0
        %4119 = vmatmul.mubr.bf16.gmra.mrb[0].mxu0 %v3285
        %v4120 = vpop.f32.mrb[0].mxu0
        %v4121 = vadd.f32 %v2273, %v4120
        %v4122 = vpop.f32.mrb[0].mxu0
        %v4123 = vpop.f32.mrb[0].mxu0
        %v4124 = vadd.f32 %v2277, %v4123
        %v4125 = vpop.f32.mrb[0].mxu0
        %4126 = vmatprep.mubr.bf16.mxu0 0
        %4127 = vmatmul.mubr.bf16.gmra.mrb[0].mxu0 %v3286
        %v4128 = vpop.f32.mrb[0].mxu0
        %v4129 = vadd.f32 %v2283, %v4128
        %v4130 = vpop.f32.mrb[0].mxu0
        %v4131 = vpop.f32.mrb[0].mxu0
        %v4132 = vadd.f32 %v2287, %v4131
        %v4133 = vpop.f32.mrb[0].mxu0
        %4134 = vmatprep.mubr.bf16.mxu0 0
        %4135 = vmatmul.mubr.bf16.gmra.mrb[0].mxu0 %v3287
        %v4136 = vpop.f32.mrb[0].mxu0
        %v4137 = vadd.f32 %v2293, %v4136
        %v4138 = vpop.f32.mrb[0].mxu0
        %v4139 = vpop.f32.mrb[0].mxu0
        %v4140 = vadd.f32 %v2297, %v4139
        %v4141 = vpop.f32.mrb[0].mxu0
        %4142 = vmatprep.mubr.bf16.mxu0 0
        %4143 = vmatmul.mubr.bf16.gmra.mrb[0].mxu0 %v3288
        %v4144 = vpop.f32.mrb[0].mxu0
        %v4145 = vadd.f32 %v2303, %v4144
        %v4146 = vpop.f32.mrb[0].mxu0
        %v4147 = vpop.f32.mrb[0].mxu0
        %v4148 = vadd.f32 %v2307, %v4147
        %v4149 = vpop.f32.mrb[0].mxu0
        %4150 = vmatprep.mubr.bf16.mxu0 0
        %4151 = vmatmul.mubr.bf16.gmra.mrb[0].mxu0 %v3289
        %v4152 = vpop.f32.mrb[0].mxu0
        %v4153 = vadd.f32 %v2313, %v4152
        %v4154 = vpop.f32.mrb[0].mxu0
        %v4155 = vpop.f32.mrb[0].mxu0
        %v4156 = vadd.f32 %v2317, %v4155
        %v4157 = vpop.f32.mrb[0].mxu0
        %4158 = vmatprep.mubr.bf16.mxu0 0
        %4159 = vmatmul.mubr.bf16.gmra.mrb[0].mxu0 %v3290
        %v4160 = vpop.f32.mrb[0].mxu0
        %v4161 = vadd.f32 %v2323, %v4160
        %v4162 = vpop.f32.mrb[0].mxu0
        %v4163 = vpop.f32.mrb[0].mxu0
        %v4164 = vadd.f32 %v2327, %v4163
        %v4165 = vpop.f32.mrb[0].mxu0
        %4166 = vmatprep.mubr.bf16.mxu0 0
        %4167 = vmatmul.mubr.bf16.gmra.mrb[0].mxu0 %v3291
        %v4168 = vpop.f32.mrb[0].mxu0
        %v4169 = vadd.f32 %v2333, %v4168
        %v4170 = vpop.f32.mrb[0].mxu0
        %v4171 = vpop.f32.mrb[0].mxu0
        %v4172 = vadd.f32 %v2337, %v4171
        %v4173 = vpop.f32.mrb[0].mxu0
        %4174 = vmatprep.mubr.bf16.mxu0 0
        %4175 = vmatmul.mubr.bf16.gmra.mrb[0].mxu0 %v3292
        %v4176 = vpop.f32.mrb[0].mxu0
        %v4177 = vadd.f32 %v2343, %v4176
        %v4178 = vpop.f32.mrb[0].mxu0
        %v4179 = vpop.f32.mrb[0].mxu0
        %v4180 = vadd.f32 %v2347, %v4179
        %v4181 = vpop.f32.mrb[0].mxu0
        %4182 = vmatprep.mubr.bf16.mxu0 0
        %4183 = vmatmul.mubr.bf16.gmra.mrb[0].mxu0 %v3293
        %v4184 = vpop.f32.mrb[0].mxu0
        %v4185 = vadd.f32 %v2353, %v4184
        %v4186 = vpop.f32.mrb[0].mxu0
        %v4187 = vpop.f32.mrb[0].mxu0
        %v4188 = vadd.f32 %v2357, %v4187
        %v4189 = vpop.f32.mrb[0].mxu0
        %4190 = vmatprep.mubr.bf16.mxu0 0
        %4191 = vmatmul.mubr.bf16.gmra.mrb[0].mxu0 %v3294
        %v4192 = vpop.f32.mrb[0].mxu0
        %v4193 = vadd.f32 %v2363, %v4192
        %v4194 = vpop.f32.mrb[0].mxu0
        %v4195 = vpop.f32.mrb[0].mxu0
        %v4196 = vadd.f32 %v2367, %v4195
        %v4197 = vpop.f32.mrb[0].mxu0
        %4198 = vmatprep.mubr.bf16.mxu0 0
        %4199 = vmatmul.mubr.bf16.gmra.mrb[0].mxu0 %v3295
        %v4200 = vpop.f32.mrb[0].mxu0
        %v4201 = vadd.f32 %v2373, %v4200
        %v4202 = vpop.f32.mrb[0].mxu0
        %v4203 = vpop.f32.mrb[0].mxu0
        %v4204 = vadd.f32 %v2377, %v4203
        %v4205 = vpop.f32.mrb[0].mxu0
        %4206 = vmatprep.mubr.bf16.mxu0 0
        %4207 = vmatmul.mubr.bf16.gmra.mrb[0].mxu0 %v3296
        %v4208 = vpop.f32.mrb[0].mxu0
        %v4209 = vadd.f32 %v2383, %v4208
        %v4210 = vpop.f32.mrb[0].mxu0
        %v4211 = vpop.f32.mrb[0].mxu0
        %v4212 = vadd.f32 %v2387, %v4211
        %v4213 = vpop.f32.mrb[0].mxu0
        %4214 = vmatprep.mubr.bf16.mxu0 0
        %4215 = vmatmul.mubr.bf16.gmra.mrb[0].mxu0 %v3297
        %v4216 = vpop.f32.mrb[0].mxu0
        %v4217 = vadd.f32 %v2393, %v4216
        %v4218 = vpop.f32.mrb[0].mxu0
        %v4219 = vpop.f32.mrb[0].mxu0
        %v4220 = vadd.f32 %v2397, %v4219
        %v4221 = vpop.f32.mrb[0].mxu0
        %4222 = vmatprep.mubr.bf16.mxu0 0
        %4223 = vmatmul.mubr.bf16.gmra.mrb[0].mxu0 %v3298
        %v4224 = vpop.f32.mrb[0].mxu0
        %v4225 = vadd.f32 %v2403, %v4224
        %v4226 = vpop.f32.mrb[0].mxu0
        %v4227 = vpop.f32.mrb[0].mxu0
        %v4228 = vadd.f32 %v2407, %v4227
        %v4229 = vpop.f32.mrb[0].mxu0
        %4230 = vmatprep.mubr.bf16.mxu0 0
        %4231 = vmatmul.mubr.bf16.gmra.mrb[0].mxu0 %v3299
        %v4232 = vpop.f32.mrb[0].mxu0
        %v4233 = vadd.f32 %v2413, %v4232
        %v4234 = vpop.f32.mrb[0].mxu0
        %v4235 = vpop.f32.mrb[0].mxu0
        %v4236 = vadd.f32 %v2417, %v4235
        %v4237 = vpop.f32.mrb[0].mxu0
        %4238 = vmatprep.mubr.bf16.mxu0 0
        %4239 = vmatmul.mubr.bf16.gmra.mrb[0].mxu0 %v3300
        %v4240 = vpop.f32.mrb[0].mxu0
        %v4241 = vadd.f32 %v2423, %v4240
        %v4242 = vpop.f32.mrb[0].mxu0
        %v4243 = vpop.f32.mrb[0].mxu0
        %v4244 = vadd.f32 %v2427, %v4243
        %v4245 = vpop.f32.mrb[0].mxu0
        %4246 = vmatprep.mubr.bf16.mxu0 0
        %4247 = vmatmul.mubr.bf16.gmra.mrb[0].mxu0 %v3301
        %v4248 = vpop.f32.mrb[0].mxu0
        %v4249 = vadd.f32 %v2433, %v4248
        %v4250 = vpop.f32.mrb[0].mxu0
        %v4251 = vpop.f32.mrb[0].mxu0
        %v4252 = vadd.f32 %v2437, %v4251
        %v4253 = vpop.f32.mrb[0].mxu0
        %4254 = vmatprep.mubr.bf16.mxu0 0
        %4255 = vmatmul.mubr.bf16.gmra.mrb[0].mxu0 %v3302
        %v4256 = vpop.f32.mrb[0].mxu0
        %v4257 = vadd.f32 %v2443, %v4256
        %v4258 = vpop.f32.mrb[0].mxu0
        %v4259 = vpop.f32.mrb[0].mxu0
        %v4260 = vadd.f32 %v2447, %v4259
        %v4261 = vpop.f32.mrb[0].mxu0
        %4262 = vmatprep.mubr.bf16.mxu0 0
        %4263 = vmatmul.mubr.bf16.gmra.mrb[0].mxu0 %v3303
        %v4264 = vpop.f32.mrb[0].mxu0
        %v4265 = vadd.f32 %v2453, %v4264
        %v4266 = vpop.f32.mrb[0].mxu0
        %v4267 = vpop.f32.mrb[0].mxu0
        %v4268 = vadd.f32 %v2457, %v4267
        %v4269 = vpop.f32.mrb[0].mxu0
        %4270 = vmatprep.mubr.bf16.mxu0 0
        %4271 = vmatmul.mubr.bf16.gmra.mrb[0].mxu0 %v3304
        %v4272 = vpop.f32.mrb[0].mxu0
        %v4273 = vadd.f32 %v2463, %v4272
        %v4274 = vpop.f32.mrb[0].mxu0
        %v4275 = vpop.f32.mrb[0].mxu0
        %v4276 = vadd.f32 %v2467, %v4275
        %v4277 = vpop.f32.mrb[0].mxu0
        %4278 = vmatprep.mubr.bf16.mxu0 0
        %4279 = vmatmul.mubr.bf16.gmra.mrb[0].mxu0 %v3305
        %v4280 = vpop.f32.mrb[0].mxu0
        %v4281 = vadd.f32 %v2473, %v4280
        %v4282 = vpop.f32.mrb[0].mxu0
        %v4283 = vpop.f32.mrb[0].mxu0
        %v4284 = vadd.f32 %v2477, %v4283
        %v4285 = vpop.f32.mrb[0].mxu0
        %4286 = vmatprep.mubr.bf16.mxu0 0
        %4287 = vmatmul.mubr.bf16.gmra.mrb[0].mxu0 %v3306
        %v4288 = vpop.f32.mrb[0].mxu0
        %v4289 = vadd.f32 %v2483, %v4288
        %v4290 = vpop.f32.mrb[0].mxu0
        %v4291 = vpop.f32.mrb[0].mxu0
        %v4292 = vadd.f32 %v2487, %v4291
        %v4293 = vpop.f32.mrb[0].mxu0
        %4294 = vmatprep.mubr.bf16.mxu0 0
        %4295 = vmatmul.mubr.bf16.gmra.mrb[0].mxu0 %v3307
        %v4296 = vpop.f32.mrb[0].mxu0
        %v4297 = vadd.f32 %v2493, %v4296
        %v4298 = vpop.f32.mrb[0].mxu0
        %v4299 = vpop.f32.mrb[0].mxu0
        %v4300 = vadd.f32 %v2497, %v4299
        %v4301 = vpop.f32.mrb[0].mxu0
        %4302 = vmatprep.mubr.bf16.mxu0 0
        %4303 = vmatmul.mubr.bf16.gmra.mrb[0].mxu0 %v3308
        %v4304 = vpop.f32.mrb[0].mxu0
        %v4305 = vadd.f32 %v2503, %v4304
        %v4306 = vpop.f32.mrb[0].mxu0
        %v4307 = vpop.f32.mrb[0].mxu0
        %v4308 = vadd.f32 %v2507, %v4307
        %v4309 = vpop.f32.mrb[0].mxu0
        %4310 = vmatprep.mubr.bf16.mxu0 0
        %4311 = vmatmul.mubr.bf16.gmra.mrb[0].mxu0 %v3309
        %v4312 = vpop.f32.mrb[0].mxu0
        %v4313 = vadd.f32 %v2513, %v4312
        %v4314 = vpop.f32.mrb[0].mxu0
        %v4315 = vpop.f32.mrb[0].mxu0
        %v4316 = vadd.f32 %v2517, %v4315
        %v4317 = vpop.f32.mrb[0].mxu0
        %4318 = vmatprep.mubr.bf16.mxu0 0
        %4319 = vmatmul.mubr.bf16.gmra.mrb[0].mxu0 %v3310
        %v4320 = vpop.f32.mrb[0].mxu0
        %v4321 = vadd.f32 %v2523, %v4320
        %v4322 = vpop.f32.mrb[0].mxu0
        %v4323 = vpop.f32.mrb[0].mxu0
        %v4324 = vadd.f32 %v2527, %v4323
        %v4325 = vpop.f32.mrb[0].mxu0
        %4326 = vmatprep.mubr.bf16.mxu0 0
        %4327 = vmatmul.mubr.bf16.gmra.mrb[0].mxu0 %v3311
        %v4328 = vpop.f32.mrb[0].mxu0
        %v4329 = vadd.f32 %v2533, %v4328
        %v4330 = vpop.f32.mrb[0].mxu0
        %v4331 = vpop.f32.mrb[0].mxu0
        %v4332 = vadd.f32 %v2537, %v4331
        %v4333 = vpop.f32.mrb[0].mxu0
        %4334 = vmatprep.mubr.bf16.mxu0 0
        %4335 = vmatmul.mubr.bf16.gmra.mrb[0].mxu0 %v3312
        %v4336 = vpop.f32.mrb[0].mxu0
        %v4337 = vadd.f32 %v2543, %v4336
        %v4338 = vpop.f32.mrb[0].mxu0
        %v4339 = vpop.f32.mrb[0].mxu0
        %v4340 = vadd.f32 %v2547, %v4339
        %v4341 = vpop.f32.mrb[0].mxu0
        %4342 = vmatprep.mubr.bf16.mxu0 0
        %4343 = vmatmul.mubr.bf16.gmra.mrb[0].mxu0 %v3313
        %v4344 = vpop.f32.mrb[0].mxu0
        %v4345 = vadd.f32 %v2553, %v4344
        %v4346 = vpop.f32.mrb[0].mxu0
        %v4347 = vpop.f32.mrb[0].mxu0
        %v4348 = vadd.f32 %v2557, %v4347
        %v4349 = vpop.f32.mrb[0].mxu0
        %4350 = vmatprep.mubr.bf16.mxu0 0
        %4351 = vmatmul.mubr.bf16.gmra.mrb[0].mxu0 %v3314
        %v4352 = vpop.f32.mrb[0].mxu0
        %v4353 = vadd.f32 %v2563, %v4352
        %v4354 = vpop.f32.mrb[0].mxu0
        %v4355 = vpop.f32.mrb[0].mxu0
        %v4356 = vadd.f32 %v2567, %v4355
        %v4357 = vpop.f32.mrb[0].mxu0
        %4358 = vmatprep.mubr.bf16.mxu0 0
        %4359 = vmatmul.mubr.bf16.gmra.mrb[0].mxu0 %v3315
        %v4360 = vpop.f32.mrb[0].mxu0
        %v4361 = vadd.f32 %v2573, %v4360
        %v4362 = vpop.f32.mrb[0].mxu0
        %v4363 = vpop.f32.mrb[0].mxu0
        %v4364 = vadd.f32 %v2577, %v4363
        %v4365 = vpop.f32.mrb[0].mxu0
        %4366 = vmatprep.mubr.bf16.mxu0 0
        %4367 = vmatmul.mubr.bf16.gmra.mrb[0].mxu0 %v3316
        %v4368 = vpop.f32.mrb[0].mxu0
        %v4369 = vadd.f32 %v2583, %v4368
        %v4370 = vpop.f32.mrb[0].mxu0
        %v4371 = vpop.f32.mrb[0].mxu0
        %v4372 = vadd.f32 %v2587, %v4371
        %v4373 = vpop.f32.mrb[0].mxu0
        %4374 = vmatprep.mubr.bf16.mxu0 0
        %4375 = vmatmul.mubr.bf16.gmra.mrb[0].mxu0 %v3317
        %v4376 = vpop.f32.mrb[0].mxu0
        %v4377 = vadd.f32 %v2593, %v4376
        %v4378 = vpop.f32.mrb[0].mxu0
        %v4379 = vpop.f32.mrb[0].mxu0
        %v4380 = vadd.f32 %v2597, %v4379
        %v4381 = vpop.f32.mrb[0].mxu0
        %4382 = vmatprep.mubr.bf16.mxu0 0
        %4383 = vmatmul.mubr.bf16.gmra.mrb[0].mxu0 %v3318
        %v4384 = vpop.f32.mrb[0].mxu0
        %v4385 = vadd.f32 %v2603, %v4384
        %v4386 = vpop.f32.mrb[0].mxu0
        %v4387 = vpop.f32.mrb[0].mxu0
        %v4388 = vadd.f32 %v2607, %v4387
        %v4389 = vpop.f32.mrb[0].mxu0
        %4390 = vmatprep.mubr.bf16.mxu0 0
        %4391 = vmatmul.mubr.bf16.gmra.mrb[0].mxu0 %v3319
        %v4392 = vpop.f32.mrb[0].mxu0
        %v4393 = vadd.f32 %v2613, %v4392
        %v4394 = vpop.f32.mrb[0].mxu0
        %v4395 = vpop.f32.mrb[0].mxu0
        %v4396 = vadd.f32 %v2617, %v4395
        %v4397 = vpop.f32.mrb[0].mxu0
        %4398 = vmatprep.mubr.bf16.mxu0 0
        %4399 = vmatmul.mubr.bf16.gmra.mrb[0].mxu0 %v3320
        %v4400 = vpop.f32.mrb[0].mxu0
        %v4401 = vadd.f32 %v2623, %v4400
        %v4402 = vpop.f32.mrb[0].mxu0
        %v4403 = vpop.f32.mrb[0].mxu0
        %v4404 = vadd.f32 %v2627, %v4403
        %v4405 = vpop.f32.mrb[0].mxu0
        %4406 = vmatprep.mubr.bf16.mxu0 0
        %4407 = vmatmul.mubr.bf16.gmra.mrb[0].mxu0 %v3321
        %v4408 = vpop.f32.mrb[0].mxu0
        %v4409 = vadd.f32 %v2633, %v4408
        %v4410 = vpop.f32.mrb[0].mxu0
        %v4411 = vpop.f32.mrb[0].mxu0
        %v4412 = vadd.f32 %v2637, %v4411
        %v4413 = vpop.f32.mrb[0].mxu0
        %4414 = vmatprep.mubr.bf16.mxu0 0
        %4415 = vmatmul.mubr.bf16.gmra.mrb[0].mxu0 %v3322
        %v4416 = vpop.f32.mrb[0].mxu0
        %v4417 = vadd.f32 %v2643, %v4416
        %v4418 = vpop.f32.mrb[0].mxu0
        %v4419 = vpop.f32.mrb[0].mxu0
        %v4420 = vadd.f32 %v2647, %v4419
        %v4421 = vpop.f32.mrb[0].mxu0
        %4422 = vmatprep.mubr.bf16.mxu0 0
        %4423 = vmatmul.mubr.bf16.gmra.mrb[0].mxu0 %v3323
        %v4424 = vpop.f32.mrb[0].mxu0
        %v4425 = vadd.f32 %v2653, %v4424
        %v4426 = vpop.f32.mrb[0].mxu0
        %v4427 = vpop.f32.mrb[0].mxu0
        %v4428 = vadd.f32 %v2657, %v4427
        %v4429 = vpop.f32.mrb[0].mxu0
        %4430 = vmatprep.mubr.bf16.mxu0 0
        %4431 = vmatmul.mubr.bf16.gmra.mrb[0].mxu0 %v3324
        %v4432 = vpop.f32.mrb[0].mxu0
        %v4433 = vadd.f32 %v2663, %v4432
        %v4434 = vpop.f32.mrb[0].mxu0
        %v4435 = vpop.f32.mrb[0].mxu0
        %v4436 = vadd.f32 %v2667, %v4435
        %v4437 = vpop.f32.mrb[0].mxu0
        %4438 = vmatprep.mubr.bf16.mxu0 0
        %4439 = vmatmul.mubr.bf16.gmra.mrb[0].mxu0 %v3325
        %v4440 = vpop.f32.mrb[0].mxu0
        %v4441 = vadd.f32 %v2673, %v4440
        %v4442 = vpop.f32.mrb[0].mxu0
        %v4443 = vpop.f32.mrb[0].mxu0
        %v4444 = vadd.f32 %v2677, %v4443
        %v4445 = vpop.f32.mrb[0].mxu0
        %4446 = vdwg.mxu0
        %v4447 = vld [vmem:[%s4] sm:$0x1]
        %v4449 = vlaneseq
        %v4450 = vshrl.u32 %v4449, 7
        %v4451 = vsub.s32 0, %v4450
        %v4452 = vrot.slane %v4447, %v4451
        %v4454 = vadd.f32 %v3425, %v4452
        %v4455 = vadd.f32 %v3428, %v4452
        %v4456 = vadd.f32 %v3433, %v4452
        %v4457 = vadd.f32 %v3436, %v4452
        %v4458 = vadd.f32 %v3441, %v4452
        %v4459 = vadd.f32 %v3444, %v4452
        %v4460 = vadd.f32 %v3449, %v4452
        %v4461 = vadd.f32 %v3452, %v4452
        %v4462 = vadd.f32 %v3457, %v4452
        %v4463 = vadd.f32 %v3460, %v4452
        %v4464 = vadd.f32 %v3465, %v4452
        %v4465 = vadd.f32 %v3468, %v4452
        %v4466 = vadd.f32 %v3473, %v4452
        %v4467 = vadd.f32 %v3476, %v4452
        %v4468 = vadd.f32 %v3481, %v4452
        %v4469 = vadd.f32 %v3484, %v4452
        %v4470 = vadd.f32 %v3489, %v4452
        %v4471 = vadd.f32 %v3492, %v4452
        %v4472 = vadd.f32 %v3497, %v4452
        %v4473 = vadd.f32 %v3500, %v4452
        %v4474 = vadd.f32 %v3505, %v4452
        %v4475 = vadd.f32 %v3508, %v4452
        %v4476 = vadd.f32 %v3513, %v4452
        %v4477 = vadd.f32 %v3516, %v4452
        %v4478 = vadd.f32 %v3521, %v4452
        %v4479 = vadd.f32 %v3524, %v4452
        %v4480 = vadd.f32 %v3529, %v4452
        %v4481 = vadd.f32 %v3532, %v4452
        %v4482 = vadd.f32 %v3537, %v4452
        %v4483 = vadd.f32 %v3540, %v4452
        %v4484 = vadd.f32 %v3545, %v4452
        %v4485 = vadd.f32 %v3548, %v4452
        %v4486 = vadd.f32 %v3553, %v4452
        %v4487 = vadd.f32 %v3556, %v4452
        %v4488 = vadd.f32 %v3561, %v4452
        %v4489 = vadd.f32 %v3564, %v4452
        %v4490 = vadd.f32 %v3569, %v4452
        %v4491 = vadd.f32 %v3572, %v4452
        %v4492 = vadd.f32 %v3577, %v4452
        %v4493 = vadd.f32 %v3580, %v4452
        %v4494 = vadd.f32 %v3585, %v4452
        %v4495 = vadd.f32 %v3588, %v4452
        %v4496 = vadd.f32 %v3593, %v4452
        %v4497 = vadd.f32 %v3596, %v4452
        %v4498 = vadd.f32 %v3601, %v4452
        %v4499 = vadd.f32 %v3604, %v4452
        %v4500 = vadd.f32 %v3609, %v4452
        %v4501 = vadd.f32 %v3612, %v4452
        %v4502 = vadd.f32 %v3617, %v4452
        %v4503 = vadd.f32 %v3620, %v4452
        %v4504 = vadd.f32 %v3625, %v4452
        %v4505 = vadd.f32 %v3628, %v4452
        %v4506 = vadd.f32 %v3633, %v4452
        %v4507 = vadd.f32 %v3636, %v4452
        %v4508 = vadd.f32 %v3641, %v4452
        %v4509 = vadd.f32 %v3644, %v4452
        %v4510 = vadd.f32 %v3649, %v4452
        %v4511 = vadd.f32 %v3652, %v4452
        %v4512 = vadd.f32 %v3657, %v4452
        %v4513 = vadd.f32 %v3660, %v4452
        %v4514 = vadd.f32 %v3665, %v4452
        %v4515 = vadd.f32 %v3668, %v4452
        %v4516 = vadd.f32 %v3673, %v4452
        %v4517 = vadd.f32 %v3676, %v4452
        %v4518 = vadd.f32 %v3681, %v4452
        %v4519 = vadd.f32 %v3684, %v4452
        %v4520 = vadd.f32 %v3689, %v4452
        %v4521 = vadd.f32 %v3692, %v4452
        %v4522 = vadd.f32 %v3697, %v4452
        %v4523 = vadd.f32 %v3700, %v4452
        %v4524 = vadd.f32 %v3705, %v4452
        %v4525 = vadd.f32 %v3708, %v4452
        %v4526 = vadd.f32 %v3713, %v4452
        %v4527 = vadd.f32 %v3716, %v4452
        %v4528 = vadd.f32 %v3721, %v4452
        %v4529 = vadd.f32 %v3724, %v4452
        %v4530 = vadd.f32 %v3729, %v4452
        %v4531 = vadd.f32 %v3732, %v4452
        %v4532 = vadd.f32 %v3737, %v4452
        %v4533 = vadd.f32 %v3740, %v4452
        %v4534 = vadd.f32 %v3745, %v4452
        %v4535 = vadd.f32 %v3748, %v4452
        %v4536 = vadd.f32 %v3753, %v4452
        %v4537 = vadd.f32 %v3756, %v4452
        %v4538 = vadd.f32 %v3761, %v4452
        %v4539 = vadd.f32 %v3764, %v4452
        %v4540 = vadd.f32 %v3769, %v4452
        %v4541 = vadd.f32 %v3772, %v4452
        %v4542 = vadd.f32 %v3777, %v4452
        %v4543 = vadd.f32 %v3780, %v4452
        %v4544 = vadd.f32 %v3785, %v4452
        %v4545 = vadd.f32 %v3788, %v4452
        %v4546 = vadd.f32 %v3793, %v4452
        %v4547 = vadd.f32 %v3796, %v4452
        %v4548 = vadd.f32 %v3801, %v4452
        %v4549 = vadd.f32 %v3804, %v4452
        %v4550 = vadd.f32 %v3809, %v4452
        %v4551 = vadd.f32 %v3812, %v4452
        %v4552 = vadd.f32 %v3817, %v4452
        %v4553 = vadd.f32 %v3820, %v4452
        %v4554 = vadd.f32 %v3825, %v4452
        %v4555 = vadd.f32 %v3828, %v4452
        %v4556 = vadd.f32 %v3833, %v4452
        %v4557 = vadd.f32 %v3836, %v4452
        %v4558 = vadd.f32 %v3841, %v4452
        %v4559 = vadd.f32 %v3844, %v4452
        %v4560 = vadd.f32 %v3849, %v4452
        %v4561 = vadd.f32 %v3852, %v4452
        %v4562 = vadd.f32 %v3857, %v4452
        %v4563 = vadd.f32 %v3860, %v4452
        %v4564 = vadd.f32 %v3865, %v4452
        %v4565 = vadd.f32 %v3868, %v4452
        %v4566 = vadd.f32 %v3873, %v4452
        %v4567 = vadd.f32 %v3876, %v4452
        %v4568 = vadd.f32 %v3881, %v4452
        %v4569 = vadd.f32 %v3884, %v4452
        %v4570 = vadd.f32 %v3889, %v4452
        %v4571 = vadd.f32 %v3892, %v4452
        %v4572 = vadd.f32 %v3897, %v4452
        %v4573 = vadd.f32 %v3900, %v4452
        %v4574 = vadd.f32 %v3905, %v4452
        %v4575 = vadd.f32 %v3908, %v4452
        %v4576 = vadd.f32 %v3913, %v4452
        %v4577 = vadd.f32 %v3916, %v4452
        %v4578 = vadd.f32 %v3921, %v4452
        %v4579 = vadd.f32 %v3924, %v4452
        %v4580 = vadd.f32 %v3929, %v4452
        %v4581 = vadd.f32 %v3932, %v4452
        %v4582 = vadd.f32 %v3937, %v4452
        %v4583 = vadd.f32 %v3940, %v4452
        %v4584 = vadd.f32 %v3945, %v4452
        %v4585 = vadd.f32 %v3948, %v4452
        %v4586 = vadd.f32 %v3953, %v4452
        %v4587 = vadd.f32 %v3956, %v4452
        %v4588 = vadd.f32 %v3961, %v4452
        %v4589 = vadd.f32 %v3964, %v4452
        %v4590 = vadd.f32 %v3969, %v4452
        %v4591 = vadd.f32 %v3972, %v4452
        %v4592 = vadd.f32 %v3977, %v4452
        %v4593 = vadd.f32 %v3980, %v4452
        %v4594 = vadd.f32 %v3985, %v4452
        %v4595 = vadd.f32 %v3988, %v4452
        %v4596 = vadd.f32 %v3993, %v4452
        %v4597 = vadd.f32 %v3996, %v4452
        %v4598 = vadd.f32 %v4001, %v4452
        %v4599 = vadd.f32 %v4004, %v4452
        %v4600 = vadd.f32 %v4009, %v4452
        %v4601 = vadd.f32 %v4012, %v4452
        %v4602 = vadd.f32 %v4017, %v4452
        %v4603 = vadd.f32 %v4020, %v4452
        %v4604 = vadd.f32 %v4025, %v4452
        %v4605 = vadd.f32 %v4028, %v4452
        %v4606 = vadd.f32 %v4033, %v4452
        %v4607 = vadd.f32 %v4036, %v4452
        %v4608 = vadd.f32 %v4041, %v4452
        %v4609 = vadd.f32 %v4044, %v4452
        %v4610 = vadd.f32 %v4049, %v4452
        %v4611 = vadd.f32 %v4052, %v4452
        %v4612 = vadd.f32 %v4057, %v4452
        %v4613 = vadd.f32 %v4060, %v4452
        %v4614 = vadd.f32 %v4065, %v4452
        %v4615 = vadd.f32 %v4068, %v4452
        %v4616 = vadd.f32 %v4073, %v4452
        %v4617 = vadd.f32 %v4076, %v4452
        %v4618 = vadd.f32 %v4081, %v4452
        %v4619 = vadd.f32 %v4084, %v4452
        %v4620 = vadd.f32 %v4089, %v4452
        %v4621 = vadd.f32 %v4092, %v4452
        %v4622 = vadd.f32 %v4097, %v4452
        %v4623 = vadd.f32 %v4100, %v4452
        %v4624 = vadd.f32 %v4105, %v4452
        %v4625 = vadd.f32 %v4108, %v4452
        %v4626 = vadd.f32 %v4113, %v4452
        %v4627 = vadd.f32 %v4116, %v4452
        %v4628 = vadd.f32 %v4121, %v4452
        %v4629 = vadd.f32 %v4124, %v4452
        %v4630 = vadd.f32 %v4129, %v4452
        %v4631 = vadd.f32 %v4132, %v4452
        %v4632 = vadd.f32 %v4137, %v4452
        %v4633 = vadd.f32 %v4140, %v4452
        %v4634 = vadd.f32 %v4145, %v4452
        %v4635 = vadd.f32 %v4148, %v4452
        %v4636 = vadd.f32 %v4153, %v4452
        %v4637 = vadd.f32 %v4156, %v4452
        %v4638 = vadd.f32 %v4161, %v4452
        %v4639 = vadd.f32 %v4164, %v4452
        %v4640 = vadd.f32 %v4169, %v4452
        %v4641 = vadd.f32 %v4172, %v4452
        %v4642 = vadd.f32 %v4177, %v4452
        %v4643 = vadd.f32 %v4180, %v4452
        %v4644 = vadd.f32 %v4185, %v4452
        %v4645 = vadd.f32 %v4188, %v4452
        %v4646 = vadd.f32 %v4193, %v4452
        %v4647 = vadd.f32 %v4196, %v4452
        %v4648 = vadd.f32 %v4201, %v4452
        %v4649 = vadd.f32 %v4204, %v4452
        %v4650 = vadd.f32 %v4209, %v4452
        %v4651 = vadd.f32 %v4212, %v4452
        %v4652 = vadd.f32 %v4217, %v4452
        %v4653 = vadd.f32 %v4220, %v4452
        %v4654 = vadd.f32 %v4225, %v4452
        %v4655 = vadd.f32 %v4228, %v4452
        %v4656 = vadd.f32 %v4233, %v4452
        %v4657 = vadd.f32 %v4236, %v4452
        %v4658 = vadd.f32 %v4241, %v4452
        %v4659 = vadd.f32 %v4244, %v4452
        %v4660 = vadd.f32 %v4249, %v4452
        %v4661 = vadd.f32 %v4252, %v4452
        %v4662 = vadd.f32 %v4257, %v4452
        %v4663 = vadd.f32 %v4260, %v4452
        %v4664 = vadd.f32 %v4265, %v4452
        %v4665 = vadd.f32 %v4268, %v4452
        %v4666 = vadd.f32 %v4273, %v4452
        %v4667 = vadd.f32 %v4276, %v4452
        %v4668 = vadd.f32 %v4281, %v4452
        %v4669 = vadd.f32 %v4284, %v4452
        %v4670 = vadd.f32 %v4289, %v4452
        %v4671 = vadd.f32 %v4292, %v4452
        %v4672 = vadd.f32 %v4297, %v4452
        %v4673 = vadd.f32 %v4300, %v4452
        %v4674 = vadd.f32 %v4305, %v4452
        %v4675 = vadd.f32 %v4308, %v4452
        %v4676 = vadd.f32 %v4313, %v4452
        %v4677 = vadd.f32 %v4316, %v4452
        %v4678 = vadd.f32 %v4321, %v4452
        %v4679 = vadd.f32 %v4324, %v4452
        %v4680 = vadd.f32 %v4329, %v4452
        %v4681 = vadd.f32 %v4332, %v4452
        %v4682 = vadd.f32 %v4337, %v4452
        %v4683 = vadd.f32 %v4340, %v4452
        %v4684 = vadd.f32 %v4345, %v4452
        %v4685 = vadd.f32 %v4348, %v4452
        %v4686 = vadd.f32 %v4353, %v4452
        %v4687 = vadd.f32 %v4356, %v4452
        %v4688 = vadd.f32 %v4361, %v4452
        %v4689 = vadd.f32 %v4364, %v4452
        %v4690 = vadd.f32 %v4369, %v4452
        %v4691 = vadd.f32 %v4372, %v4452
        %v4692 = vadd.f32 %v4377, %v4452
        %v4693 = vadd.f32 %v4380, %v4452
        %v4694 = vadd.f32 %v4385, %v4452
        %v4695 = vadd.f32 %v4388, %v4452
        %v4696 = vadd.f32 %v4393, %v4452
        %v4697 = vadd.f32 %v4396, %v4452
        %v4698 = vadd.f32 %v4401, %v4452
        %v4699 = vadd.f32 %v4404, %v4452
        %v4700 = vadd.f32 %v4409, %v4452
        %v4701 = vadd.f32 %v4412, %v4452
        %v4702 = vadd.f32 %v4417, %v4452
        %v4703 = vadd.f32 %v4420, %v4452
        %v4704 = vadd.f32 %v4425, %v4452
        %v4705 = vadd.f32 %v4428, %v4452
        %v4706 = vadd.f32 %v4433, %v4452
        %v4707 = vadd.f32 %v4436, %v4452
        %v4708 = vadd.f32 %v4441, %v4452
        %v4709 = vadd.f32 %v4444, %v4452
        %v4710 = vmax.f32 %v4454, 0.0
        %v4711 = vmax.f32 %v4455, 0.0
        %v4712 = vmax.f32 %v4456, 0.0
        %v4713 = vmax.f32 %v4457, 0.0
        %v4714 = vmax.f32 %v4458, 0.0
        %v4715 = vmax.f32 %v4459, 0.0
        %v4716 = vmax.f32 %v4460, 0.0
        %v4717 = vmax.f32 %v4461, 0.0
        %v4718 = vmax.f32 %v4462, 0.0
        %v4719 = vmax.f32 %v4463, 0.0
        %v4720 = vmax.f32 %v4464, 0.0
        %v4721 = vmax.f32 %v4465, 0.0
        %v4722 = vmax.f32 %v4466, 0.0
        %v4723 = vmax.f32 %v4467, 0.0
        %v4724 = vmax.f32 %v4468, 0.0
        %v4725 = vmax.f32 %v4469, 0.0
        %v4726 = vmax.f32 %v4470, 0.0
        %v4727 = vmax.f32 %v4471, 0.0
        %v4728 = vmax.f32 %v4472, 0.0
        %v4729 = vmax.f32 %v4473, 0.0
        %v4730 = vmax.f32 %v4474, 0.0
        %v4731 = vmax.f32 %v4475, 0.0
        %v4732 = vmax.f32 %v4476, 0.0
        %v4733 = vmax.f32 %v4477, 0.0
        %v4734 = vmax.f32 %v4478, 0.0
        %v4735 = vmax.f32 %v4479, 0.0
        %v4736 = vmax.f32 %v4480, 0.0
        %v4737 = vmax.f32 %v4481, 0.0
        %v4738 = vmax.f32 %v4482, 0.0
        %v4739 = vmax.f32 %v4483, 0.0
        %v4740 = vmax.f32 %v4484, 0.0
        %v4741 = vmax.f32 %v4485, 0.0
        %v4742 = vmax.f32 %v4486, 0.0
        %v4743 = vmax.f32 %v4487, 0.0
        %v4744 = vmax.f32 %v4488, 0.0
        %v4745 = vmax.f32 %v4489, 0.0
        %v4746 = vmax.f32 %v4490, 0.0
        %v4747 = vmax.f32 %v4491, 0.0
        %v4748 = vmax.f32 %v4492, 0.0
        %v4749 = vmax.f32 %v4493, 0.0
        %v4750 = vmax.f32 %v4494, 0.0
        %v4751 = vmax.f32 %v4495, 0.0
        %v4752 = vmax.f32 %v4496, 0.0
        %v4753 = vmax.f32 %v4497, 0.0
        %v4754 = vmax.f32 %v4498, 0.0
        %v4755 = vmax.f32 %v4499, 0.0
        %v4756 = vmax.f32 %v4500, 0.0
        %v4757 = vmax.f32 %v4501, 0.0
        %v4758 = vmax.f32 %v4502, 0.0
        %v4759 = vmax.f32 %v4503, 0.0
        %v4760 = vmax.f32 %v4504, 0.0
        %v4761 = vmax.f32 %v4505, 0.0
        %v4762 = vmax.f32 %v4506, 0.0
        %v4763 = vmax.f32 %v4507, 0.0
        %v4764 = vmax.f32 %v4508, 0.0
        %v4765 = vmax.f32 %v4509, 0.0
        %v4766 = vmax.f32 %v4510, 0.0
        %v4767 = vmax.f32 %v4511, 0.0
        %v4768 = vmax.f32 %v4512, 0.0
        %v4769 = vmax.f32 %v4513, 0.0
        %v4770 = vmax.f32 %v4514, 0.0
        %v4771 = vmax.f32 %v4515, 0.0
        %v4772 = vmax.f32 %v4516, 0.0
        %v4773 = vmax.f32 %v4517, 0.0
        %v4774 = vmax.f32 %v4518, 0.0
        %v4775 = vmax.f32 %v4519, 0.0
        %v4776 = vmax.f32 %v4520, 0.0
        %v4777 = vmax.f32 %v4521, 0.0
        %v4778 = vmax.f32 %v4522, 0.0
        %v4779 = vmax.f32 %v4523, 0.0
        %v4780 = vmax.f32 %v4524, 0.0
        %v4781 = vmax.f32 %v4525, 0.0
        %v4782 = vmax.f32 %v4526, 0.0
        %v4783 = vmax.f32 %v4527, 0.0
        %v4784 = vmax.f32 %v4528, 0.0
        %v4785 = vmax.f32 %v4529, 0.0
        %v4786 = vmax.f32 %v4530, 0.0
        %v4787 = vmax.f32 %v4531, 0.0
        %v4788 = vmax.f32 %v4532, 0.0
        %v4789 = vmax.f32 %v4533, 0.0
        %v4790 = vmax.f32 %v4534, 0.0
        %v4791 = vmax.f32 %v4535, 0.0
        %v4792 = vmax.f32 %v4536, 0.0
        %v4793 = vmax.f32 %v4537, 0.0
        %v4794 = vmax.f32 %v4538, 0.0
        %v4795 = vmax.f32 %v4539, 0.0
        %v4796 = vmax.f32 %v4540, 0.0
        %v4797 = vmax.f32 %v4541, 0.0
        %v4798 = vmax.f32 %v4542, 0.0
        %v4799 = vmax.f32 %v4543, 0.0
        %v4800 = vmax.f32 %v4544, 0.0
        %v4801 = vmax.f32 %v4545, 0.0
        %v4802 = vmax.f32 %v4546, 0.0
        %v4803 = vmax.f32 %v4547, 0.0
        %v4804 = vmax.f32 %v4548, 0.0
        %v4805 = vmax.f32 %v4549, 0.0
        %v4806 = vmax.f32 %v4550, 0.0
        %v4807 = vmax.f32 %v4551, 0.0
        %v4808 = vmax.f32 %v4552, 0.0
        %v4809 = vmax.f32 %v4553, 0.0
        %v4810 = vmax.f32 %v4554, 0.0
        %v4811 = vmax.f32 %v4555, 0.0
        %v4812 = vmax.f32 %v4556, 0.0
        %v4813 = vmax.f32 %v4557, 0.0
        %v4814 = vmax.f32 %v4558, 0.0
        %v4815 = vmax.f32 %v4559, 0.0
        %v4816 = vmax.f32 %v4560, 0.0
        %v4817 = vmax.f32 %v4561, 0.0
        %v4818 = vmax.f32 %v4562, 0.0
        %v4819 = vmax.f32 %v4563, 0.0
        %v4820 = vmax.f32 %v4564, 0.0
        %v4821 = vmax.f32 %v4565, 0.0
        %v4822 = vmax.f32 %v4566, 0.0
        %v4823 = vmax.f32 %v4567, 0.0
        %v4824 = vmax.f32 %v4568, 0.0
        %v4825 = vmax.f32 %v4569, 0.0
        %v4826 = vmax.f32 %v4570, 0.0
        %v4827 = vmax.f32 %v4571, 0.0
        %v4828 = vmax.f32 %v4572, 0.0
        %v4829 = vmax.f32 %v4573, 0.0
        %v4830 = vmax.f32 %v4574, 0.0
        %v4831 = vmax.f32 %v4575, 0.0
        %v4832 = vmax.f32 %v4576, 0.0
        %v4833 = vmax.f32 %v4577, 0.0
        %v4834 = vmax.f32 %v4578, 0.0
        %v4835 = vmax.f32 %v4579, 0.0
        %v4836 = vmax.f32 %v4580, 0.0
        %v4837 = vmax.f32 %v4581, 0.0
        %v4838 = vmax.f32 %v4582, 0.0
        %v4839 = vmax.f32 %v4583, 0.0
        %v4840 = vmax.f32 %v4584, 0.0
        %v4841 = vmax.f32 %v4585, 0.0
        %v4842 = vmax.f32 %v4586, 0.0
        %v4843 = vmax.f32 %v4587, 0.0
        %v4844 = vmax.f32 %v4588, 0.0
        %v4845 = vmax.f32 %v4589, 0.0
        %v4846 = vmax.f32 %v4590, 0.0
        %v4847 = vmax.f32 %v4591, 0.0
        %v4848 = vmax.f32 %v4592, 0.0
        %v4849 = vmax.f32 %v4593, 0.0
        %v4850 = vmax.f32 %v4594, 0.0
        %v4851 = vmax.f32 %v4595, 0.0
        %v4852 = vmax.f32 %v4596, 0.0
        %v4853 = vmax.f32 %v4597, 0.0
        %v4854 = vmax.f32 %v4598, 0.0
        %v4855 = vmax.f32 %v4599, 0.0
        %v4856 = vmax.f32 %v4600, 0.0
        %v4857 = vmax.f32 %v4601, 0.0
        %v4858 = vmax.f32 %v4602, 0.0
        %v4859 = vmax.f32 %v4603, 0.0
        %v4860 = vmax.f32 %v4604, 0.0
        %v4861 = vmax.f32 %v4605, 0.0
        %v4862 = vmax.f32 %v4606, 0.0
        %v4863 = vmax.f32 %v4607, 0.0
        %v4864 = vmax.f32 %v4608, 0.0
        %v4865 = vmax.f32 %v4609, 0.0
        %v4866 = vmax.f32 %v4610, 0.0
        %v4867 = vmax.f32 %v4611, 0.0
        %v4868 = vmax.f32 %v4612, 0.0
        %v4869 = vmax.f32 %v4613, 0.0
        %v4870 = vmax.f32 %v4614, 0.0
        %v4871 = vmax.f32 %v4615, 0.0
        %v4872 = vmax.f32 %v4616, 0.0
        %v4873 = vmax.f32 %v4617, 0.0
        %v4874 = vmax.f32 %v4618, 0.0
        %v4875 = vmax.f32 %v4619, 0.0
        %v4876 = vmax.f32 %v4620, 0.0
        %v4877 = vmax.f32 %v4621, 0.0
        %v4878 = vmax.f32 %v4622, 0.0
        %v4879 = vmax.f32 %v4623, 0.0
        %v4880 = vmax.f32 %v4624, 0.0
        %v4881 = vmax.f32 %v4625, 0.0
        %v4882 = vmax.f32 %v4626, 0.0
        %v4883 = vmax.f32 %v4627, 0.0
        %v4884 = vmax.f32 %v4628, 0.0
        %v4885 = vmax.f32 %v4629, 0.0
        %v4886 = vmax.f32 %v4630, 0.0
        %v4887 = vmax.f32 %v4631, 0.0
        %v4888 = vmax.f32 %v4632, 0.0
        %v4889 = vmax.f32 %v4633, 0.0
        %v4890 = vmax.f32 %v4634, 0.0
        %v4891 = vmax.f32 %v4635, 0.0
        %v4892 = vmax.f32 %v4636, 0.0
        %v4893 = vmax.f32 %v4637, 0.0
        %v4894 = vmax.f32 %v4638, 0.0
        %v4895 = vmax.f32 %v4639, 0.0
        %v4896 = vmax.f32 %v4640, 0.0
        %v4897 = vmax.f32 %v4641, 0.0
        %v4898 = vmax.f32 %v4642, 0.0
        %v4899 = vmax.f32 %v4643, 0.0
        %v4900 = vmax.f32 %v4644, 0.0
        %v4901 = vmax.f32 %v4645, 0.0
        %v4902 = vmax.f32 %v4646, 0.0
        %v4903 = vmax.f32 %v4647, 0.0
        %v4904 = vmax.f32 %v4648, 0.0
        %v4905 = vmax.f32 %v4649, 0.0
        %v4906 = vmax.f32 %v4650, 0.0
        %v4907 = vmax.f32 %v4651, 0.0
        %v4908 = vmax.f32 %v4652, 0.0
        %v4909 = vmax.f32 %v4653, 0.0
        %v4910 = vmax.f32 %v4654, 0.0
        %v4911 = vmax.f32 %v4655, 0.0
        %v4912 = vmax.f32 %v4656, 0.0
        %v4913 = vmax.f32 %v4657, 0.0
        %v4914 = vmax.f32 %v4658, 0.0
        %v4915 = vmax.f32 %v4659, 0.0
        %v4916 = vmax.f32 %v4660, 0.0
        %v4917 = vmax.f32 %v4661, 0.0
        %v4918 = vmax.f32 %v4662, 0.0
        %v4919 = vmax.f32 %v4663, 0.0
        %v4920 = vmax.f32 %v4664, 0.0
        %v4921 = vmax.f32 %v4665, 0.0
        %v4922 = vmax.f32 %v4666, 0.0
        %v4923 = vmax.f32 %v4667, 0.0
        %v4924 = vmax.f32 %v4668, 0.0
        %v4925 = vmax.f32 %v4669, 0.0
        %v4926 = vmax.f32 %v4670, 0.0
        %v4927 = vmax.f32 %v4671, 0.0
        %v4928 = vmax.f32 %v4672, 0.0
        %v4929 = vmax.f32 %v4673, 0.0
        %v4930 = vmax.f32 %v4674, 0.0
        %v4931 = vmax.f32 %v4675, 0.0
        %v4932 = vmax.f32 %v4676, 0.0
        %v4933 = vmax.f32 %v4677, 0.0
        %v4934 = vmax.f32 %v4678, 0.0
        %v4935 = vmax.f32 %v4679, 0.0
        %v4936 = vmax.f32 %v4680, 0.0
        %v4937 = vmax.f32 %v4681, 0.0
        %v4938 = vmax.f32 %v4682, 0.0
        %v4939 = vmax.f32 %v4683, 0.0
        %v4940 = vmax.f32 %v4684, 0.0
        %v4941 = vmax.f32 %v4685, 0.0
        %v4942 = vmax.f32 %v4686, 0.0
        %v4943 = vmax.f32 %v4687, 0.0
        %v4944 = vmax.f32 %v4688, 0.0
        %v4945 = vmax.f32 %v4689, 0.0
        %v4946 = vmax.f32 %v4690, 0.0
        %v4947 = vmax.f32 %v4691, 0.0
        %v4948 = vmax.f32 %v4692, 0.0
        %v4949 = vmax.f32 %v4693, 0.0
        %v4950 = vmax.f32 %v4694, 0.0
        %v4951 = vmax.f32 %v4695, 0.0
        %v4952 = vmax.f32 %v4696, 0.0
        %v4953 = vmax.f32 %v4697, 0.0
        %v4954 = vmax.f32 %v4698, 0.0
        %v4955 = vmax.f32 %v4699, 0.0
        %v4956 = vmax.f32 %v4700, 0.0
        %v4957 = vmax.f32 %v4701, 0.0
        %v4958 = vmax.f32 %v4702, 0.0
        %v4959 = vmax.f32 %v4703, 0.0
        %v4960 = vmax.f32 %v4704, 0.0
        %v4961 = vmax.f32 %v4705, 0.0
        %v4962 = vmax.f32 %v4706, 0.0
        %v4963 = vmax.f32 %v4707, 0.0
        %v4964 = vmax.f32 %v4708, 0.0
        %v4965 = vmax.f32 %v4709, 0.0
        %v4966 = vpack.c.bf16 %v4711, %v4710
        %v4967 = vpack.c.bf16 %v4713, %v4712
        %v4968 = vpack.c.bf16 %v4715, %v4714
        %v4969 = vpack.c.bf16 %v4717, %v4716
        %v4970 = vpack.c.bf16 %v4719, %v4718
        %v4971 = vpack.c.bf16 %v4721, %v4720
        %v4972 = vpack.c.bf16 %v4723, %v4722
        %v4973 = vpack.c.bf16 %v4725, %v4724
        %v4974 = vpack.c.bf16 %v4727, %v4726
        %v4975 = vpack.c.bf16 %v4729, %v4728
        %v4976 = vpack.c.bf16 %v4731, %v4730
        %v4977 = vpack.c.bf16 %v4733, %v4732
        %v4978 = vpack.c.bf16 %v4735, %v4734
        %v4979 = vpack.c.bf16 %v4737, %v4736
        %v4980 = vpack.c.bf16 %v4739, %v4738
        %v4981 = vpack.c.bf16 %v4741, %v4740
        %v4982 = vpack.c.bf16 %v4743, %v4742
        %v4983 = vpack.c.bf16 %v4745, %v4744
        %v4984 = vpack.c.bf16 %v4747, %v4746
        %v4985 = vpack.c.bf16 %v4749, %v4748
        %v4986 = vpack.c.bf16 %v4751, %v4750
        %v4987 = vpack.c.bf16 %v4753, %v4752
        %v4988 = vpack.c.bf16 %v4755, %v4754
        %v4989 = vpack.c.bf16 %v4757, %v4756
        %v4990 = vpack.c.bf16 %v4759, %v4758
        %v4991 = vpack.c.bf16 %v4761, %v4760
        %v4992 = vpack.c.bf16 %v4763, %v4762
        %v4993 = vpack.c.bf16 %v4765, %v4764
        %v4994 = vpack.c.bf16 %v4767, %v4766
        %v4995 = vpack.c.bf16 %v4769, %v4768
        %v4996 = vpack.c.bf16 %v4771, %v4770
        %v4997 = vpack.c.bf16 %v4773, %v4772
        %v4998 = vpack.c.bf16 %v4775, %v4774
        %v4999 = vpack.c.bf16 %v4777, %v4776
        %v5000 = vpack.c.bf16 %v4779, %v4778
        %v5001 = vpack.c.bf16 %v4781, %v4780
        %v5002 = vpack.c.bf16 %v4783, %v4782
        %v5003 = vpack.c.bf16 %v4785, %v4784
        %v5004 = vpack.c.bf16 %v4787, %v4786
        %v5005 = vpack.c.bf16 %v4789, %v4788
        %v5006 = vpack.c.bf16 %v4791, %v4790
        %v5007 = vpack.c.bf16 %v4793, %v4792
        %v5008 = vpack.c.bf16 %v4795, %v4794
        %v5009 = vpack.c.bf16 %v4797, %v4796
        %v5010 = vpack.c.bf16 %v4799, %v4798
        %v5011 = vpack.c.bf16 %v4801, %v4800
        %v5012 = vpack.c.bf16 %v4803, %v4802
        %v5013 = vpack.c.bf16 %v4805, %v4804
        %v5014 = vpack.c.bf16 %v4807, %v4806
        %v5015 = vpack.c.bf16 %v4809, %v4808
        %v5016 = vpack.c.bf16 %v4811, %v4810
        %v5017 = vpack.c.bf16 %v4813, %v4812
        %v5018 = vpack.c.bf16 %v4815, %v4814
        %v5019 = vpack.c.bf16 %v4817, %v4816
        %v5020 = vpack.c.bf16 %v4819, %v4818
        %v5021 = vpack.c.bf16 %v4821, %v4820
        %v5022 = vpack.c.bf16 %v4823, %v4822
        %v5023 = vpack.c.bf16 %v4825, %v4824
        %v5024 = vpack.c.bf16 %v4827, %v4826
        %v5025 = vpack.c.bf16 %v4829, %v4828
        %v5026 = vpack.c.bf16 %v4831, %v4830
        %v5027 = vpack.c.bf16 %v4833, %v4832
        %v5028 = vpack.c.bf16 %v4835, %v4834
        %v5029 = vpack.c.bf16 %v4837, %v4836
        %v5030 = vpack.c.bf16 %v4839, %v4838
        %v5031 = vpack.c.bf16 %v4841, %v4840
        %v5032 = vpack.c.bf16 %v4843, %v4842
        %v5033 = vpack.c.bf16 %v4845, %v4844
        %v5034 = vpack.c.bf16 %v4847, %v4846
        %v5035 = vpack.c.bf16 %v4849, %v4848
        %v5036 = vpack.c.bf16 %v4851, %v4850
        %v5037 = vpack.c.bf16 %v4853, %v4852
        %v5038 = vpack.c.bf16 %v4855, %v4854
        %v5039 = vpack.c.bf16 %v4857, %v4856
        %v5040 = vpack.c.bf16 %v4859, %v4858
        %v5041 = vpack.c.bf16 %v4861, %v4860
        %v5042 = vpack.c.bf16 %v4863, %v4862
        %v5043 = vpack.c.bf16 %v4865, %v4864
        %v5044 = vpack.c.bf16 %v4867, %v4866
        %v5045 = vpack.c.bf16 %v4869, %v4868
        %v5046 = vpack.c.bf16 %v4871, %v4870
        %v5047 = vpack.c.bf16 %v4873, %v4872
        %v5048 = vpack.c.bf16 %v4875, %v4874
        %v5049 = vpack.c.bf16 %v4877, %v4876
        %v5050 = vpack.c.bf16 %v4879, %v4878
        %v5051 = vpack.c.bf16 %v4881, %v4880
        %v5052 = vpack.c.bf16 %v4883, %v4882
        %v5053 = vpack.c.bf16 %v4885, %v4884
        %v5054 = vpack.c.bf16 %v4887, %v4886
        %v5055 = vpack.c.bf16 %v4889, %v4888
        %v5056 = vpack.c.bf16 %v4891, %v4890
        %v5057 = vpack.c.bf16 %v4893, %v4892
        %v5058 = vpack.c.bf16 %v4895, %v4894
        %v5059 = vpack.c.bf16 %v4897, %v4896
        %v5060 = vpack.c.bf16 %v4899, %v4898
        %v5061 = vpack.c.bf16 %v4901, %v4900
        %v5062 = vpack.c.bf16 %v4903, %v4902
        %v5063 = vpack.c.bf16 %v4905, %v4904
        %v5064 = vpack.c.bf16 %v4907, %v4906
        %v5065 = vpack.c.bf16 %v4909, %v4908
        %v5066 = vpack.c.bf16 %v4911, %v4910
        %v5067 = vpack.c.bf16 %v4913, %v4912
        %v5068 = vpack.c.bf16 %v4915, %v4914
        %v5069 = vpack.c.bf16 %v4917, %v4916
        %v5070 = vpack.c.bf16 %v4919, %v4918
        %v5071 = vpack.c.bf16 %v4921, %v4920
        %v5072 = vpack.c.bf16 %v4923, %v4922
        %v5073 = vpack.c.bf16 %v4925, %v4924
        %v5074 = vpack.c.bf16 %v4927, %v4926
        %v5075 = vpack.c.bf16 %v4929, %v4928
        %v5076 = vpack.c.bf16 %v4931, %v4930
        %v5077 = vpack.c.bf16 %v4933, %v4932
        %v5078 = vpack.c.bf16 %v4935, %v4934
        %v5079 = vpack.c.bf16 %v4937, %v4936
        %v5080 = vpack.c.bf16 %v4939, %v4938
        %v5081 = vpack.c.bf16 %v4941, %v4940
        %v5082 = vpack.c.bf16 %v4943, %v4942
        %v5083 = vpack.c.bf16 %v4945, %v4944
        %v5084 = vpack.c.bf16 %v4947, %v4946
        %v5085 = vpack.c.bf16 %v4949, %v4948
        %v5086 = vpack.c.bf16 %v4951, %v4950
        %v5087 = vpack.c.bf16 %v4953, %v4952
        %v5088 = vpack.c.bf16 %v4955, %v4954
        %v5089 = vpack.c.bf16 %v4957, %v4956
        %v5090 = vpack.c.bf16 %v4959, %v4958
        %v5091 = vpack.c.bf16 %v4961, %v4960
        %v5092 = vpack.c.bf16 %v4963, %v4962
        %v5093 = vpack.c.bf16 %v4965, %v4964
        %v5222 = vunpack.c.l.b16 %v4966
        %v5223 = vunpack.c.h.b16 %v4966
        %v5224 = vunpack.c.l.b16 %v4967
        %v5225 = vunpack.c.h.b16 %v4967
        %v5226 = vunpack.c.l.b16 %v4968
        %v5227 = vunpack.c.h.b16 %v4968
        %v5228 = vunpack.c.l.b16 %v4969
        %v5229 = vunpack.c.h.b16 %v4969
        %v5230 = vunpack.c.l.b16 %v4970
        %v5231 = vunpack.c.h.b16 %v4970
        %v5232 = vunpack.c.l.b16 %v4971
        %v5233 = vunpack.c.h.b16 %v4971
        %v5234 = vunpack.c.l.b16 %v4972
        %v5235 = vunpack.c.h.b16 %v4972
        %v5236 = vunpack.c.l.b16 %v4973
        %v5237 = vunpack.c.h.b16 %v4973
        %v5238 = vunpack.c.l.b16 %v4974
        %v5239 = vunpack.c.h.b16 %v4974
        %v5240 = vunpack.c.l.b16 %v4975
        %v5241 = vunpack.c.h.b16 %v4975
        %v5242 = vunpack.c.l.b16 %v4976
        %v5243 = vunpack.c.h.b16 %v4976
        %v5244 = vunpack.c.l.b16 %v4977
        %v5245 = vunpack.c.h.b16 %v4977
        %v5246 = vunpack.c.l.b16 %v4978
        %v5247 = vunpack.c.h.b16 %v4978
        %v5248 = vunpack.c.l.b16 %v4979
        %v5249 = vunpack.c.h.b16 %v4979
        %v5250 = vunpack.c.l.b16 %v4980
        %v5251 = vunpack.c.h.b16 %v4980
        %v5252 = vunpack.c.l.b16 %v4981
        %v5253 = vunpack.c.h.b16 %v4981
        %v5254 = vunpack.c.l.b16 %v4982
        %v5255 = vunpack.c.h.b16 %v4982
        %v5256 = vunpack.c.l.b16 %v4983
        %v5257 = vunpack.c.h.b16 %v4983
        %v5258 = vunpack.c.l.b16 %v4984
        %v5259 = vunpack.c.h.b16 %v4984
        %v5260 = vunpack.c.l.b16 %v4985
        %v5261 = vunpack.c.h.b16 %v4985
        %v5262 = vunpack.c.l.b16 %v4986
        %v5263 = vunpack.c.h.b16 %v4986
        %v5264 = vunpack.c.l.b16 %v4987
        %v5265 = vunpack.c.h.b16 %v4987
        %v5266 = vunpack.c.l.b16 %v4988
        %v5267 = vunpack.c.h.b16 %v4988
        %v5268 = vunpack.c.l.b16 %v4989
        %v5269 = vunpack.c.h.b16 %v4989
        %v5270 = vunpack.c.l.b16 %v4990
        %v5271 = vunpack.c.h.b16 %v4990
        %v5272 = vunpack.c.l.b16 %v4991
        %v5273 = vunpack.c.h.b16 %v4991
        %v5274 = vunpack.c.l.b16 %v4992
        %v5275 = vunpack.c.h.b16 %v4992
        %v5276 = vunpack.c.l.b16 %v4993
        %v5277 = vunpack.c.h.b16 %v4993
        %v5278 = vunpack.c.l.b16 %v4994
        %v5279 = vunpack.c.h.b16 %v4994
        %v5280 = vunpack.c.l.b16 %v4995
        %v5281 = vunpack.c.h.b16 %v4995
        %v5282 = vunpack.c.l.b16 %v4996
        %v5283 = vunpack.c.h.b16 %v4996
        %v5284 = vunpack.c.l.b16 %v4997
        %v5285 = vunpack.c.h.b16 %v4997
        %v5286 = vunpack.c.l.b16 %v4998
        %v5287 = vunpack.c.h.b16 %v4998
        %v5288 = vunpack.c.l.b16 %v4999
        %v5289 = vunpack.c.h.b16 %v4999
        %v5290 = vunpack.c.l.b16 %v5000
        %v5291 = vunpack.c.h.b16 %v5000
        %v5292 = vunpack.c.l.b16 %v5001
        %v5293 = vunpack.c.h.b16 %v5001
        %v5294 = vunpack.c.l.b16 %v5002
        %v5295 = vunpack.c.h.b16 %v5002
        %v5296 = vunpack.c.l.b16 %v5003
        %v5297 = vunpack.c.h.b16 %v5003
        %v5298 = vunpack.c.l.b16 %v5004
        %v5299 = vunpack.c.h.b16 %v5004
        %v5300 = vunpack.c.l.b16 %v5005
        %v5301 = vunpack.c.h.b16 %v5005
        %v5302 = vunpack.c.l.b16 %v5006
        %v5303 = vunpack.c.h.b16 %v5006
        %v5304 = vunpack.c.l.b16 %v5007
        %v5305 = vunpack.c.h.b16 %v5007
        %v5306 = vunpack.c.l.b16 %v5008
        %v5307 = vunpack.c.h.b16 %v5008
        %v5308 = vunpack.c.l.b16 %v5009
        %v5309 = vunpack.c.h.b16 %v5009
        %v5310 = vunpack.c.l.b16 %v5010
        %v5311 = vunpack.c.h.b16 %v5010
        %v5312 = vunpack.c.l.b16 %v5011
        %v5313 = vunpack.c.h.b16 %v5011
        %v5314 = vunpack.c.l.b16 %v5012
        %v5315 = vunpack.c.h.b16 %v5012
        %v5316 = vunpack.c.l.b16 %v5013
        %v5317 = vunpack.c.h.b16 %v5013
        %v5318 = vunpack.c.l.b16 %v5014
        %v5319 = vunpack.c.h.b16 %v5014
        %v5320 = vunpack.c.l.b16 %v5015
        %v5321 = vunpack.c.h.b16 %v5015
        %v5322 = vunpack.c.l.b16 %v5016
        %v5323 = vunpack.c.h.b16 %v5016
        %v5324 = vunpack.c.l.b16 %v5017
        %v5325 = vunpack.c.h.b16 %v5017
        %v5326 = vunpack.c.l.b16 %v5018
        %v5327 = vunpack.c.h.b16 %v5018
        %v5328 = vunpack.c.l.b16 %v5019
        %v5329 = vunpack.c.h.b16 %v5019
        %v5330 = vunpack.c.l.b16 %v5020
        %v5331 = vunpack.c.h.b16 %v5020
        %v5332 = vunpack.c.l.b16 %v5021
        %v5333 = vunpack.c.h.b16 %v5021
        %v5334 = vunpack.c.l.b16 %v5022
        %v5335 = vunpack.c.h.b16 %v5022
        %v5336 = vunpack.c.l.b16 %v5023
        %v5337 = vunpack.c.h.b16 %v5023
        %v5338 = vunpack.c.l.b16 %v5024
        %v5339 = vunpack.c.h.b16 %v5024
        %v5340 = vunpack.c.l.b16 %v5025
        %v5341 = vunpack.c.h.b16 %v5025
        %v5342 = vunpack.c.l.b16 %v5026
        %v5343 = vunpack.c.h.b16 %v5026
        %v5344 = vunpack.c.l.b16 %v5027
        %v5345 = vunpack.c.h.b16 %v5027
        %v5346 = vunpack.c.l.b16 %v5028
        %v5347 = vunpack.c.h.b16 %v5028
        %v5348 = vunpack.c.l.b16 %v5029
        %v5349 = vunpack.c.h.b16 %v5029
        %v5350 = vunpack.c.l.b16 %v5030
        %v5351 = vunpack.c.h.b16 %v5030
        %v5352 = vunpack.c.l.b16 %v5031
        %v5353 = vunpack.c.h.b16 %v5031
        %v5354 = vunpack.c.l.b16 %v5032
        %v5355 = vunpack.c.h.b16 %v5032
        %v5356 = vunpack.c.l.b16 %v5033
        %v5357 = vunpack.c.h.b16 %v5033
        %v5358 = vunpack.c.l.b16 %v5034
        %v5359 = vunpack.c.h.b16 %v5034
        %v5360 = vunpack.c.l.b16 %v5035
        %v5361 = vunpack.c.h.b16 %v5035
        %v5362 = vunpack.c.l.b16 %v5036
        %v5363 = vunpack.c.h.b16 %v5036
        %v5364 = vunpack.c.l.b16 %v5037
        %v5365 = vunpack.c.h.b16 %v5037
        %v5366 = vunpack.c.l.b16 %v5038
        %v5367 = vunpack.c.h.b16 %v5038
        %v5368 = vunpack.c.l.b16 %v5039
        %v5369 = vunpack.c.h.b16 %v5039
        %v5370 = vunpack.c.l.b16 %v5040
        %v5371 = vunpack.c.h.b16 %v5040
        %v5372 = vunpack.c.l.b16 %v5041
        %v5373 = vunpack.c.h.b16 %v5041
        %v5374 = vunpack.c.l.b16 %v5042
        %v5375 = vunpack.c.h.b16 %v5042
        %v5376 = vunpack.c.l.b16 %v5043
        %v5377 = vunpack.c.h.b16 %v5043
        %v5378 = vunpack.c.l.b16 %v5044
        %v5379 = vunpack.c.h.b16 %v5044
        %v5380 = vunpack.c.l.b16 %v5045
        %v5381 = vunpack.c.h.b16 %v5045
        %v5382 = vunpack.c.l.b16 %v5046
        %v5383 = vunpack.c.h.b16 %v5046
        %v5384 = vunpack.c.l.b16 %v5047
        %v5385 = vunpack.c.h.b16 %v5047
        %v5386 = vunpack.c.l.b16 %v5048
        %v5387 = vunpack.c.h.b16 %v5048
        %v5388 = vunpack.c.l.b16 %v5049
        %v5389 = vunpack.c.h.b16 %v5049
        %v5390 = vunpack.c.l.b16 %v5050
        %v5391 = vunpack.c.h.b16 %v5050
        %v5392 = vunpack.c.l.b16 %v5051
        %v5393 = vunpack.c.h.b16 %v5051
        %v5394 = vunpack.c.l.b16 %v5052
        %v5395 = vunpack.c.h.b16 %v5052
        %v5396 = vunpack.c.l.b16 %v5053
        %v5397 = vunpack.c.h.b16 %v5053
        %v5398 = vunpack.c.l.b16 %v5054
        %v5399 = vunpack.c.h.b16 %v5054
        %v5400 = vunpack.c.l.b16 %v5055
        %v5401 = vunpack.c.h.b16 %v5055
        %v5402 = vunpack.c.l.b16 %v5056
        %v5403 = vunpack.c.h.b16 %v5056
        %v5404 = vunpack.c.l.b16 %v5057
        %v5405 = vunpack.c.h.b16 %v5057
        %v5406 = vunpack.c.l.b16 %v5058
        %v5407 = vunpack.c.h.b16 %v5058
        %v5408 = vunpack.c.l.b16 %v5059
        %v5409 = vunpack.c.h.b16 %v5059
        %v5410 = vunpack.c.l.b16 %v5060
        %v5411 = vunpack.c.h.b16 %v5060
        %v5412 = vunpack.c.l.b16 %v5061
        %v5413 = vunpack.c.h.b16 %v5061
        %v5414 = vunpack.c.l.b16 %v5062
        %v5415 = vunpack.c.h.b16 %v5062
        %v5416 = vunpack.c.l.b16 %v5063
        %v5417 = vunpack.c.h.b16 %v5063
        %v5418 = vunpack.c.l.b16 %v5064
        %v5419 = vunpack.c.h.b16 %v5064
        %v5420 = vunpack.c.l.b16 %v5065
        %v5421 = vunpack.c.h.b16 %v5065
        %v5422 = vunpack.c.l.b16 %v5066
        %v5423 = vunpack.c.h.b16 %v5066
        %v5424 = vunpack.c.l.b16 %v5067
        %v5425 = vunpack.c.h.b16 %v5067
        %v5426 = vunpack.c.l.b16 %v5068
        %v5427 = vunpack.c.h.b16 %v5068
        %v5428 = vunpack.c.l.b16 %v5069
        %v5429 = vunpack.c.h.b16 %v5069
        %v5430 = vunpack.c.l.b16 %v5070
        %v5431 = vunpack.c.h.b16 %v5070
        %v5432 = vunpack.c.l.b16 %v5071
        %v5433 = vunpack.c.h.b16 %v5071
        %v5434 = vunpack.c.l.b16 %v5072
        %v5435 = vunpack.c.h.b16 %v5072
        %v5436 = vunpack.c.l.b16 %v5073
        %v5437 = vunpack.c.h.b16 %v5073
        %v5438 = vunpack.c.l.b16 %v5074
        %v5439 = vunpack.c.h.b16 %v5074
        %v5440 = vunpack.c.l.b16 %v5075
        %v5441 = vunpack.c.h.b16 %v5075
        %v5442 = vunpack.c.l.b16 %v5076
        %v5443 = vunpack.c.h.b16 %v5076
        %v5444 = vunpack.c.l.b16 %v5077
        %v5445 = vunpack.c.h.b16 %v5077
        %v5446 = vunpack.c.l.b16 %v5078
        %v5447 = vunpack.c.h.b16 %v5078
        %v5448 = vunpack.c.l.b16 %v5079
        %v5449 = vunpack.c.h.b16 %v5079
        %v5450 = vunpack.c.l.b16 %v5080
        %v5451 = vunpack.c.h.b16 %v5080
        %v5452 = vunpack.c.l.b16 %v5081
        %v5453 = vunpack.c.h.b16 %v5081
        %v5454 = vunpack.c.l.b16 %v5082
        %v5455 = vunpack.c.h.b16 %v5082
        %v5456 = vunpack.c.l.b16 %v5083
        %v5457 = vunpack.c.h.b16 %v5083
        %v5458 = vunpack.c.l.b16 %v5084
        %v5459 = vunpack.c.h.b16 %v5084
        %v5460 = vunpack.c.l.b16 %v5085
        %v5461 = vunpack.c.h.b16 %v5085
        %v5462 = vunpack.c.l.b16 %v5086
        %v5463 = vunpack.c.h.b16 %v5086
        %v5464 = vunpack.c.l.b16 %v5087
        %v5465 = vunpack.c.h.b16 %v5087
        %v5466 = vunpack.c.l.b16 %v5088
        %v5467 = vunpack.c.h.b16 %v5088
        %v5468 = vunpack.c.l.b16 %v5089
        %v5469 = vunpack.c.h.b16 %v5089
        %v5470 = vunpack.c.l.b16 %v5090
        %v5471 = vunpack.c.h.b16 %v5090
        %v5472 = vunpack.c.l.b16 %v5091
        %v5473 = vunpack.c.h.b16 %v5091
        %v5474 = vunpack.c.l.b16 %v5092
        %v5475 = vunpack.c.h.b16 %v5092
        %v5476 = vunpack.c.l.b16 %v5093
        %v5477 = vunpack.c.h.b16 %v5093
        %v5478 = vpack.c.b16 %v5222, %v5222
        %v5479 = vpack.c.b16 %v5223, %v5223
        %v5480 = vpack.c.b16 %v5224, %v5224
        %v5481 = vpack.c.b16 %v5225, %v5225
        %v5482 = vpack.c.b16 %v5226, %v5226
        %v5483 = vpack.c.b16 %v5227, %v5227
        %v5484 = vpack.c.b16 %v5228, %v5228
        %v5485 = vpack.c.b16 %v5229, %v5229
        %v5486 = vpack.c.b16 %v5230, %v5230
        %v5487 = vpack.c.b16 %v5231, %v5231
        %v5488 = vpack.c.b16 %v5232, %v5232
        %v5489 = vpack.c.b16 %v5233, %v5233
        %v5490 = vpack.c.b16 %v5234, %v5234
        %v5491 = vpack.c.b16 %v5235, %v5235
        %v5492 = vpack.c.b16 %v5236, %v5236
        %v5493 = vpack.c.b16 %v5237, %v5237
        %v5494 = vpack.c.b16 %v5238, %v5238
        %v5495 = vpack.c.b16 %v5239, %v5239
        %v5496 = vpack.c.b16 %v5240, %v5240
        %v5497 = vpack.c.b16 %v5241, %v5241
        %v5498 = vpack.c.b16 %v5242, %v5242
        %v5499 = vpack.c.b16 %v5243, %v5243
        %v5500 = vpack.c.b16 %v5244, %v5244
        %v5501 = vpack.c.b16 %v5245, %v5245
        %v5502 = vpack.c.b16 %v5246, %v5246
        %v5503 = vpack.c.b16 %v5247, %v5247
        %v5504 = vpack.c.b16 %v5248, %v5248
        %v5505 = vpack.c.b16 %v5249, %v5249
        %v5506 = vpack.c.b16 %v5250, %v5250
        %v5507 = vpack.c.b16 %v5251, %v5251
        %v5508 = vpack.c.b16 %v5252, %v5252
        %v5509 = vpack.c.b16 %v5253, %v5253
        %v5510 = vpack.c.b16 %v5254, %v5254
        %v5511 = vpack.c.b16 %v5255, %v5255
        %v5512 = vpack.c.b16 %v5256, %v5256
        %v5513 = vpack.c.b16 %v5257, %v5257
        %v5514 = vpack.c.b16 %v5258, %v5258
        %v5515 = vpack.c.b16 %v5259, %v5259
        %v5516 = vpack.c.b16 %v5260, %v5260
        %v5517 = vpack.c.b16 %v5261, %v5261
        %v5518 = vpack.c.b16 %v5262, %v5262
        %v5519 = vpack.c.b16 %v5263, %v5263
        %v5520 = vpack.c.b16 %v5264, %v5264
        %v5521 = vpack.c.b16 %v5265, %v5265
        %v5522 = vpack.c.b16 %v5266, %v5266
        %v5523 = vpack.c.b16 %v5267, %v5267
        %v5524 = vpack.c.b16 %v5268, %v5268
        %v5525 = vpack.c.b16 %v5269, %v5269
        %v5526 = vpack.c.b16 %v5270, %v5270
        %v5527 = vpack.c.b16 %v5271, %v5271
        %v5528 = vpack.c.b16 %v5272, %v5272
        %v5529 = vpack.c.b16 %v5273, %v5273
        %v5530 = vpack.c.b16 %v5274, %v5274
        %v5531 = vpack.c.b16 %v5275, %v5275
        %v5532 = vpack.c.b16 %v5276, %v5276
        %v5533 = vpack.c.b16 %v5277, %v5277
        %v5534 = vpack.c.b16 %v5278, %v5278
        %v5535 = vpack.c.b16 %v5279, %v5279
        %v5536 = vpack.c.b16 %v5280, %v5280
        %v5537 = vpack.c.b16 %v5281, %v5281
        %v5538 = vpack.c.b16 %v5282, %v5282
        %v5539 = vpack.c.b16 %v5283, %v5283
        %v5540 = vpack.c.b16 %v5284, %v5284
        %v5541 = vpack.c.b16 %v5285, %v5285
        %v5542 = vpack.c.b16 %v5286, %v5286
        %v5543 = vpack.c.b16 %v5287, %v5287
        %v5544 = vpack.c.b16 %v5288, %v5288
        %v5545 = vpack.c.b16 %v5289, %v5289
        %v5546 = vpack.c.b16 %v5290, %v5290
        %v5547 = vpack.c.b16 %v5291, %v5291
        %v5548 = vpack.c.b16 %v5292, %v5292
        %v5549 = vpack.c.b16 %v5293, %v5293
        %v5550 = vpack.c.b16 %v5294, %v5294
        %v5551 = vpack.c.b16 %v5295, %v5295
        %v5552 = vpack.c.b16 %v5296, %v5296
        %v5553 = vpack.c.b16 %v5297, %v5297
        %v5554 = vpack.c.b16 %v5298, %v5298
        %v5555 = vpack.c.b16 %v5299, %v5299
        %v5556 = vpack.c.b16 %v5300, %v5300
        %v5557 = vpack.c.b16 %v5301, %v5301
        %v5558 = vpack.c.b16 %v5302, %v5302
        %v5559 = vpack.c.b16 %v5303, %v5303
        %v5560 = vpack.c.b16 %v5304, %v5304
        %v5561 = vpack.c.b16 %v5305, %v5305
        %v5562 = vpack.c.b16 %v5306, %v5306
        %v5563 = vpack.c.b16 %v5307, %v5307
        %v5564 = vpack.c.b16 %v5308, %v5308
        %v5565 = vpack.c.b16 %v5309, %v5309
        %v5566 = vpack.c.b16 %v5310, %v5310
        %v5567 = vpack.c.b16 %v5311, %v5311
        %v5568 = vpack.c.b16 %v5312, %v5312
        %v5569 = vpack.c.b16 %v5313, %v5313
        %v5570 = vpack.c.b16 %v5314, %v5314
        %v5571 = vpack.c.b16 %v5315, %v5315
        %v5572 = vpack.c.b16 %v5316, %v5316
        %v5573 = vpack.c.b16 %v5317, %v5317
        %v5574 = vpack.c.b16 %v5318, %v5318
        %v5575 = vpack.c.b16 %v5319, %v5319
        %v5576 = vpack.c.b16 %v5320, %v5320
        %v5577 = vpack.c.b16 %v5321, %v5321
        %v5578 = vpack.c.b16 %v5322, %v5322
        %v5579 = vpack.c.b16 %v5323, %v5323
        %v5580 = vpack.c.b16 %v5324, %v5324
        %v5581 = vpack.c.b16 %v5325, %v5325
        %v5582 = vpack.c.b16 %v5326, %v5326
        %v5583 = vpack.c.b16 %v5327, %v5327
        %v5584 = vpack.c.b16 %v5328, %v5328
        %v5585 = vpack.c.b16 %v5329, %v5329
        %v5586 = vpack.c.b16 %v5330, %v5330
        %v5587 = vpack.c.b16 %v5331, %v5331
        %v5588 = vpack.c.b16 %v5332, %v5332
        %v5589 = vpack.c.b16 %v5333, %v5333
        %v5590 = vpack.c.b16 %v5334, %v5334
        %v5591 = vpack.c.b16 %v5335, %v5335
        %v5592 = vpack.c.b16 %v5336, %v5336
        %v5593 = vpack.c.b16 %v5337, %v5337
        %v5594 = vpack.c.b16 %v5338, %v5338
        %v5595 = vpack.c.b16 %v5339, %v5339
        %v5596 = vpack.c.b16 %v5340, %v5340
        %v5597 = vpack.c.b16 %v5341, %v5341
        %v5598 = vpack.c.b16 %v5342, %v5342
        %v5599 = vpack.c.b16 %v5343, %v5343
        %v5600 = vpack.c.b16 %v5344, %v5344
        %v5601 = vpack.c.b16 %v5345, %v5345
        %v5602 = vpack.c.b16 %v5346, %v5346
        %v5603 = vpack.c.b16 %v5347, %v5347
        %v5604 = vpack.c.b16 %v5348, %v5348
        %v5605 = vpack.c.b16 %v5349, %v5349
        %v5606 = vpack.c.b16 %v5350, %v5350
        %v5607 = vpack.c.b16 %v5351, %v5351
        %v5608 = vpack.c.b16 %v5352, %v5352
        %v5609 = vpack.c.b16 %v5353, %v5353
        %v5610 = vpack.c.b16 %v5354, %v5354
        %v5611 = vpack.c.b16 %v5355, %v5355
        %v5612 = vpack.c.b16 %v5356, %v5356
        %v5613 = vpack.c.b16 %v5357, %v5357
        %v5614 = vpack.c.b16 %v5358, %v5358
        %v5615 = vpack.c.b16 %v5359, %v5359
        %v5616 = vpack.c.b16 %v5360, %v5360
        %v5617 = vpack.c.b16 %v5361, %v5361
        %v5618 = vpack.c.b16 %v5362, %v5362
        %v5619 = vpack.c.b16 %v5363, %v5363
        %v5620 = vpack.c.b16 %v5364, %v5364
        %v5621 = vpack.c.b16 %v5365, %v5365
        %v5622 = vpack.c.b16 %v5366, %v5366
        %v5623 = vpack.c.b16 %v5367, %v5367
        %v5624 = vpack.c.b16 %v5368, %v5368
        %v5625 = vpack.c.b16 %v5369, %v5369
        %v5626 = vpack.c.b16 %v5370, %v5370
        %v5627 = vpack.c.b16 %v5371, %v5371
        %v5628 = vpack.c.b16 %v5372, %v5372
        %v5629 = vpack.c.b16 %v5373, %v5373
        %v5630 = vpack.c.b16 %v5374, %v5374
        %v5631 = vpack.c.b16 %v5375, %v5375
        %v5632 = vpack.c.b16 %v5376, %v5376
        %v5633 = vpack.c.b16 %v5377, %v5377
        %v5634 = vpack.c.b16 %v5378, %v5378
        %v5635 = vpack.c.b16 %v5379, %v5379
        %v5636 = vpack.c.b16 %v5380, %v5380
        %v5637 = vpack.c.b16 %v5381, %v5381
        %v5638 = vpack.c.b16 %v5382, %v5382
        %v5639 = vpack.c.b16 %v5383, %v5383
        %v5640 = vpack.c.b16 %v5384, %v5384
        %v5641 = vpack.c.b16 %v5385, %v5385
        %v5642 = vpack.c.b16 %v5386, %v5386
        %v5643 = vpack.c.b16 %v5387, %v5387
        %v5644 = vpack.c.b16 %v5388, %v5388
        %v5645 = vpack.c.b16 %v5389, %v5389
        %v5646 = vpack.c.b16 %v5390, %v5390
        %v5647 = vpack.c.b16 %v5391, %v5391
        %v5648 = vpack.c.b16 %v5392, %v5392
        %v5649 = vpack.c.b16 %v5393, %v5393
        %v5650 = vpack.c.b16 %v5394, %v5394
        %v5651 = vpack.c.b16 %v5395, %v5395
        %v5652 = vpack.c.b16 %v5396, %v5396
        %v5653 = vpack.c.b16 %v5397, %v5397
        %v5654 = vpack.c.b16 %v5398, %v5398
        %v5655 = vpack.c.b16 %v5399, %v5399
        %v5656 = vpack.c.b16 %v5400, %v5400
        %v5657 = vpack.c.b16 %v5401, %v5401
        %v5658 = vpack.c.b16 %v5402, %v5402
        %v5659 = vpack.c.b16 %v5403, %v5403
        %v5660 = vpack.c.b16 %v5404, %v5404
        %v5661 = vpack.c.b16 %v5405, %v5405
        %v5662 = vpack.c.b16 %v5406, %v5406
        %v5663 = vpack.c.b16 %v5407, %v5407
        %v5664 = vpack.c.b16 %v5408, %v5408
        %v5665 = vpack.c.b16 %v5409, %v5409
        %v5666 = vpack.c.b16 %v5410, %v5410
        %v5667 = vpack.c.b16 %v5411, %v5411
        %v5668 = vpack.c.b16 %v5412, %v5412
        %v5669 = vpack.c.b16 %v5413, %v5413
        %v5670 = vpack.c.b16 %v5414, %v5414
        %v5671 = vpack.c.b16 %v5415, %v5415
        %v5672 = vpack.c.b16 %v5416, %v5416
        %v5673 = vpack.c.b16 %v5417, %v5417
        %v5674 = vpack.c.b16 %v5418, %v5418
        %v5675 = vpack.c.b16 %v5419, %v5419
        %v5676 = vpack.c.b16 %v5420, %v5420
        %v5677 = vpack.c.b16 %v5421, %v5421
        %v5678 = vpack.c.b16 %v5422, %v5422
        %v5679 = vpack.c.b16 %v5423, %v5423
        %v5680 = vpack.c.b16 %v5424, %v5424
        %v5681 = vpack.c.b16 %v5425, %v5425
        %v5682 = vpack.c.b16 %v5426, %v5426
        %v5683 = vpack.c.b16 %v5427, %v5427
        %v5684 = vpack.c.b16 %v5428, %v5428
        %v5685 = vpack.c.b16 %v5429, %v5429
        %v5686 = vpack.c.b16 %v5430, %v5430
        %v5687 = vpack.c.b16 %v5431, %v5431
        %v5688 = vpack.c.b16 %v5432, %v5432
        %v5689 = vpack.c.b16 %v5433, %v5433
        %v5690 = vpack.c.b16 %v5434, %v5434
        %v5691 = vpack.c.b16 %v5435, %v5435
        %v5692 = vpack.c.b16 %v5436, %v5436
        %v5693 = vpack.c.b16 %v5437, %v5437
        %v5694 = vpack.c.b16 %v5438, %v5438
        %v5695 = vpack.c.b16 %v5439, %v5439
        %v5696 = vpack.c.b16 %v5440, %v5440
        %v5697 = vpack.c.b16 %v5441, %v5441
        %v5698 = vpack.c.b16 %v5442, %v5442
        %v5699 = vpack.c.b16 %v5443, %v5443
        %v5700 = vpack.c.b16 %v5444, %v5444
        %v5701 = vpack.c.b16 %v5445, %v5445
        %v5702 = vpack.c.b16 %v5446, %v5446
        %v5703 = vpack.c.b16 %v5447, %v5447
        %v5704 = vpack.c.b16 %v5448, %v5448
        %v5705 = vpack.c.b16 %v5449, %v5449
        %v5706 = vpack.c.b16 %v5450, %v5450
        %v5707 = vpack.c.b16 %v5451, %v5451
        %v5708 = vpack.c.b16 %v5452, %v5452
        %v5709 = vpack.c.b16 %v5453, %v5453
        %v5710 = vpack.c.b16 %v5454, %v5454
        %v5711 = vpack.c.b16 %v5455, %v5455
        %v5712 = vpack.c.b16 %v5456, %v5456
        %v5713 = vpack.c.b16 %v5457, %v5457
        %v5714 = vpack.c.b16 %v5458, %v5458
        %v5715 = vpack.c.b16 %v5459, %v5459
        %v5716 = vpack.c.b16 %v5460, %v5460
        %v5717 = vpack.c.b16 %v5461, %v5461
        %v5718 = vpack.c.b16 %v5462, %v5462
        %v5719 = vpack.c.b16 %v5463, %v5463
        %v5720 = vpack.c.b16 %v5464, %v5464
        %v5721 = vpack.c.b16 %v5465, %v5465
        %v5722 = vpack.c.b16 %v5466, %v5466
        %v5723 = vpack.c.b16 %v5467, %v5467
        %v5724 = vpack.c.b16 %v5468, %v5468
        %v5725 = vpack.c.b16 %v5469, %v5469
        %v5726 = vpack.c.b16 %v5470, %v5470
        %v5727 = vpack.c.b16 %v5471, %v5471
        %v5728 = vpack.c.b16 %v5472, %v5472
        %v5729 = vpack.c.b16 %v5473, %v5473
        %v5730 = vpack.c.b16 %v5474, %v5474
        %v5731 = vpack.c.b16 %v5475, %v5475
        %v5732 = vpack.c.b16 %v5476, %v5476
        %v5733 = vpack.c.b16 %v5477, %v5477
        %5990 = vst [vmem:[%s242] sm:$0xf] %v5478
        %5991 = vst [vmem:[%s242 + $0x4] sm:$0xf] %v5479
        %5992 = vst [vmem:[%s242 + $0x8] sm:$0xf] %v5480
        %5993 = vst [vmem:[%s242 + $0xc] sm:$0xf] %v5481
        %5994 = vst [vmem:[%s242 + $0x10] sm:$0xf] %v5482
        %5995 = vst [vmem:[%s242 + $0x14] sm:$0xf] %v5483
        %5996 = vst [vmem:[%s242 + $0x18] sm:$0xf] %v5484
        %5997 = vst [vmem:[%s242 + $0x1c] sm:$0xf] %v5485
        %5998 = vst [vmem:[%s242 + $0x20] sm:$0xf] %v5486
        %5999 = vst [vmem:[%s242 + $0x24] sm:$0xf] %v5487
        %6000 = vst [vmem:[%s242 + $0x28] sm:$0xf] %v5488
        %6001 = vst [vmem:[%s242 + $0x2c] sm:$0xf] %v5489
        %6002 = vst [vmem:[%s242 + $0x30] sm:$0xf] %v5490
        %6003 = vst [vmem:[%s242 + $0x34] sm:$0xf] %v5491
        %6004 = vst [vmem:[%s242 + $0x38] sm:$0xf] %v5492
        %6005 = vst [vmem:[%s242 + $0x3c] sm:$0xf] %v5493
        %6006 = vst [vmem:[%s242 + $0x40] sm:$0xf] %v5494
        %6007 = vst [vmem:[%s242 + $0x44] sm:$0xf] %v5495
        %6008 = vst [vmem:[%s242 + $0x48] sm:$0xf] %v5496
        %6009 = vst [vmem:[%s242 + $0x4c] sm:$0xf] %v5497
        %6010 = vst [vmem:[%s242 + $0x50] sm:$0xf] %v5498
        %6011 = vst [vmem:[%s242 + $0x54] sm:$0xf] %v5499
        %6012 = vst [vmem:[%s242 + $0x58] sm:$0xf] %v5500
        %6013 = vst [vmem:[%s242 + $0x5c] sm:$0xf] %v5501
        %6014 = vst [vmem:[%s242 + $0x60] sm:$0xf] %v5502
        %6015 = vst [vmem:[%s242 + $0x64] sm:$0xf] %v5503
        %6016 = vst [vmem:[%s242 + $0x68] sm:$0xf] %v5504
        %6017 = vst [vmem:[%s242 + $0x6c] sm:$0xf] %v5505
        %6018 = vst [vmem:[%s242 + $0x70] sm:$0xf] %v5506
        %6019 = vst [vmem:[%s242 + $0x74] sm:$0xf] %v5507
        %6020 = vst [vmem:[%s242 + $0x78] sm:$0xf] %v5508
        %6021 = vst [vmem:[%s242 + $0x7c] sm:$0xf] %v5509
        %6022 = vst [vmem:[%s242 + $0x80] sm:$0xf] %v5510
        %6023 = vst [vmem:[%s242 + $0x84] sm:$0xf] %v5511
        %6024 = vst [vmem:[%s242 + $0x88] sm:$0xf] %v5512
        %6025 = vst [vmem:[%s242 + $0x8c] sm:$0xf] %v5513
        %6026 = vst [vmem:[%s242 + $0x90] sm:$0xf] %v5514
        %6027 = vst [vmem:[%s242 + $0x94] sm:$0xf] %v5515
        %6028 = vst [vmem:[%s242 + $0x98] sm:$0xf] %v5516
        %6029 = vst [vmem:[%s242 + $0x9c] sm:$0xf] %v5517
        %6030 = vst [vmem:[%s242 + $0xa0] sm:$0xf] %v5518
        %6031 = vst [vmem:[%s242 + $0xa4] sm:$0xf] %v5519
        %6032 = vst [vmem:[%s242 + $0xa8] sm:$0xf] %v5520
        %6033 = vst [vmem:[%s242 + $0xac] sm:$0xf] %v5521
        %6034 = vst [vmem:[%s242 + $0xb0] sm:$0xf] %v5522
        %6035 = vst [vmem:[%s242 + $0xb4] sm:$0xf] %v5523
        %6036 = vst [vmem:[%s242 + $0xb8] sm:$0xf] %v5524
        %6037 = vst [vmem:[%s242 + $0xbc] sm:$0xf] %v5525
        %6038 = vst [vmem:[%s242 + $0xc0] sm:$0xf] %v5526
        %6039 = vst [vmem:[%s242 + $0xc4] sm:$0xf] %v5527
        %6040 = vst [vmem:[%s242 + $0xc8] sm:$0xf] %v5528
        %6041 = vst [vmem:[%s242 + $0xcc] sm:$0xf] %v5529
        %6042 = vst [vmem:[%s242 + $0xd0] sm:$0xf] %v5530
        %6043 = vst [vmem:[%s242 + $0xd4] sm:$0xf] %v5531
        %6044 = vst [vmem:[%s242 + $0xd8] sm:$0xf] %v5532
        %6045 = vst [vmem:[%s242 + $0xdc] sm:$0xf] %v5533
        %6046 = vst [vmem:[%s242 + $0xe0] sm:$0xf] %v5534
        %6047 = vst [vmem:[%s242 + $0xe4] sm:$0xf] %v5535
        %6048 = vst [vmem:[%s242 + $0xe8] sm:$0xf] %v5536
        %6049 = vst [vmem:[%s242 + $0xec] sm:$0xf] %v5537
        %6050 = vst [vmem:[%s242 + $0xf0] sm:$0xf] %v5538
        %6051 = vst [vmem:[%s242 + $0xf4] sm:$0xf] %v5539
        %6052 = vst [vmem:[%s242 + $0xf8] sm:$0xf] %v5540
        %6053 = vst [vmem:[%s242 + $0xfc] sm:$0xf] %v5541
        %6054 = vst [vmem:[%s242 + $0x100] sm:$0xf] %v5542
        %6055 = vst [vmem:[%s242 + $0x104] sm:$0xf] %v5543
        %6056 = vst [vmem:[%s242 + $0x108] sm:$0xf] %v5544
        %6057 = vst [vmem:[%s242 + $0x10c] sm:$0xf] %v5545
        %6058 = vst [vmem:[%s242 + $0x110] sm:$0xf] %v5546
        %6059 = vst [vmem:[%s242 + $0x114] sm:$0xf] %v5547
        %6060 = vst [vmem:[%s242 + $0x118] sm:$0xf] %v5548
        %6061 = vst [vmem:[%s242 + $0x11c] sm:$0xf] %v5549
        %6062 = vst [vmem:[%s242 + $0x120] sm:$0xf] %v5550
        %6063 = vst [vmem:[%s242 + $0x124] sm:$0xf] %v5551
        %6064 = vst [vmem:[%s242 + $0x128] sm:$0xf] %v5552
        %6065 = vst [vmem:[%s242 + $0x12c] sm:$0xf] %v5553
        %6066 = vst [vmem:[%s242 + $0x130] sm:$0xf] %v5554
        %6067 = vst [vmem:[%s242 + $0x134] sm:$0xf] %v5555
        %6068 = vst [vmem:[%s242 + $0x138] sm:$0xf] %v5556
        %6069 = vst [vmem:[%s242 + $0x13c] sm:$0xf] %v5557
        %6070 = vst [vmem:[%s242 + $0x140] sm:$0xf] %v5558
        %6071 = vst [vmem:[%s242 + $0x144] sm:$0xf] %v5559
        %6072 = vst [vmem:[%s242 + $0x148] sm:$0xf] %v5560
        %6073 = vst [vmem:[%s242 + $0x14c] sm:$0xf] %v5561
        %6074 = vst [vmem:[%s242 + $0x150] sm:$0xf] %v5562
        %6075 = vst [vmem:[%s242 + $0x154] sm:$0xf] %v5563
        %6076 = vst [vmem:[%s242 + $0x158] sm:$0xf] %v5564
        %6077 = vst [vmem:[%s242 + $0x15c] sm:$0xf] %v5565
        %6078 = vst [vmem:[%s242 + $0x160] sm:$0xf] %v5566
        %6079 = vst [vmem:[%s242 + $0x164] sm:$0xf] %v5567
        %6080 = vst [vmem:[%s242 + $0x168] sm:$0xf] %v5568
        %6081 = vst [vmem:[%s242 + $0x16c] sm:$0xf] %v5569
        %6082 = vst [vmem:[%s242 + $0x170] sm:$0xf] %v5570
        %6083 = vst [vmem:[%s242 + $0x174] sm:$0xf] %v5571
        %6084 = vst [vmem:[%s242 + $0x178] sm:$0xf] %v5572
        %6085 = vst [vmem:[%s242 + $0x17c] sm:$0xf] %v5573
        %6086 = vst [vmem:[%s242 + $0x180] sm:$0xf] %v5574
        %6087 = vst [vmem:[%s242 + $0x184] sm:$0xf] %v5575
        %6088 = vst [vmem:[%s242 + $0x188] sm:$0xf] %v5576
        %6089 = vst [vmem:[%s242 + $0x18c] sm:$0xf] %v5577
        %6090 = vst [vmem:[%s242 + $0x190] sm:$0xf] %v5578
        %6091 = vst [vmem:[%s242 + $0x194] sm:$0xf] %v5579
        %6092 = vst [vmem:[%s242 + $0x198] sm:$0xf] %v5580
        %6093 = vst [vmem:[%s242 + $0x19c] sm:$0xf] %v5581
        %6094 = vst [vmem:[%s242 + $0x1a0] sm:$0xf] %v5582
        %6095 = vst [vmem:[%s242 + $0x1a4] sm:$0xf] %v5583
        %6096 = vst [vmem:[%s242 + $0x1a8] sm:$0xf] %v5584
        %6097 = vst [vmem:[%s242 + $0x1ac] sm:$0xf] %v5585
        %6098 = vst [vmem:[%s242 + $0x1b0] sm:$0xf] %v5586
        %6099 = vst [vmem:[%s242 + $0x1b4] sm:$0xf] %v5587
        %6100 = vst [vmem:[%s242 + $0x1b8] sm:$0xf] %v5588
        %6101 = vst [vmem:[%s242 + $0x1bc] sm:$0xf] %v5589
        %6102 = vst [vmem:[%s242 + $0x1c0] sm:$0xf] %v5590
        %6103 = vst [vmem:[%s242 + $0x1c4] sm:$0xf] %v5591
        %6104 = vst [vmem:[%s242 + $0x1c8] sm:$0xf] %v5592
        %6105 = vst [vmem:[%s242 + $0x1cc] sm:$0xf] %v5593
        %6106 = vst [vmem:[%s242 + $0x1d0] sm:$0xf] %v5594
        %6107 = vst [vmem:[%s242 + $0x1d4] sm:$0xf] %v5595
        %6108 = vst [vmem:[%s242 + $0x1d8] sm:$0xf] %v5596
        %6109 = vst [vmem:[%s242 + $0x1dc] sm:$0xf] %v5597
        %6110 = vst [vmem:[%s242 + $0x1e0] sm:$0xf] %v5598
        %6111 = vst [vmem:[%s242 + $0x1e4] sm:$0xf] %v5599
        %6112 = vst [vmem:[%s242 + $0x1e8] sm:$0xf] %v5600
        %6113 = vst [vmem:[%s242 + $0x1ec] sm:$0xf] %v5601
        %6114 = vst [vmem:[%s242 + $0x1f0] sm:$0xf] %v5602
        %6115 = vst [vmem:[%s242 + $0x1f4] sm:$0xf] %v5603
        %6116 = vst [vmem:[%s242 + $0x1f8] sm:$0xf] %v5604
        %6117 = vst [vmem:[%s242 + $0x1fc] sm:$0xf] %v5605
        %6118 = vst [vmem:[%s242 + $0x200] sm:$0xf] %v5606
        %6119 = vst [vmem:[%s242 + $0x204] sm:$0xf] %v5607
        %6120 = vst [vmem:[%s242 + $0x208] sm:$0xf] %v5608
        %6121 = vst [vmem:[%s242 + $0x20c] sm:$0xf] %v5609
        %6122 = vst [vmem:[%s242 + $0x210] sm:$0xf] %v5610
        %6123 = vst [vmem:[%s242 + $0x214] sm:$0xf] %v5611
        %6124 = vst [vmem:[%s242 + $0x218] sm:$0xf] %v5612
        %6125 = vst [vmem:[%s242 + $0x21c] sm:$0xf] %v5613
        %6126 = vst [vmem:[%s242 + $0x220] sm:$0xf] %v5614
        %6127 = vst [vmem:[%s242 + $0x224] sm:$0xf] %v5615
        %6128 = vst [vmem:[%s242 + $0x228] sm:$0xf] %v5616
        %6129 = vst [vmem:[%s242 + $0x22c] sm:$0xf] %v5617
        %6130 = vst [vmem:[%s242 + $0x230] sm:$0xf] %v5618
        %6131 = vst [vmem:[%s242 + $0x234] sm:$0xf] %v5619
        %6132 = vst [vmem:[%s242 + $0x238] sm:$0xf] %v5620
        %6133 = vst [vmem:[%s242 + $0x23c] sm:$0xf] %v5621
        %6134 = vst [vmem:[%s242 + $0x240] sm:$0xf] %v5622
        %6135 = vst [vmem:[%s242 + $0x244] sm:$0xf] %v5623
        %6136 = vst [vmem:[%s242 + $0x248] sm:$0xf] %v5624
        %6137 = vst [vmem:[%s242 + $0x24c] sm:$0xf] %v5625
        %6138 = vst [vmem:[%s242 + $0x250] sm:$0xf] %v5626
        %6139 = vst [vmem:[%s242 + $0x254] sm:$0xf] %v5627
        %6140 = vst [vmem:[%s242 + $0x258] sm:$0xf] %v5628
        %6141 = vst [vmem:[%s242 + $0x25c] sm:$0xf] %v5629
        %6142 = vst [vmem:[%s242 + $0x260] sm:$0xf] %v5630
        %6143 = vst [vmem:[%s242 + $0x264] sm:$0xf] %v5631
        %6144 = vst [vmem:[%s242 + $0x268] sm:$0xf] %v5632
        %6145 = vst [vmem:[%s242 + $0x26c] sm:$0xf] %v5633
        %6146 = vst [vmem:[%s242 + $0x270] sm:$0xf] %v5634
        %6147 = vst [vmem:[%s242 + $0x274] sm:$0xf] %v5635
        %6148 = vst [vmem:[%s242 + $0x278] sm:$0xf] %v5636
        %6149 = vst [vmem:[%s242 + $0x27c] sm:$0xf] %v5637
        %6150 = vst [vmem:[%s242 + $0x280] sm:$0xf] %v5638
        %6151 = vst [vmem:[%s242 + $0x284] sm:$0xf] %v5639
        %6152 = vst [vmem:[%s242 + $0x288] sm:$0xf] %v5640
        %6153 = vst [vmem:[%s242 + $0x28c] sm:$0xf] %v5641
        %6154 = vst [vmem:[%s242 + $0x290] sm:$0xf] %v5642
        %6155 = vst [vmem:[%s242 + $0x294] sm:$0xf] %v5643
        %6156 = vst [vmem:[%s242 + $0x298] sm:$0xf] %v5644
        %6157 = vst [vmem:[%s242 + $0x29c] sm:$0xf] %v5645
        %6158 = vst [vmem:[%s242 + $0x2a0] sm:$0xf] %v5646
        %6159 = vst [vmem:[%s242 + $0x2a4] sm:$0xf] %v5647
        %6160 = vst [vmem:[%s242 + $0x2a8] sm:$0xf] %v5648
        %6161 = vst [vmem:[%s242 + $0x2ac] sm:$0xf] %v5649
        %6162 = vst [vmem:[%s242 + $0x2b0] sm:$0xf] %v5650
        %6163 = vst [vmem:[%s242 + $0x2b4] sm:$0xf] %v5651
        %6164 = vst [vmem:[%s242 + $0x2b8] sm:$0xf] %v5652
        %6165 = vst [vmem:[%s242 + $0x2bc] sm:$0xf] %v5653
        %6166 = vst [vmem:[%s242 + $0x2c0] sm:$0xf] %v5654
        %6167 = vst [vmem:[%s242 + $0x2c4] sm:$0xf] %v5655
        %6168 = vst [vmem:[%s242 + $0x2c8] sm:$0xf] %v5656
        %6169 = vst [vmem:[%s242 + $0x2cc] sm:$0xf] %v5657
        %6170 = vst [vmem:[%s242 + $0x2d0] sm:$0xf] %v5658
        %6171 = vst [vmem:[%s242 + $0x2d4] sm:$0xf] %v5659
        %6172 = vst [vmem:[%s242 + $0x2d8] sm:$0xf] %v5660
        %6173 = vst [vmem:[%s242 + $0x2dc] sm:$0xf] %v5661
        %6174 = vst [vmem:[%s242 + $0x2e0] sm:$0xf] %v5662
        %6175 = vst [vmem:[%s242 + $0x2e4] sm:$0xf] %v5663
        %6176 = vst [vmem:[%s242 + $0x2e8] sm:$0xf] %v5664
        %6177 = vst [vmem:[%s242 + $0x2ec] sm:$0xf] %v5665
        %6178 = vst [vmem:[%s242 + $0x2f0] sm:$0xf] %v5666
        %6179 = vst [vmem:[%s242 + $0x2f4] sm:$0xf] %v5667
        %6180 = vst [vmem:[%s242 + $0x2f8] sm:$0xf] %v5668
        %6181 = vst [vmem:[%s242 + $0x2fc] sm:$0xf] %v5669
        %6182 = vst [vmem:[%s242 + $0x300] sm:$0xf] %v5670
        %6183 = vst [vmem:[%s242 + $0x304] sm:$0xf] %v5671
        %6184 = vst [vmem:[%s242 + $0x308] sm:$0xf] %v5672
        %6185 = vst [vmem:[%s242 + $0x30c] sm:$0xf] %v5673
        %6186 = vst [vmem:[%s242 + $0x310] sm:$0xf] %v5674
        %6187 = vst [vmem:[%s242 + $0x314] sm:$0xf] %v5675
        %6188 = vst [vmem:[%s242 + $0x318] sm:$0xf] %v5676
        %6189 = vst [vmem:[%s242 + $0x31c] sm:$0xf] %v5677
        %6190 = vst [vmem:[%s242 + $0x320] sm:$0xf] %v5678
        %6191 = vst [vmem:[%s242 + $0x324] sm:$0xf] %v5679
        %6192 = vst [vmem:[%s242 + $0x328] sm:$0xf] %v5680
        %6193 = vst [vmem:[%s242 + $0x32c] sm:$0xf] %v5681
        %6194 = vst [vmem:[%s242 + $0x330] sm:$0xf] %v5682
        %6195 = vst [vmem:[%s242 + $0x334] sm:$0xf] %v5683
        %6196 = vst [vmem:[%s242 + $0x338] sm:$0xf] %v5684
        %6197 = vst [vmem:[%s242 + $0x33c] sm:$0xf] %v5685
        %6198 = vst [vmem:[%s242 + $0x340] sm:$0xf] %v5686
        %6199 = vst [vmem:[%s242 + $0x344] sm:$0xf] %v5687
        %6200 = vst [vmem:[%s242 + $0x348] sm:$0xf] %v5688
        %6201 = vst [vmem:[%s242 + $0x34c] sm:$0xf] %v5689
        %6202 = vst [vmem:[%s242 + $0x350] sm:$0xf] %v5690
        %6203 = vst [vmem:[%s242 + $0x354] sm:$0xf] %v5691
        %6204 = vst [vmem:[%s242 + $0x358] sm:$0xf] %v5692
        %6205 = vst [vmem:[%s242 + $0x35c] sm:$0xf] %v5693
        %6206 = vst [vmem:[%s242 + $0x360] sm:$0xf] %v5694
        %6207 = vst [vmem:[%s242 + $0x364] sm:$0xf] %v5695
        %6208 = vst [vmem:[%s242 + $0x368] sm:$0xf] %v5696
        %6209 = vst [vmem:[%s242 + $0x36c] sm:$0xf] %v5697
        %6210 = vst [vmem:[%s242 + $0x370] sm:$0xf] %v5698
        %6211 = vst [vmem:[%s242 + $0x374] sm:$0xf] %v5699
        %6212 = vst [vmem:[%s242 + $0x378] sm:$0xf] %v5700
        %6213 = vst [vmem:[%s242 + $0x37c] sm:$0xf] %v5701
        %6214 = vst [vmem:[%s242 + $0x380] sm:$0xf] %v5702
        %6215 = vst [vmem:[%s242 + $0x384] sm:$0xf] %v5703
        %6216 = vst [vmem:[%s242 + $0x388] sm:$0xf] %v5704
        %6217 = vst [vmem:[%s242 + $0x38c] sm:$0xf] %v5705
        %6218 = vst [vmem:[%s242 + $0x390] sm:$0xf] %v5706
        %6219 = vst [vmem:[%s242 + $0x394] sm:$0xf] %v5707
        %6220 = vst [vmem:[%s242 + $0x398] sm:$0xf] %v5708
        %6221 = vst [vmem:[%s242 + $0x39c] sm:$0xf] %v5709
        %6222 = vst [vmem:[%s242 + $0x3a0] sm:$0xf] %v5710
        %6223 = vst [vmem:[%s242 + $0x3a4] sm:$0xf] %v5711
        %6224 = vst [vmem:[%s242 + $0x3a8] sm:$0xf] %v5712
        %6225 = vst [vmem:[%s242 + $0x3ac] sm:$0xf] %v5713
        %6226 = vst [vmem:[%s242 + $0x3b0] sm:$0xf] %v5714
        %6227 = vst [vmem:[%s242 + $0x3b4] sm:$0xf] %v5715
        %6228 = vst [vmem:[%s242 + $0x3b8] sm:$0xf] %v5716
        %6229 = vst [vmem:[%s242 + $0x3bc] sm:$0xf] %v5717
        %6230 = vst [vmem:[%s242 + $0x3c0] sm:$0xf] %v5718
        %6231 = vst [vmem:[%s242 + $0x3c4] sm:$0xf] %v5719
        %6232 = vst [vmem:[%s242 + $0x3c8] sm:$0xf] %v5720
        %6233 = vst [vmem:[%s242 + $0x3cc] sm:$0xf] %v5721
        %6234 = vst [vmem:[%s242 + $0x3d0] sm:$0xf] %v5722
        %6235 = vst [vmem:[%s242 + $0x3d4] sm:$0xf] %v5723
        %6236 = vst [vmem:[%s242 + $0x3d8] sm:$0xf] %v5724
        %6237 = vst [vmem:[%s242 + $0x3dc] sm:$0xf] %v5725
        %6238 = vst [vmem:[%s242 + $0x3e0] sm:$0xf] %v5726
        %6239 = vst [vmem:[%s242 + $0x3e4] sm:$0xf] %v5727
        %6240 = vst [vmem:[%s242 + $0x3e8] sm:$0xf] %v5728
        %6241 = vst [vmem:[%s242 + $0x3ec] sm:$0xf] %v5729
        %6242 = vst [vmem:[%s242 + $0x3f0] sm:$0xf] %v5730
        %6243 = vst [vmem:[%s242 + $0x3f4] sm:$0xf] %v5731
        %6244 = vst [vmem:[%s242 + $0x3f8] sm:$0xf] %v5732
        %6245 = vst [vmem:[%s242 + $0x3fc] sm:$0xf] %v5733
        %s6246 = sand.u32 %s140, 1
        %s6247 = scalar_lea.sflag [#allocation4], %s6246
        %s6248 = sand.u32 %s140, 1
        %s6249 = smul.addr %s6248, 1024
        %s6250 = scalar_lea.vmem [#allocation5], %s6249
        // Predicated region
        $region45: #{res_block_pallas.1} parent=39 // pred_check
          %p6251 = pneg %p150
        $region46: #{res_block_pallas.1} parent=39 // pred_check_branch
          %6253 = sbr.rel (%p6251) target = $region48
        $region47: #{res_block_pallas.1} parent=39 // pred_region
          %s6254 = smul.u32 256, %s22
          %s6256 = ssub.s32 16384, 16384
          %6257 = vsyncadd %s6247, %s6256
          %s6258 = smul.addr %s6254, 64
          %s6259 = scalar_lea.hbm %s5, %s6258
          %s6260 = sshll.u32 %s6250, 4
          %s6261 = int_to_ptr.vmem [resolvable:$true] %s6260
          %6266 = dma.vmem_to_hbm [thread:$0]  %s6261, 16384, %s6259, %s6247, 64, 64, 4
        $region48: #{res_block_pallas.1} parent=39 // pred_fallthru
          _
      $region40: #{res_block_pallas.1} parent=5 // pred_fallthru
        _
      %p6267 = scmp.le.s32.totalorder 2, %s17
      // Predicated region
      $region49: #{res_block_pallas.1} parent=5 // pred_check
        %p6268 = pneg %p6267
      $region50: #{res_block_pallas.1} parent=5 // pred_check_branch
        %6270 = sbr.rel (%p6268) target = $region52
      $region51: #{res_block_pallas.1} parent=5 // pred_region
        %s6271 = ssub.s32 %s17, 2
        // Predicated region
        $region53: #{res_block_pallas.1} parent=51 // pred_check
          %p6272 = pneg %p156
        $region54: #{res_block_pallas.1} parent=51 // pred_check_branch
          %6274 = sbr.rel (%p6272) target = $region56
        $region55: #{res_block_pallas.1} parent=51 // pred_region
          %s6275 = sand.u32 %s141, 1
          %s6276 = scalar_lea.sflag [#allocation4], %s6275
          %s6277 = sand.u32 %s141, 1
          %s6278 = smul.addr %s6277, 1024
          %s6279 = scalar_lea.vmem [#allocation5], %s6278
          %6280 = dma.done %s6276, 16384
        $region56: #{res_block_pallas.1} parent=51 // pred_fallthru
          _
      $region52: #{res_block_pallas.1} parent=5 // pred_fallthru
        _
    $region6: #{res_block_pallas.1} parent=1 // loop_footer
      %s21 = sadd.s32 1, %s17
    $region7: #{res_block_pallas.1} parent=1 // loop_footer_branch
      %16 = sbr.rel target = $region3
    $region8: #{res_block_pallas.1} parent=1 // loop_exit
      _
    %6281 = vsyncpa [#allocation3], 1
    %s6282 = scalar_lea.sflag [#allocation3], 1
    %6283 = vsyncpa %s6282, 1
    %6284 = vsyncpa [#allocation4], 1
    %s6285 = scalar_lea.sflag [#allocation4], 1
    %6286 = vsyncpa %s6285, 1

</llo_original>
